<compile_context>
chip_gen: v7x
topology: tpu7x:2x2x1
jax: 0.10.0
libtpu: 0.0.40
codegen_flags: <defaults>
</compile_context>

<pallas_src>
import functools

import jax
import jax.numpy as jnp
import numpy as np
from jax.experimental import pallas as pl
from jax.experimental.pallas import tpu as pltpu


def _round_up(x, m):
    return ((x + m - 1) // m) * m


def attention_kernel(
    bH_ref,        # (TB, T, D)            encoder hidden states (batch tile)
    emb_ref,       # (num_steps, TB, 4H)   W_ih_oh^T[text] + b_ih + b_hh (precomputed)
    w_i2h_ref,     # (D, H)                i2h weight, transposed
    b_h2h_ref,     # (1, H)                h2h bias
    w_score_ref,   # (1, H)                score weight (row vector, no bias)
    w_hfused_ref,  # (H, H + 4H)           concat(W_h2h^T, W_hh^T)
    w_ctx_ref,     # (D, 4H)               W_ih (context part), transposed
    w_gen_ref,     # (H, Cp)               generator weight, transposed, C padded to Cp
    b_gen_ref,     # (1, Cp)               generator bias, padded
    probs_ref,     # (num_steps, TB, Cp)   output (VMEM-resident, one writeback per tile)
    *,
    mm_dtype,
    unroll,
):
    TB, T, D = bH_ref.shape
    H = w_i2h_ref.shape[1]
    Cp = w_gen_ref.shape[1]
    num_steps = probs_ref.shape[0]

    bH = bH_ref[...]

    # Step-invariant i2h projection: one MXU push per batch tile (off the serial path).
    bHp = (jnp.dot(bH.reshape(TB * T, D).astype(mm_dtype),
                   w_i2h_ref[...].astype(mm_dtype),
                   preferred_element_type=jnp.float32)
           + b_h2h_ref[...]).reshape(TB, T, H)

    # MXU operands loaded / cast once, not per unrolled step.
    w_hfused = w_hfused_ref[...].astype(mm_dtype)
    w_ctx = w_ctx_ref[...].astype(mm_dtype)
    w_gen = w_gen_ref[...].astype(mm_dtype)

    # Step-invariant broadcasts hoisted out of the loop.
    w_score_b = jnp.broadcast_to(w_score_ref[...].reshape(1, 1, H), (TB, T, H))
    b_gen_b = jnp.broadcast_to(b_gen_ref[...], (TB, Cp))

    def step_body(step, carry):
        h, c = carry                                                   # (TB, H) each

        # One fused MXU push for both h-consuming projections -> (TB, 5H), no concat.
        hg = jnp.dot(h.astype(mm_dtype), w_hfused,
                     preferred_element_type=jnp.float32)
        hproj = hg[:, :H]              # h2h projection for attention
        h_gates = hg[:, H:]            # W_hh contribution to LSTM gates

        # --- attention over encoder steps ------------------------------------------
        t = jnp.tanh(bHp + hproj[:, None, :])                          # (TB, T, H)
        e = jnp.sum(t * w_score_b, axis=-1)                            # (TB, T)
        e_max = jnp.max(e, axis=1, keepdims=True)
        p = jnp.exp(e - e_max)
        alpha = p * pl.reciprocal(jnp.sum(p, axis=1, keepdims=True), approx=True)
        context = jnp.sum(alpha[:, :, None] * bH, axis=1)              # (TB, D)

        # --- LSTMCell on [context, onehot]; onehot matmul = precomputed embedding ---
        gates = (jnp.dot(context.astype(mm_dtype), w_ctx,
                         preferred_element_type=jnp.float32)
                 + h_gates + emb_ref[step])                            # (TB, 4H)
        i_g = jax.nn.sigmoid(gates[:, 0:H])
        f_g = jax.nn.sigmoid(gates[:, H:2 * H])
        g_g = jnp.tanh(gates[:, 2 * H:3 * H])
        o_g = jax.nn.sigmoid(gates[:, 3 * H:4 * H])
        c_new = f_g * c + i_g * g_g
        h_new = o_g * jnp.tanh(c_new)

        # --- generator: lane-dense (Cp % 128 == 0) VMEM store ------------------------
        probs_ref[step] = (jnp.dot(h_new.astype(mm_dtype), w_gen,
                                   preferred_element_type=jnp.float32)
                           + b_gen_b)
        return h_new, c_new

    h0 = jnp.zeros((TB, H), jnp.float32)
    c0 = jnp.zeros((TB, H), jnp.float32)
    jax.lax.fori_loop(0, num_steps, step_body, (h0, c0), unroll=unroll)


def attention_forward(batch_H, text, params, *, num_classes, batch_max_length,
                      batch_tile=8, matmul_dtype=jnp.float32, unroll=True):
    """Equivalent of Attention.forward(batch_H, text, is_train=True)."""
    # TODO(synk): is_train=False greedy-decode branch (argmax feedback) not implemented.
    B, T, D = batch_H.shape
    H = params["w_h2h_t"].shape[0]
    C = num_classes
    num_steps = batch_max_length + 1

    TB = max(8, _round_up(batch_tile, 8))          # batch tile (sublane multiple)
    Bp = _round_up(max(B, TB), TB)                 # padded batch
    Cp = _round_up(C, 128)                         # lane-dense class dim
    n_tiles = Bp // TB

    # --- wrapper-side padding / folding (plain XLA) -----------------------------------
    bH_p = jnp.pad(batch_H, ((0, Bp - B), (0, 0), (0, 0)))
    text_p = jnp.pad(text, ((0, Bp - B), (0, 0)))
    w_gen_p = jnp.pad(params["w_gen_t"], ((0, 0), (0, Cp - C)))
    b_gen_p = jnp.pad(params["b_gen"], ((0, 0), (0, Cp - C)))

    # one-hot @ W_ih_oh^T == embedding gather; fold both LSTM biases in:
    emb = (jnp.take(params["w_ih_oh_t"], jnp.transpose(text_p), axis=0)
           + params["b_ih"] + params["b_hh"])                    # (num_steps, Bp, 4H)
    # fuse h's two projections into one (H, 5H) operand:
    w_hfused = jnp.concatenate([params["w_h2h_t"], params["w_hh_t"]], axis=1)

    # --- explicit VMEM budget sized to the per-tile footprint --------------------------
    f32 = 4
    tile_io = TB * T * D + num_steps * TB * 4 * H + num_steps * TB * Cp
    weight_elems = D * H + 2 * H + H * 5 * H + D * 4 * H + H * Cp + Cp
    live_elems = TB * T * H + 4 * TB * T * max(D, H) + 6 * TB * 4 * H + 2 * TB * Cp
    vmem_limit = int(1.5 * f32 * (2 * tile_io + weight_elems + live_elems))
    vmem_limit = min(max(vmem_limit, 8 << 20), 100 << 20)

    grid_spec = pltpu.PrefetchScalarGridSpec(
        num_scalar_prefetch=0,
        grid=(n_tiles,),
        in_specs=[
            pl.BlockSpec((TB, T, D), lambda b: (b, 0, 0)),               # batch_H tile
            pl.BlockSpec((num_steps, TB, 4 * H), lambda b: (0, b, 0)),   # emb tile
            pl.BlockSpec((D, H), lambda b: (0, 0)),                      # w_i2h_t
            pl.BlockSpec((1, H), lambda b: (0, 0)),                      # b_h2h
            pl.BlockSpec((1, H), lambda b: (0, 0)),                      # w_score
            pl.BlockSpec((H, 5 * H), lambda b: (0, 0)),                  # w_hfused
            pl.BlockSpec((D, 4 * H), lambda b: (0, 0)),                  # w_ih_ctx_t
            pl.BlockSpec((H, Cp), lambda b: (0, 0)),                     # w_gen (padded)
            pl.BlockSpec((1, Cp), lambda b: (0, 0)),                     # b_gen (padded)
        ],
        out_specs=pl.BlockSpec((num_steps, TB, Cp), lambda b: (0, b, 0)),
    )

    kernel = functools.partial(attention_kernel, mm_dtype=matmul_dtype, unroll=unroll)
    probs_sbc = pl.pallas_call(
        kernel,
        grid_spec=grid_spec,
        out_shape=jax.ShapeDtypeStruct((num_steps, Bp, Cp), jnp.float32),
        compiler_params=pltpu.CompilerParams(
            dimension_semantics=("parallel",),        # batch tiles are independent
            vmem_limit_bytes=vmem_limit),
    )(bH_p, emb, params["w_i2h_t"], params["b_h2h"], params["w_score"],
      w_hfused, params["w_ih_ctx_t"], w_gen_p, b_gen_p)

    # strip padding, go to (B, num_steps, C)
    return jnp.transpose(probs_sbc[:, :B, :C], (1, 0, 2))


def attention_reference(batch_H, text, params, *, num_classes, batch_max_length):
    """Pure-JAX reference mirroring the PyTorch forward (is_train=True)."""
    B, T, D = batch_H.shape
    H = params["w_h2h_t"].shape[0]
    C = num_classes
    num_steps = batch_max_length + 1
    onehots = jax.nn.one_hot(jnp.transpose(text), C, dtype=jnp.float32)

    h = jnp.zeros((B, H), jnp.float32)
    c = jnp.zeros((B, H), jnp.float32)
    bHp = batch_H @ params["w_i2h_t"]
    outs = []
    for i in range(num_steps):
        hp = h @ params["w_h2h_t"] + params["b_h2h"]
        e = jnp.sum(jnp.tanh(bHp + hp[:, None, :]) * params["w_score"], axis=-1)
        alpha = jax.nn.softmax(e, axis=1)
        ctx = jnp.einsum("bt,btd->bd", alpha, batch_H)
        gates = (ctx @ params["w_ih_ctx_t"] + onehots[i] @ params["w_ih_oh_t"]
                 + params["b_ih"] + h @ params["w_hh_t"] + params["b_hh"])
        i_g = jax.nn.sigmoid(gates[:, 0:H])
        f_g = jax.nn.sigmoid(gates[:, H:2 * H])
        g_g = jnp.tanh(gates[:, 2 * H:3 * H])
        o_g = jax.nn.sigmoid(gates[:, 3 * H:4 * H])
        c = f_g * c + i_g * g_g
        h = o_g * jnp.tanh(c)
        outs.append(h @ params["w_gen_t"] + params["b_gen"])
    return jnp.stack(outs, axis=1)                    # (B, num_steps, C)


def init_params(key, input_size, hidden_size, num_classes):
    D, H, C = input_size, hidden_size, num_classes
    ks = jax.random.split(key, 11)
    s = 0.1
    return {
        "w_i2h_t":    s * jax.random.normal(ks[0], (D, H), jnp.float32),
        "w_h2h_t":    s * jax.random.normal(ks[1], (H, H), jnp.float32),
        "b_h2h":      s * jax.random.normal(ks[2], (1, H), jnp.float32),
        "w_score":    s * jax.random.normal(ks[3], (1, H), jnp.float32),
        "w_ih_ctx_t": s * jax.random.normal(ks[4], (D, 4 * H), jnp.float32),
        "w_ih_oh_t":  s * jax.random.normal(ks[5], (C, 4 * H), jnp.float32),
        "b_ih":       s * jax.random.normal(ks[6], (1, 4 * H), jnp.float32),
        "w_hh_t":     s * jax.random.normal(ks[7], (H, 4 * H), jnp.float32),
        "b_hh":       s * jax.random.normal(ks[8], (1, 4 * H), jnp.float32),
        "w_gen_t":    s * jax.random.normal(ks[9], (H, C), jnp.float32),
        "b_gen":      s * jax.random.normal(ks[10], (1, C), jnp.float32),
    }


if __name__ == "__main__":
    B, T = 10, 8                # batch (exercises padding to 16 and two batch tiles), encoder steps
    D, H, C = 32, 32, 16        # input_size, hidden_size, num_classes
    batch_max_length = 5        # -> num_steps = 6
    num_steps = batch_max_length + 1

    key = jax.random.PRNGKey(0)
    k_h, k_t, k_p = jax.random.split(key, 3)
    batch_H = jax.random.normal(k_h, (B, T, D), jnp.float32)
    text = jax.random.randint(k_t, (B, num_steps), 0, C, jnp.int32)
    params = init_params(k_p, D, H, C)

    fwd = jax.jit(functools.partial(
        attention_forward, num_classes=C, batch_max_length=batch_max_length,
        batch_tile=8,
        # For production on v5e/v6e/v7x pass matmul_dtype=jnp.bfloat16 (MXU-only cast,
        # f32 accumulation).  Kept f32 here for exact parity with the reference.
        matmul_dtype=jnp.float32))
    probs = jax.block_until_ready(fwd(batch_H, text, params))
    assert probs.shape == (B, num_steps, C), probs.shape

    ref = attention_reference(batch_H, text, params,
                              num_classes=C, batch_max_length=batch_max_length)
    np.testing.assert_allclose(np.asarray(probs), np.asarray(ref),
                               rtol=3e-3, atol=3e-3)
    print("KERNEL_OK")
</pallas_src>

<mosaic_0001>
module attributes {stable_mosaic.version = 11 : i64} {
  func.func @attention_kernel(%arg0: i32, %arg1: memref<8x8x32xf32, #tpu.memory_space<vmem>>, %arg2: memref<6x8x128xf32, #tpu.memory_space<vmem>>, %arg3: memref<32x32xf32, #tpu.memory_space<vmem>>, %arg4: memref<1x32xf32, #tpu.memory_space<vmem>>, %arg5: memref<1x32xf32, #tpu.memory_space<vmem>>, %arg6: memref<32x160xf32, #tpu.memory_space<vmem>>, %arg7: memref<32x128xf32, #tpu.memory_space<vmem>>, %arg8: memref<32x128xf32, #tpu.memory_space<vmem>>, %arg9: memref<1x128xf32, #tpu.memory_space<vmem>>, %arg10: memref<6x8x128xf32, #tpu.memory_space<vmem>>) attributes {dimension_semantics = [#tpu.dimension_semantics<parallel>], iteration_bounds = array<i64: 2>, scalar_prefetch = 0 : i64, scratch_operands = 0 : i64, tpu.core_type = #tpu.core_type<tc>, window_params = [{transform_indices = @transform_0, window_bounds = array<i64: 8, 8, 32>}, {transform_indices = @transform_1, window_bounds = array<i64: 6, 8, 128>}, {pipeline_mode = #tpu.pipeline_mode<synchronous>, transform_indices = @transform_2, window_bounds = array<i64: 32, 32>}, {pipeline_mode = #tpu.pipeline_mode<synchronous>, transform_indices = @transform_3, window_bounds = array<i64: 1, 32>}, {pipeline_mode = #tpu.pipeline_mode<synchronous>, transform_indices = @transform_4, window_bounds = array<i64: 1, 32>}, {pipeline_mode = #tpu.pipeline_mode<synchronous>, transform_indices = @transform_5, window_bounds = array<i64: 32, 160>}, {pipeline_mode = #tpu.pipeline_mode<synchronous>, transform_indices = @transform_6, window_bounds = array<i64: 32, 128>}, {pipeline_mode = #tpu.pipeline_mode<synchronous>, transform_indices = @transform_7, window_bounds = array<i64: 32, 128>}, {pipeline_mode = #tpu.pipeline_mode<synchronous>, transform_indices = @transform_8, window_bounds = array<i64: 1, 128>}, {transform_indices = @transform_9, window_bounds = array<i64: 6, 8, 128>}]} {
    %c0 = arith.constant 0 : index
    %c0_0 = arith.constant 0 : index
    %c0_1 = arith.constant 0 : index
    %0 = vector.load %arg1[%c0, %c0_0, %c0_1] : memref<8x8x32xf32, #tpu.memory_space<vmem>>, vector<8x8x32xf32>
    %1 = vector.shape_cast %0 : vector<8x8x32xf32> to vector<64x32xf32>
    %c0_2 = arith.constant 0 : index
    %c0_3 = arith.constant 0 : index
    %2 = vector.load %arg3[%c0_2, %c0_3] : memref<32x32xf32, #tpu.memory_space<vmem>>, vector<32x32xf32>
    %cst = arith.constant dense<0.000000e+00> : vector<64x32xf32>
    %3 = tpu.matmul %1, %2, %cst {dimension_numbers = #tpu.dot_dimension_numbers<[1], [0], [0], [1], [0, 0, 1, 1], [], []>} : vector<64x32xf32>, vector<32x32xf32>, vector<64x32xf32> -> vector<64x32xf32>
    %c0_4 = arith.constant 0 : index
    %c0_5 = arith.constant 0 : index
    %4 = vector.load %arg4[%c0_4, %c0_5] : memref<1x32xf32, #tpu.memory_space<vmem>>, vector<1x32xf32>
    %5 = vector.broadcast %4 : vector<1x32xf32> to vector<64x32xf32>
    %6 = arith.addf %3, %5 : vector<64x32xf32>
    %7 = vector.shape_cast %6 : vector<64x32xf32> to vector<8x8x32xf32>
    %c0_6 = arith.constant 0 : index
    %c0_7 = arith.constant 0 : index
    %8 = vector.load %arg6[%c0_6, %c0_7] : memref<32x160xf32, #tpu.memory_space<vmem>>, vector<32x160xf32>
    %c0_8 = arith.constant 0 : index
    %c0_9 = arith.constant 0 : index
    %9 = vector.load %arg7[%c0_8, %c0_9] : memref<32x128xf32, #tpu.memory_space<vmem>>, vector<32x128xf32>
    %c0_10 = arith.constant 0 : index
    %c0_11 = arith.constant 0 : index
    %10 = vector.load %arg8[%c0_10, %c0_11] : memref<32x128xf32, #tpu.memory_space<vmem>>, vector<32x128xf32>
    %c0_12 = arith.constant 0 : index
    %c0_13 = arith.constant 0 : index
    %11 = vector.load %arg5[%c0_12, %c0_13] : memref<1x32xf32, #tpu.memory_space<vmem>>, vector<1x32xf32>
    %12 = vector.shape_cast %11 : vector<1x32xf32> to vector<1x1x32xf32>
    %13 = vector.shape_cast %12 : vector<1x1x32xf32> to vector<1x1x32xf32>
    %14 = vector.broadcast %13 : vector<1x1x32xf32> to vector<8x8x32xf32>
    %c0_14 = arith.constant 0 : index
    %c0_15 = arith.constant 0 : index
    %15 = vector.load %arg9[%c0_14, %c0_15] : memref<1x128xf32, #tpu.memory_space<vmem>>, vector<1x128xf32>
    %16 = vector.shape_cast %15 : vector<1x128xf32> to vector<1x128xf32>
    %17 = vector.broadcast %16 : vector<1x128xf32> to vector<8x128xf32>
    %cst_16 = arith.constant 0.000000e+00 : f32
    %18 = vector.broadcast %cst_16 : f32 to vector<8x32xf32>
    %cst_17 = arith.constant 0.000000e+00 : f32
    %19 = vector.broadcast %cst_17 : f32 to vector<8x32xf32>
    %c0_i32 = arith.constant 0 : i32
    %cst_18 = arith.constant dense<0.000000e+00> : vector<8x160xf32>
    %20 = tpu.matmul %18, %8, %cst_18 {dimension_numbers = #tpu.dot_dimension_numbers<[1], [0], [0], [1], [0, 0, 1, 1], [], []>} : vector<8x32xf32>, vector<32x160xf32>, vector<8x160xf32> -> vector<8x160xf32>
    %21 = vector.extract_strided_slice %20 {offsets = [0, 0], sizes = [8, 32], strides = [1, 1]} : vector<8x160xf32> to vector<8x32xf32>
    %22 = vector.extract_strided_slice %20 {offsets = [0, 32], sizes = [8, 128], strides = [1, 1]} : vector<8x160xf32> to vector<8x128xf32>
    %23 = vector.shape_cast %21 : vector<8x32xf32> to vector<8x1x32xf32>
    %24 = vector.broadcast %23 : vector<8x1x32xf32> to vector<8x8x32xf32>
    %25 = arith.addf %7, %24 : vector<8x8x32xf32>
    %26 = math.tanh %25 : vector<8x8x32xf32>
    %27 = arith.mulf %26, %14 : vector<8x8x32xf32>
    %cst_19 = arith.constant dense<0.000000e+00> : vector<8x8xf32>
    %28 = vector.multi_reduction <add>, %27, %cst_19 [2] : vector<8x8x32xf32> to vector<8x8xf32>
    %cst_20 = arith.constant dense<0xFF800000> : vector<8xf32>
    %29 = vector.multi_reduction <maximumf>, %28, %cst_20 [1] : vector<8x8xf32> to vector<8xf32>
    %30 = vector.shape_cast %29 : vector<8xf32> to vector<8x1xf32>
    %31 = vector.broadcast %30 : vector<8x1xf32> to vector<8x8xf32>
    %32 = arith.subf %28, %31 : vector<8x8xf32>
    %33 = math.exp %32 : vector<8x8xf32>
    %cst_21 = arith.constant dense<0.000000e+00> : vector<8xf32>
    %34 = vector.multi_reduction <add>, %33, %cst_21 [1] : vector<8x8xf32> to vector<8xf32>
    %35 = vector.shape_cast %34 : vector<8xf32> to vector<8x1xf32>
    %36 = tpu.reciprocal %35 {approx = true} : vector<8x1xf32> -> vector<8x1xf32>
    %37 = vector.broadcast %36 : vector<8x1xf32> to vector<8x8xf32>
    %38 = arith.mulf %33, %37 : vector<8x8xf32>
    %39 = vector.shape_cast %38 : vector<8x8xf32> to vector<8x8x1xf32>
    %40 = vector.broadcast %39 : vector<8x8x1xf32> to vector<8x8x32xf32>
    %41 = arith.mulf %40, %0 : vector<8x8x32xf32>
    %cst_22 = arith.constant dense<0.000000e+00> : vector<8x32xf32>
    %42 = vector.multi_reduction <add>, %41, %cst_22 [1] : vector<8x8x32xf32> to vector<8x32xf32>
    %cst_23 = arith.constant dense<0.000000e+00> : vector<8x128xf32>
    %43 = tpu.matmul %42, %9, %cst_23 {dimension_numbers = #tpu.dot_dimension_numbers<[1], [0], [0], [1], [0, 0, 1, 1], [], []>} : vector<8x32xf32>, vector<32x128xf32>, vector<8x128xf32> -> vector<8x128xf32>
    %44 = arith.addf %43, %22 : vector<8x128xf32>
    %45 = arith.index_cast %c0_i32 : i32 to index
    %c0_24 = arith.constant 0 : index
    %c0_25 = arith.constant 0 : index
    %46 = vector.load %arg2[%45, %c0_24, %c0_25] : memref<6x8x128xf32, #tpu.memory_space<vmem>>, vector<1x8x128xf32>
    %47 = vector.shape_cast %46 : vector<1x8x128xf32> to vector<8x128xf32>
    %48 = arith.addf %44, %47 : vector<8x128xf32>
    %49 = vector.extract_strided_slice %48 {offsets = [0, 0], sizes = [8, 32], strides = [1, 1]} : vector<8x128xf32> to vector<8x32xf32>
    %50 = arith.negf %49 : vector<8x32xf32>
    %51 = math.exp %50 : vector<8x32xf32>
    %cst_26 = arith.constant 1.000000e+00 : f32
    %52 = vector.broadcast %cst_26 : f32 to vector<8x32xf32>
    %53 = arith.addf %52, %51 : vector<8x32xf32>
    %54 = arith.divf %52, %53 : vector<8x32xf32>
    %55 = vector.extract_strided_slice %48 {offsets = [0, 32], sizes = [8, 32], strides = [1, 1]} : vector<8x128xf32> to vector<8x32xf32>
    %56 = arith.negf %55 : vector<8x32xf32>
    %57 = math.exp %56 : vector<8x32xf32>
    %cst_27 = arith.constant 1.000000e+00 : f32
    %58 = vector.broadcast %cst_27 : f32 to vector<8x32xf32>
    %59 = arith.addf %58, %57 : vector<8x32xf32>
    %60 = arith.divf %58, %59 : vector<8x32xf32>
    %61 = vector.extract_strided_slice %48 {offsets = [0, 64], sizes = [8, 32], strides = [1, 1]} : vector<8x128xf32> to vector<8x32xf32>
    %62 = math.tanh %61 : vector<8x32xf32>
    %63 = vector.extract_strided_slice %48 {offsets = [0, 96], sizes = [8, 32], strides = [1, 1]} : vector<8x128xf32> to vector<8x32xf32>
    %64 = arith.negf %63 : vector<8x32xf32>
    %65 = math.exp %64 : vector<8x32xf32>
    %cst_28 = arith.constant 1.000000e+00 : f32
    %66 = vector.broadcast %cst_28 : f32 to vector<8x32xf32>
    %67 = arith.addf %66, %65 : vector<8x32xf32>
    %68 = arith.divf %66, %67 : vector<8x32xf32>
    %69 = arith.mulf %60, %19 : vector<8x32xf32>
    %70 = arith.mulf %54, %62 : vector<8x32xf32>
    %71 = arith.addf %69, %70 : vector<8x32xf32>
    %72 = math.tanh %71 : vector<8x32xf32>
    %73 = arith.mulf %68, %72 : vector<8x32xf32>
    %cst_29 = arith.constant dense<0.000000e+00> : vector<8x128xf32>
    %74 = tpu.matmul %73, %10, %cst_29 {dimension_numbers = #tpu.dot_dimension_numbers<[1], [0], [0], [1], [0, 0, 1, 1], [], []>} : vector<8x32xf32>, vector<32x128xf32>, vector<8x128xf32> -> vector<8x128xf32>
    %75 = arith.addf %74, %17 : vector<8x128xf32>
    %76 = arith.index_cast %c0_i32 : i32 to index
    %c0_30 = arith.constant 0 : index
    %c0_31 = arith.constant 0 : index
    %77 = vector.load %arg10[%76, %c0_30, %c0_31] : memref<6x8x128xf32, #tpu.memory_space<vmem>>, vector<1x8x128xf32>
    %78 = vector.shape_cast %77 : vector<1x8x128xf32> to vector<8x128xf32>
    %79 = vector.shape_cast %75 : vector<8x128xf32> to vector<1x8x128xf32>
    tpu.vector_store %arg10[%76, %c0_30, %c0_31], %79 {strides = array<i32>} : memref<6x8x128xf32, #tpu.memory_space<vmem>>, vector<1x8x128xf32>,
    %c1_i32 = arith.constant 1 : i32
    %cst_32 = arith.constant dense<0.000000e+00> : vector<8x160xf32>
    %80 = tpu.matmul %73, %8, %cst_32 {dimension_numbers = #tpu.dot_dimension_numbers<[1], [0], [0], [1], [0, 0, 1, 1], [], []>} : vector<8x32xf32>, vector<32x160xf32>, vector<8x160xf32> -> vector<8x160xf32>
    %81 = vector.extract_strided_slice %80 {offsets = [0, 0], sizes = [8, 32], strides = [1, 1]} : vector<8x160xf32> to vector<8x32xf32>
    %82 = vector.extract_strided_slice %80 {offsets = [0, 32], sizes = [8, 128], strides = [1, 1]} : vector<8x160xf32> to vector<8x128xf32>
    %83 = vector.shape_cast %81 : vector<8x32xf32> to vector<8x1x32xf32>
    %84 = vector.broadcast %83 : vector<8x1x32xf32> to vector<8x8x32xf32>
    %85 = arith.addf %7, %84 : vector<8x8x32xf32>
    %86 = math.tanh %85 : vector<8x8x32xf32>
    %87 = arith.mulf %86, %14 : vector<8x8x32xf32>
    %cst_33 = arith.constant dense<0.000000e+00> : vector<8x8xf32>
    %88 = vector.multi_reduction <add>, %87, %cst_33 [2] : vector<8x8x32xf32> to vector<8x8xf32>
    %cst_34 = arith.constant dense<0xFF800000> : vector<8xf32>
    %89 = vector.multi_reduction <maximumf>, %88, %cst_34 [1] : vector<8x8xf32> to vector<8xf32>
    %90 = vector.shape_cast %89 : vector<8xf32> to vector<8x1xf32>
    %91 = vector.broadcast %90 : vector<8x1xf32> to vector<8x8xf32>
    %92 = arith.subf %88, %91 : vector<8x8xf32>
    %93 = math.exp %92 : vector<8x8xf32>
    %cst_35 = arith.constant dense<0.000000e+00> : vector<8xf32>
    %94 = vector.multi_reduction <add>, %93, %cst_35 [1] : vector<8x8xf32> to vector<8xf32>
    %95 = vector.shape_cast %94 : vector<8xf32> to vector<8x1xf32>
    %96 = tpu.reciprocal %95 {approx = true} : vector<8x1xf32> -> vector<8x1xf32>
    %97 = vector.broadcast %96 : vector<8x1xf32> to vector<8x8xf32>
    %98 = arith.mulf %93, %97 : vector<8x8xf32>
    %99 = vector.shape_cast %98 : vector<8x8xf32> to vector<8x8x1xf32>
    %100 = vector.broadcast %99 : vector<8x8x1xf32> to vector<8x8x32xf32>
    %101 = arith.mulf %100, %0 : vector<8x8x32xf32>
    %cst_36 = arith.constant dense<0.000000e+00> : vector<8x32xf32>
    %102 = vector.multi_reduction <add>, %101, %cst_36 [1] : vector<8x8x32xf32> to vector<8x32xf32>
    %cst_37 = arith.constant dense<0.000000e+00> : vector<8x128xf32>
    %103 = tpu.matmul %102, %9, %cst_37 {dimension_numbers = #tpu.dot_dimension_numbers<[1], [0], [0], [1], [0, 0, 1, 1], [], []>} : vector<8x32xf32>, vector<32x128xf32>, vector<8x128xf32> -> vector<8x128xf32>
    %104 = arith.addf %103, %82 : vector<8x128xf32>
    %105 = arith.index_cast %c1_i32 : i32 to index
    %c0_38 = arith.constant 0 : index
    %c0_39 = arith.constant 0 : index
    %106 = vector.load %arg2[%105, %c0_38, %c0_39] : memref<6x8x128xf32, #tpu.memory_space<vmem>>, vector<1x8x128xf32>
    %107 = vector.shape_cast %106 : vector<1x8x128xf32> to vector<8x128xf32>
    %108 = arith.addf %104, %107 : vector<8x128xf32>
    %109 = vector.extract_strided_slice %108 {offsets = [0, 0], sizes = [8, 32], strides = [1, 1]} : vector<8x128xf32> to vector<8x32xf32>
    %110 = arith.negf %109 : vector<8x32xf32>
    %111 = math.exp %110 : vector<8x32xf32>
    %cst_40 = arith.constant 1.000000e+00 : f32
    %112 = vector.broadcast %cst_40 : f32 to vector<8x32xf32>
    %113 = arith.addf %112, %111 : vector<8x32xf32>
    %114 = arith.divf %112, %113 : vector<8x32xf32>
    %115 = vector.extract_strided_slice %108 {offsets = [0, 32], sizes = [8, 32], strides = [1, 1]} : vector<8x128xf32> to vector<8x32xf32>
    %116 = arith.negf %115 : vector<8x32xf32>
    %117 = math.exp %116 : vector<8x32xf32>
    %cst_41 = arith.constant 1.000000e+00 : f32
    %118 = vector.broadcast %cst_41 : f32 to vector<8x32xf32>
    %119 = arith.addf %118, %117 : vector<8x32xf32>
    %120 = arith.divf %118, %119 : vector<8x32xf32>
    %121 = vector.extract_strided_slice %108 {offsets = [0, 64], sizes = [8, 32], strides = [1, 1]} : vector<8x128xf32> to vector<8x32xf32>
    %122 = math.tanh %121 : vector<8x32xf32>
    %123 = vector.extract_strided_slice %108 {offsets = [0, 96], sizes = [8, 32], strides = [1, 1]} : vector<8x128xf32> to vector<8x32xf32>
    %124 = arith.negf %123 : vector<8x32xf32>
    %125 = math.exp %124 : vector<8x32xf32>
    %cst_42 = arith.constant 1.000000e+00 : f32
    %126 = vector.broadcast %cst_42 : f32 to vector<8x32xf32>
    %127 = arith.addf %126, %125 : vector<8x32xf32>
    %128 = arith.divf %126, %127 : vector<8x32xf32>
    %129 = arith.mulf %120, %71 : vector<8x32xf32>
    %130 = arith.mulf %114, %122 : vector<8x32xf32>
    %131 = arith.addf %129, %130 : vector<8x32xf32>
    %132 = math.tanh %131 : vector<8x32xf32>
    %133 = arith.mulf %128, %132 : vector<8x32xf32>
    %cst_43 = arith.constant dense<0.000000e+00> : vector<8x128xf32>
    %134 = tpu.matmul %133, %10, %cst_43 {dimension_numbers = #tpu.dot_dimension_numbers<[1], [0], [0], [1], [0, 0, 1, 1], [], []>} : vector<8x32xf32>, vector<32x128xf32>, vector<8x128xf32> -> vector<8x128xf32>
    %135 = arith.addf %134, %17 : vector<8x128xf32>
    %136 = arith.index_cast %c1_i32 : i32 to index
    %c0_44 = arith.constant 0 : index
    %c0_45 = arith.constant 0 : index
    %137 = vector.load %arg10[%136, %c0_44, %c0_45] : memref<6x8x128xf32, #tpu.memory_space<vmem>>, vector<1x8x128xf32>
    %138 = vector.shape_cast %137 : vector<1x8x128xf32> to vector<8x128xf32>
    %139 = vector.shape_cast %135 : vector<8x128xf32> to vector<1x8x128xf32>
    tpu.vector_store %arg10[%136, %c0_44, %c0_45], %139 {strides = array<i32>} : memref<6x8x128xf32, #tpu.memory_space<vmem>>, vector<1x8x128xf32>,
    %c2_i32 = arith.constant 2 : i32
    %cst_46 = arith.constant dense<0.000000e+00> : vector<8x160xf32>
    %140 = tpu.matmul %133, %8, %cst_46 {dimension_numbers = #tpu.dot_dimension_numbers<[1], [0], [0], [1], [0, 0, 1, 1], [], []>} : vector<8x32xf32>, vector<32x160xf32>, vector<8x160xf32> -> vector<8x160xf32>
    %141 = vector.extract_strided_slice %140 {offsets = [0, 0], sizes = [8, 32], strides = [1, 1]} : vector<8x160xf32> to vector<8x32xf32>
    %142 = vector.extract_strided_slice %140 {offsets = [0, 32], sizes = [8, 128], strides = [1, 1]} : vector<8x160xf32> to vector<8x128xf32>
    %143 = vector.shape_cast %141 : vector<8x32xf32> to vector<8x1x32xf32>
    %144 = vector.broadcast %143 : vector<8x1x32xf32> to vector<8x8x32xf32>
    %145 = arith.addf %7, %144 : vector<8x8x32xf32>
    %146 = math.tanh %145 : vector<8x8x32xf32>
    %147 = arith.mulf %146, %14 : vector<8x8x32xf32>
    %cst_47 = arith.constant dense<0.000000e+00> : vector<8x8xf32>
    %148 = vector.multi_reduction <add>, %147, %cst_47 [2] : vector<8x8x32xf32> to vector<8x8xf32>
    %cst_48 = arith.constant dense<0xFF800000> : vector<8xf32>
    %149 = vector.multi_reduction <maximumf>, %148, %cst_48 [1] : vector<8x8xf32> to vector<8xf32>
    %150 = vector.shape_cast %149 : vector<8xf32> to vector<8x1xf32>
    %151 = vector.broadcast %150 : vector<8x1xf32> to vector<8x8xf32>
    %152 = arith.subf %148, %151 : vector<8x8xf32>
    %153 = math.exp %152 : vector<8x8xf32>
    %cst_49 = arith.constant dense<0.000000e+00> : vector<8xf32>
    %154 = vector.multi_reduction <add>, %153, %cst_49 [1] : vector<8x8xf32> to vector<8xf32>
    %155 = vector.shape_cast %154 : vector<8xf32> to vector<8x1xf32>
    %156 = tpu.reciprocal %155 {approx = true} : vector<8x1xf32> -> vector<8x1xf32>
    %157 = vector.broadcast %156 : vector<8x1xf32> to vector<8x8xf32>
    %158 = arith.mulf %153, %157 : vector<8x8xf32>
    %159 = vector.shape_cast %158 : vector<8x8xf32> to vector<8x8x1xf32>
    %160 = vector.broadcast %159 : vector<8x8x1xf32> to vector<8x8x32xf32>
    %161 = arith.mulf %160, %0 : vector<8x8x32xf32>
    %cst_50 = arith.constant dense<0.000000e+00> : vector<8x32xf32>
    %162 = vector.multi_reduction <add>, %161, %cst_50 [1] : vector<8x8x32xf32> to vector<8x32xf32>
    %cst_51 = arith.constant dense<0.000000e+00> : vector<8x128xf32>
    %163 = tpu.matmul %162, %9, %cst_51 {dimension_numbers = #tpu.dot_dimension_numbers<[1], [0], [0], [1], [0, 0, 1, 1], [], []>} : vector<8x32xf32>, vector<32x128xf32>, vector<8x128xf32> -> vector<8x128xf32>
    %164 = arith.addf %163, %142 : vector<8x128xf32>
    %165 = arith.index_cast %c2_i32 : i32 to index
    %c0_52 = arith.constant 0 : index
    %c0_53 = arith.constant 0 : index
    %166 = vector.load %arg2[%165, %c0_52, %c0_53] : memref<6x8x128xf32, #tpu.memory_space<vmem>>, vector<1x8x128xf32>
    %167 = vector.shape_cast %166 : vector<1x8x128xf32> to vector<8x128xf32>
    %168 = arith.addf %164, %167 : vector<8x128xf32>
    %169 = vector.extract_strided_slice %168 {offsets = [0, 0], sizes = [8, 32], strides = [1, 1]} : vector<8x128xf32> to vector<8x32xf32>
    %170 = arith.negf %169 : vector<8x32xf32>
    %171 = math.exp %170 : vector<8x32xf32>
    %cst_54 = arith.constant 1.000000e+00 : f32
    %172 = vector.broadcast %cst_54 : f32 to vector<8x32xf32>
    %173 = arith.addf %172, %171 : vector<8x32xf32>
    %174 = arith.divf %172, %173 : vector<8x32xf32>
    %175 = vector.extract_strided_slice %168 {offsets = [0, 32], sizes = [8, 32], strides = [1, 1]} : vector<8x128xf32> to vector<8x32xf32>
    %176 = arith.negf %175 : vector<8x32xf32>
    %177 = math.exp %176 : vector<8x32xf32>
    %cst_55 = arith.constant 1.000000e+00 : f32
    %178 = vector.broadcast %cst_55 : f32 to vector<8x32xf32>
    %179 = arith.addf %178, %177 : vector<8x32xf32>
    %180 = arith.divf %178, %179 : vector<8x32xf32>
    %181 = vector.extract_strided_slice %168 {offsets = [0, 64], sizes = [8, 32], strides = [1, 1]} : vector<8x128xf32> to vector<8x32xf32>
    %182 = math.tanh %181 : vector<8x32xf32>
    %183 = vector.extract_strided_slice %168 {offsets = [0, 96], sizes = [8, 32], strides = [1, 1]} : vector<8x128xf32> to vector<8x32xf32>
    %184 = arith.negf %183 : vector<8x32xf32>
    %185 = math.exp %184 : vector<8x32xf32>
    %cst_56 = arith.constant 1.000000e+00 : f32
    %186 = vector.broadcast %cst_56 : f32 to vector<8x32xf32>
    %187 = arith.addf %186, %185 : vector<8x32xf32>
    %188 = arith.divf %186, %187 : vector<8x32xf32>
    %189 = arith.mulf %180, %131 : vector<8x32xf32>
    %190 = arith.mulf %174, %182 : vector<8x32xf32>
    %191 = arith.addf %189, %190 : vector<8x32xf32>
    %192 = math.tanh %191 : vector<8x32xf32>
    %193 = arith.mulf %188, %192 : vector<8x32xf32>
    %cst_57 = arith.constant dense<0.000000e+00> : vector<8x128xf32>
    %194 = tpu.matmul %193, %10, %cst_57 {dimension_numbers = #tpu.dot_dimension_numbers<[1], [0], [0], [1], [0, 0, 1, 1], [], []>} : vector<8x32xf32>, vector<32x128xf32>, vector<8x128xf32> -> vector<8x128xf32>
    %195 = arith.addf %194, %17 : vector<8x128xf32>
    %196 = arith.index_cast %c2_i32 : i32 to index
    %c0_58 = arith.constant 0 : index
    %c0_59 = arith.constant 0 : index
    %197 = vector.load %arg10[%196, %c0_58, %c0_59] : memref<6x8x128xf32, #tpu.memory_space<vmem>>, vector<1x8x128xf32>
    %198 = vector.shape_cast %197 : vector<1x8x128xf32> to vector<8x128xf32>
    %199 = vector.shape_cast %195 : vector<8x128xf32> to vector<1x8x128xf32>
    tpu.vector_store %arg10[%196, %c0_58, %c0_59], %199 {strides = array<i32>} : memref<6x8x128xf32, #tpu.memory_space<vmem>>, vector<1x8x128xf32>,
    %c3_i32 = arith.constant 3 : i32
    %cst_60 = arith.constant dense<0.000000e+00> : vector<8x160xf32>
    %200 = tpu.matmul %193, %8, %cst_60 {dimension_numbers = #tpu.dot_dimension_numbers<[1], [0], [0], [1], [0, 0, 1, 1], [], []>} : vector<8x32xf32>, vector<32x160xf32>, vector<8x160xf32> -> vector<8x160xf32>
    %201 = vector.extract_strided_slice %200 {offsets = [0, 0], sizes = [8, 32], strides = [1, 1]} : vector<8x160xf32> to vector<8x32xf32>
    %202 = vector.extract_strided_slice %200 {offsets = [0, 32], sizes = [8, 128], strides = [1, 1]} : vector<8x160xf32> to vector<8x128xf32>
    %203 = vector.shape_cast %201 : vector<8x32xf32> to vector<8x1x32xf32>
    %204 = vector.broadcast %203 : vector<8x1x32xf32> to vector<8x8x32xf32>
    %205 = arith.addf %7, %204 : vector<8x8x32xf32>
    %206 = math.tanh %205 : vector<8x8x32xf32>
    %207 = arith.mulf %206, %14 : vector<8x8x32xf32>
    %cst_61 = arith.constant dense<0.000000e+00> : vector<8x8xf32>
    %208 = vector.multi_reduction <add>, %207, %cst_61 [2] : vector<8x8x32xf32> to vector<8x8xf32>
    %cst_62 = arith.constant dense<0xFF800000> : vector<8xf32>
    %209 = vector.multi_reduction <maximumf>, %208, %cst_62 [1] : vector<8x8xf32> to vector<8xf32>
    %210 = vector.shape_cast %209 : vector<8xf32> to vector<8x1xf32>
    %211 = vector.broadcast %210 : vector<8x1xf32> to vector<8x8xf32>
    %212 = arith.subf %208, %211 : vector<8x8xf32>
    %213 = math.exp %212 : vector<8x8xf32>
    %cst_63 = arith.constant dense<0.000000e+00> : vector<8xf32>
    %214 = vector.multi_reduction <add>, %213, %cst_63 [1] : vector<8x8xf32> to vector<8xf32>
    %215 = vector.shape_cast %214 : vector<8xf32> to vector<8x1xf32>
    %216 = tpu.reciprocal %215 {approx = true} : vector<8x1xf32> -> vector<8x1xf32>
    %217 = vector.broadcast %216 : vector<8x1xf32> to vector<8x8xf32>
    %218 = arith.mulf %213, %217 : vector<8x8xf32>
    %219 = vector.shape_cast %218 : vector<8x8xf32> to vector<8x8x1xf32>
    %220 = vector.broadcast %219 : vector<8x8x1xf32> to vector<8x8x32xf32>
    %221 = arith.mulf %220, %0 : vector<8x8x32xf32>
    %cst_64 = arith.constant dense<0.000000e+00> : vector<8x32xf32>
    %222 = vector.multi_reduction <add>, %221, %cst_64 [1] : vector<8x8x32xf32> to vector<8x32xf32>
    %cst_65 = arith.constant dense<0.000000e+00> : vector<8x128xf32>
    %223 = tpu.matmul %222, %9, %cst_65 {dimension_numbers = #tpu.dot_dimension_numbers<[1], [0], [0], [1], [0, 0, 1, 1], [], []>} : vector<8x32xf32>, vector<32x128xf32>, vector<8x128xf32> -> vector<8x128xf32>
    %224 = arith.addf %223, %202 : vector<8x128xf32>
    %225 = arith.index_cast %c3_i32 : i32 to index
    %c0_66 = arith.constant 0 : index
    %c0_67 = arith.constant 0 : index
    %226 = vector.load %arg2[%225, %c0_66, %c0_67] : memref<6x8x128xf32, #tpu.memory_space<vmem>>, vector<1x8x128xf32>
    %227 = vector.shape_cast %226 : vector<1x8x128xf32> to vector<8x128xf32>
    %228 = arith.addf %224, %227 : vector<8x128xf32>
    %229 = vector.extract_strided_slice %228 {offsets = [0, 0], sizes = [8, 32], strides = [1, 1]} : vector<8x128xf32> to vector<8x32xf32>
    %230 = arith.negf %229 : vector<8x32xf32>
    %231 = math.exp %230 : vector<8x32xf32>
    %cst_68 = arith.constant 1.000000e+00 : f32
    %232 = vector.broadcast %cst_68 : f32 to vector<8x32xf32>
    %233 = arith.addf %232, %231 : vector<8x32xf32>
    %234 = arith.divf %232, %233 : vector<8x32xf32>
    %235 = vector.extract_strided_slice %228 {offsets = [0, 32], sizes = [8, 32], strides = [1, 1]} : vector<8x128xf32> to vector<8x32xf32>
    %236 = arith.negf %235 : vector<8x32xf32>
    %237 = math.exp %236 : vector<8x32xf32>
    %cst_69 = arith.constant 1.000000e+00 : f32
    %238 = vector.broadcast %cst_69 : f32 to vector<8x32xf32>
    %239 = arith.addf %238, %237 : vector<8x32xf32>
    %240 = arith.divf %238, %239 : vector<8x32xf32>
    %241 = vector.extract_strided_slice %228 {offsets = [0, 64], sizes = [8, 32], strides = [1, 1]} : vector<8x128xf32> to vector<8x32xf32>
    %242 = math.tanh %241 : vector<8x32xf32>
    %243 = vector.extract_strided_slice %228 {offsets = [0, 96], sizes = [8, 32], strides = [1, 1]} : vector<8x128xf32> to vector<8x32xf32>
    %244 = arith.negf %243 : vector<8x32xf32>
    %245 = math.exp %244 : vector<8x32xf32>
    %cst_70 = arith.constant 1.000000e+00 : f32
    %246 = vector.broadcast %cst_70 : f32 to vector<8x32xf32>
    %247 = arith.addf %246, %245 : vector<8x32xf32>
    %248 = arith.divf %246, %247 : vector<8x32xf32>
    %249 = arith.mulf %240, %191 : vector<8x32xf32>
    %250 = arith.mulf %234, %242 : vector<8x32xf32>
    %251 = arith.addf %249, %250 : vector<8x32xf32>
    %252 = math.tanh %251 : vector<8x32xf32>
    %253 = arith.mulf %248, %252 : vector<8x32xf32>
    %cst_71 = arith.constant dense<0.000000e+00> : vector<8x128xf32>
    %254 = tpu.matmul %253, %10, %cst_71 {dimension_numbers = #tpu.dot_dimension_numbers<[1], [0], [0], [1], [0, 0, 1, 1], [], []>} : vector<8x32xf32>, vector<32x128xf32>, vector<8x128xf32> -> vector<8x128xf32>
    %255 = arith.addf %254, %17 : vector<8x128xf32>
    %256 = arith.index_cast %c3_i32 : i32 to index
    %c0_72 = arith.constant 0 : index
    %c0_73 = arith.constant 0 : index
    %257 = vector.load %arg10[%256, %c0_72, %c0_73] : memref<6x8x128xf32, #tpu.memory_space<vmem>>, vector<1x8x128xf32>
    %258 = vector.shape_cast %257 : vector<1x8x128xf32> to vector<8x128xf32>
    %259 = vector.shape_cast %255 : vector<8x128xf32> to vector<1x8x128xf32>
    tpu.vector_store %arg10[%256, %c0_72, %c0_73], %259 {strides = array<i32>} : memref<6x8x128xf32, #tpu.memory_space<vmem>>, vector<1x8x128xf32>,
    %c4_i32 = arith.constant 4 : i32
    %cst_74 = arith.constant dense<0.000000e+00> : vector<8x160xf32>
    %260 = tpu.matmul %253, %8, %cst_74 {dimension_numbers = #tpu.dot_dimension_numbers<[1], [0], [0], [1], [0, 0, 1, 1], [], []>} : vector<8x32xf32>, vector<32x160xf32>, vector<8x160xf32> -> vector<8x160xf32>
    %261 = vector.extract_strided_slice %260 {offsets = [0, 0], sizes = [8, 32], strides = [1, 1]} : vector<8x160xf32> to vector<8x32xf32>
    %262 = vector.extract_strided_slice %260 {offsets = [0, 32], sizes = [8, 128], strides = [1, 1]} : vector<8x160xf32> to vector<8x128xf32>
    %263 = vector.shape_cast %261 : vector<8x32xf32> to vector<8x1x32xf32>
    %264 = vector.broadcast %263 : vector<8x1x32xf32> to vector<8x8x32xf32>
    %265 = arith.addf %7, %264 : vector<8x8x32xf32>
    %266 = math.tanh %265 : vector<8x8x32xf32>
    %267 = arith.mulf %266, %14 : vector<8x8x32xf32>
    %cst_75 = arith.constant dense<0.000000e+00> : vector<8x8xf32>
    %268 = vector.multi_reduction <add>, %267, %cst_75 [2] : vector<8x8x32xf32> to vector<8x8xf32>
    %cst_76 = arith.constant dense<0xFF800000> : vector<8xf32>
    %269 = vector.multi_reduction <maximumf>, %268, %cst_76 [1] : vector<8x8xf32> to vector<8xf32>
    %270 = vector.shape_cast %269 : vector<8xf32> to vector<8x1xf32>
    %271 = vector.broadcast %270 : vector<8x1xf32> to vector<8x8xf32>
    %272 = arith.subf %268, %271 : vector<8x8xf32>
    %273 = math.exp %272 : vector<8x8xf32>
    %cst_77 = arith.constant dense<0.000000e+00> : vector<8xf32>
    %274 = vector.multi_reduction <add>, %273, %cst_77 [1] : vector<8x8xf32> to vector<8xf32>
    %275 = vector.shape_cast %274 : vector<8xf32> to vector<8x1xf32>
    %276 = tpu.reciprocal %275 {approx = true} : vector<8x1xf32> -> vector<8x1xf32>
    %277 = vector.broadcast %276 : vector<8x1xf32> to vector<8x8xf32>
    %278 = arith.mulf %273, %277 : vector<8x8xf32>
    %279 = vector.shape_cast %278 : vector<8x8xf32> to vector<8x8x1xf32>
    %280 = vector.broadcast %279 : vector<8x8x1xf32> to vector<8x8x32xf32>
    %281 = arith.mulf %280, %0 : vector<8x8x32xf32>
    %cst_78 = arith.constant dense<0.000000e+00> : vector<8x32xf32>
    %282 = vector.multi_reduction <add>, %281, %cst_78 [1] : vector<8x8x32xf32> to vector<8x32xf32>
    %cst_79 = arith.constant dense<0.000000e+00> : vector<8x128xf32>
    %283 = tpu.matmul %282, %9, %cst_79 {dimension_numbers = #tpu.dot_dimension_numbers<[1], [0], [0], [1], [0, 0, 1, 1], [], []>} : vector<8x32xf32>, vector<32x128xf32>, vector<8x128xf32> -> vector<8x128xf32>
    %284 = arith.addf %283, %262 : vector<8x128xf32>
    %285 = arith.index_cast %c4_i32 : i32 to index
    %c0_80 = arith.constant 0 : index
    %c0_81 = arith.constant 0 : index
    %286 = vector.load %arg2[%285, %c0_80, %c0_81] : memref<6x8x128xf32, #tpu.memory_space<vmem>>, vector<1x8x128xf32>
    %287 = vector.shape_cast %286 : vector<1x8x128xf32> to vector<8x128xf32>
    %288 = arith.addf %284, %287 : vector<8x128xf32>
    %289 = vector.extract_strided_slice %288 {offsets = [0, 0], sizes = [8, 32], strides = [1, 1]} : vector<8x128xf32> to vector<8x32xf32>
    %290 = arith.negf %289 : vector<8x32xf32>
    %291 = math.exp %290 : vector<8x32xf32>
    %cst_82 = arith.constant 1.000000e+00 : f32
    %292 = vector.broadcast %cst_82 : f32 to vector<8x32xf32>
    %293 = arith.addf %292, %291 : vector<8x32xf32>
    %294 = arith.divf %292, %293 : vector<8x32xf32>
    %295 = vector.extract_strided_slice %288 {offsets = [0, 32], sizes = [8, 32], strides = [1, 1]} : vector<8x128xf32> to vector<8x32xf32>
    %296 = arith.negf %295 : vector<8x32xf32>
    %297 = math.exp %296 : vector<8x32xf32>
    %cst_83 = arith.constant 1.000000e+00 : f32
    %298 = vector.broadcast %cst_83 : f32 to vector<8x32xf32>
    %299 = arith.addf %298, %297 : vector<8x32xf32>
    %300 = arith.divf %298, %299 : vector<8x32xf32>
    %301 = vector.extract_strided_slice %288 {offsets = [0, 64], sizes = [8, 32], strides = [1, 1]} : vector<8x128xf32> to vector<8x32xf32>
    %302 = math.tanh %301 : vector<8x32xf32>
    %303 = vector.extract_strided_slice %288 {offsets = [0, 96], sizes = [8, 32], strides = [1, 1]} : vector<8x128xf32> to vector<8x32xf32>
    %304 = arith.negf %303 : vector<8x32xf32>
    %305 = math.exp %304 : vector<8x32xf32>
    %cst_84 = arith.constant 1.000000e+00 : f32
    %306 = vector.broadcast %cst_84 : f32 to vector<8x32xf32>
    %307 = arith.addf %306, %305 : vector<8x32xf32>
    %308 = arith.divf %306, %307 : vector<8x32xf32>
    %309 = arith.mulf %300, %251 : vector<8x32xf32>
    %310 = arith.mulf %294, %302 : vector<8x32xf32>
    %311 = arith.addf %309, %310 : vector<8x32xf32>
    %312 = math.tanh %311 : vector<8x32xf32>
    %313 = arith.mulf %308, %312 : vector<8x32xf32>
    %cst_85 = arith.constant dense<0.000000e+00> : vector<8x128xf32>
    %314 = tpu.matmul %313, %10, %cst_85 {dimension_numbers = #tpu.dot_dimension_numbers<[1], [0], [0], [1], [0, 0, 1, 1], [], []>} : vector<8x32xf32>, vector<32x128xf32>, vector<8x128xf32> -> vector<8x128xf32>
    %315 = arith.addf %314, %17 : vector<8x128xf32>
    %316 = arith.index_cast %c4_i32 : i32 to index
    %c0_86 = arith.constant 0 : index
    %c0_87 = arith.constant 0 : index
    %317 = vector.load %arg10[%316, %c0_86, %c0_87] : memref<6x8x128xf32, #tpu.memory_space<vmem>>, vector<1x8x128xf32>
    %318 = vector.shape_cast %317 : vector<1x8x128xf32> to vector<8x128xf32>
    %319 = vector.shape_cast %315 : vector<8x128xf32> to vector<1x8x128xf32>
    tpu.vector_store %arg10[%316, %c0_86, %c0_87], %319 {strides = array<i32>} : memref<6x8x128xf32, #tpu.memory_space<vmem>>, vector<1x8x128xf32>,
    %c5_i32 = arith.constant 5 : i32
    %cst_88 = arith.constant dense<0.000000e+00> : vector<8x160xf32>
    %320 = tpu.matmul %313, %8, %cst_88 {dimension_numbers = #tpu.dot_dimension_numbers<[1], [0], [0], [1], [0, 0, 1, 1], [], []>} : vector<8x32xf32>, vector<32x160xf32>, vector<8x160xf32> -> vector<8x160xf32>
    %321 = vector.extract_strided_slice %320 {offsets = [0, 0], sizes = [8, 32], strides = [1, 1]} : vector<8x160xf32> to vector<8x32xf32>
    %322 = vector.extract_strided_slice %320 {offsets = [0, 32], sizes = [8, 128], strides = [1, 1]} : vector<8x160xf32> to vector<8x128xf32>
    %323 = vector.shape_cast %321 : vector<8x32xf32> to vector<8x1x32xf32>
    %324 = vector.broadcast %323 : vector<8x1x32xf32> to vector<8x8x32xf32>
    %325 = arith.addf %7, %324 : vector<8x8x32xf32>
    %326 = math.tanh %325 : vector<8x8x32xf32>
    %327 = arith.mulf %326, %14 : vector<8x8x32xf32>
    %cst_89 = arith.constant dense<0.000000e+00> : vector<8x8xf32>
    %328 = vector.multi_reduction <add>, %327, %cst_89 [2] : vector<8x8x32xf32> to vector<8x8xf32>
    %cst_90 = arith.constant dense<0xFF800000> : vector<8xf32>
    %329 = vector.multi_reduction <maximumf>, %328, %cst_90 [1] : vector<8x8xf32> to vector<8xf32>
    %330 = vector.shape_cast %329 : vector<8xf32> to vector<8x1xf32>
    %331 = vector.broadcast %330 : vector<8x1xf32> to vector<8x8xf32>
    %332 = arith.subf %328, %331 : vector<8x8xf32>
    %333 = math.exp %332 : vector<8x8xf32>
    %cst_91 = arith.constant dense<0.000000e+00> : vector<8xf32>
    %334 = vector.multi_reduction <add>, %333, %cst_91 [1] : vector<8x8xf32> to vector<8xf32>
    %335 = vector.shape_cast %334 : vector<8xf32> to vector<8x1xf32>
    %336 = tpu.reciprocal %335 {approx = true} : vector<8x1xf32> -> vector<8x1xf32>
    %337 = vector.broadcast %336 : vector<8x1xf32> to vector<8x8xf32>
    %338 = arith.mulf %333, %337 : vector<8x8xf32>
    %339 = vector.shape_cast %338 : vector<8x8xf32> to vector<8x8x1xf32>
    %340 = vector.broadcast %339 : vector<8x8x1xf32> to vector<8x8x32xf32>
    %341 = arith.mulf %340, %0 : vector<8x8x32xf32>
    %cst_92 = arith.constant dense<0.000000e+00> : vector<8x32xf32>
    %342 = vector.multi_reduction <add>, %341, %cst_92 [1] : vector<8x8x32xf32> to vector<8x32xf32>
    %cst_93 = arith.constant dense<0.000000e+00> : vector<8x128xf32>
    %343 = tpu.matmul %342, %9, %cst_93 {dimension_numbers = #tpu.dot_dimension_numbers<[1], [0], [0], [1], [0, 0, 1, 1], [], []>} : vector<8x32xf32>, vector<32x128xf32>, vector<8x128xf32> -> vector<8x128xf32>
    %344 = arith.addf %343, %322 : vector<8x128xf32>
    %345 = arith.index_cast %c5_i32 : i32 to index
    %c0_94 = arith.constant 0 : index
    %c0_95 = arith.constant 0 : index
    %346 = vector.load %arg2[%345, %c0_94, %c0_95] : memref<6x8x128xf32, #tpu.memory_space<vmem>>, vector<1x8x128xf32>
    %347 = vector.shape_cast %346 : vector<1x8x128xf32> to vector<8x128xf32>
    %348 = arith.addf %344, %347 : vector<8x128xf32>
    %349 = vector.extract_strided_slice %348 {offsets = [0, 0], sizes = [8, 32], strides = [1, 1]} : vector<8x128xf32> to vector<8x32xf32>
    %350 = arith.negf %349 : vector<8x32xf32>
    %351 = math.exp %350 : vector<8x32xf32>
    %cst_96 = arith.constant 1.000000e+00 : f32
    %352 = vector.broadcast %cst_96 : f32 to vector<8x32xf32>
    %353 = arith.addf %352, %351 : vector<8x32xf32>
    %354 = arith.divf %352, %353 : vector<8x32xf32>
    %355 = vector.extract_strided_slice %348 {offsets = [0, 32], sizes = [8, 32], strides = [1, 1]} : vector<8x128xf32> to vector<8x32xf32>
    %356 = arith.negf %355 : vector<8x32xf32>
    %357 = math.exp %356 : vector<8x32xf32>
    %cst_97 = arith.constant 1.000000e+00 : f32
    %358 = vector.broadcast %cst_97 : f32 to vector<8x32xf32>
    %359 = arith.addf %358, %357 : vector<8x32xf32>
    %360 = arith.divf %358, %359 : vector<8x32xf32>
    %361 = vector.extract_strided_slice %348 {offsets = [0, 64], sizes = [8, 32], strides = [1, 1]} : vector<8x128xf32> to vector<8x32xf32>
    %362 = math.tanh %361 : vector<8x32xf32>
    %363 = vector.extract_strided_slice %348 {offsets = [0, 96], sizes = [8, 32], strides = [1, 1]} : vector<8x128xf32> to vector<8x32xf32>
    %364 = arith.negf %363 : vector<8x32xf32>
    %365 = math.exp %364 : vector<8x32xf32>
    %cst_98 = arith.constant 1.000000e+00 : f32
    %366 = vector.broadcast %cst_98 : f32 to vector<8x32xf32>
    %367 = arith.addf %366, %365 : vector<8x32xf32>
    %368 = arith.divf %366, %367 : vector<8x32xf32>
    %369 = arith.mulf %360, %311 : vector<8x32xf32>
    %370 = arith.mulf %354, %362 : vector<8x32xf32>
    %371 = arith.addf %369, %370 : vector<8x32xf32>
    %372 = math.tanh %371 : vector<8x32xf32>
    %373 = arith.mulf %368, %372 : vector<8x32xf32>
    %cst_99 = arith.constant dense<0.000000e+00> : vector<8x128xf32>
    %374 = tpu.matmul %373, %10, %cst_99 {dimension_numbers = #tpu.dot_dimension_numbers<[1], [0], [0], [1], [0, 0, 1, 1], [], []>} : vector<8x32xf32>, vector<32x128xf32>, vector<8x128xf32> -> vector<8x128xf32>
    %375 = arith.addf %374, %17 : vector<8x128xf32>
    %376 = arith.index_cast %c5_i32 : i32 to index
    %c0_100 = arith.constant 0 : index
    %c0_101 = arith.constant 0 : index
    %377 = vector.load %arg10[%376, %c0_100, %c0_101] : memref<6x8x128xf32, #tpu.memory_space<vmem>>, vector<1x8x128xf32>
    %378 = vector.shape_cast %377 : vector<1x8x128xf32> to vector<8x128xf32>
    %379 = vector.shape_cast %375 : vector<8x128xf32> to vector<1x8x128xf32>
    tpu.vector_store %arg10[%376, %c0_100, %c0_101], %379 {strides = array<i32>} : memref<6x8x128xf32, #tpu.memory_space<vmem>>, vector<1x8x128xf32>,
    %c6_i32 = arith.constant 6 : i32
    return
  }
  func.func @transform_0(%arg0: i32) -> (i32, i32, i32) {
    %c0_i32 = arith.constant 0 : i32
    %c0_i32_0 = arith.constant 0 : i32
    %c0_i32_1 = arith.constant 0 : i32
    return %arg0, %c0_i32, %c0_i32_0 : i32, i32, i32
  }
  func.func @transform_1(%arg0: i32) -> (i32, i32, i32) {
    %c0_i32 = arith.constant 0 : i32
    %c0_i32_0 = arith.constant 0 : i32
    %c0_i32_1 = arith.constant 0 : i32
    return %c0_i32, %arg0, %c0_i32_0 : i32, i32, i32
  }
  func.func @transform_2(%arg0: i32) -> (i32, i32) {
    %c0_i32 = arith.constant 0 : i32
    %c0_i32_0 = arith.constant 0 : i32
    %c0_i32_1 = arith.constant 0 : i32
    return %c0_i32, %c0_i32_0 : i32, i32
  }
  func.func @transform_3(%arg0: i32) -> (i32, i32) {
    %c0_i32 = arith.constant 0 : i32
    %c0_i32_0 = arith.constant 0 : i32
    %c0_i32_1 = arith.constant 0 : i32
    return %c0_i32, %c0_i32_0 : i32, i32
  }
  func.func @transform_4(%arg0: i32) -> (i32, i32) {
    %c0_i32 = arith.constant 0 : i32
    %c0_i32_0 = arith.constant 0 : i32
    %c0_i32_1 = arith.constant 0 : i32
    return %c0_i32, %c0_i32_0 : i32, i32
  }
  func.func @transform_5(%arg0: i32) -> (i32, i32) {
    %c0_i32 = arith.constant 0 : i32
    %c0_i32_0 = arith.constant 0 : i32
    %c0_i32_1 = arith.constant 0 : i32
    return %c0_i32, %c0_i32_0 : i32, i32
  }
  func.func @transform_6(%arg0: i32) -> (i32, i32) {
    %c0_i32 = arith.constant 0 : i32
    %c0_i32_0 = arith.constant 0 : i32
    %c0_i32_1 = arith.constant 0 : i32
    return %c0_i32, %c0_i32_0 : i32, i32
  }
  func.func @transform_7(%arg0: i32) -> (i32, i32) {
    %c0_i32 = arith.constant 0 : i32
    %c0_i32_0 = arith.constant 0 : i32
    %c0_i32_1 = arith.constant 0 : i32
    return %c0_i32, %c0_i32_0 : i32, i32
  }
  func.func @transform_8(%arg0: i32) -> (i32, i32) {
    %c0_i32 = arith.constant 0 : i32
    %c0_i32_0 = arith.constant 0 : i32
    %c0_i32_1 = arith.constant 0 : i32
    return %c0_i32, %c0_i32_0 : i32, i32
  }
  func.func @transform_9(%arg0: i32) -> (i32, i32, i32) {
    %c0_i32 = arith.constant 0 : i32
    %c0_i32_0 = arith.constant 0 : i32
    %c0_i32_1 = arith.constant 0 : i32
    return %c0_i32, %arg0, %c0_i32_0 : i32, i32, i32
  }
}

</mosaic_0001>

<llo_original>
// kernel: attention_forward.1
$region0: #{attention_forward.1}
  #allocation0 [shape = 'u32[]', space=smem, size = 0x4, offset = 0x4, fixed_abs, tag = 'smem constant byte address 0x4 - core index']
  #allocation1 [shape = 'u32[144,128]{1,0:T(1,128)}', space=vmem, size = 0x12000, scoped, tag = 'internal scratch']
  %s0 = inlined_call_operand.vmem [shape: f32[16,8,32], index: 0, kind: input, shape index: {}]
  %s1 = inlined_call_operand.vmem [shape: f32[6,16,128], index: 1, kind: input, shape index: {}]
  %s2 = inlined_call_operand.vmem [shape: f32[32,32], index: 2, kind: input, shape index: {}]
  %s3 = inlined_call_operand.vmem [shape: f32[1,32], index: 3, kind: input, shape index: {}]
  %s4 = inlined_call_operand.vmem [shape: f32[1,32], index: 4, kind: input, shape index: {}]
  %s5 = inlined_call_operand.vmem [shape: f32[32,160], index: 5, kind: input, shape index: {}]
  %s6 = inlined_call_operand.vmem [shape: f32[32,128], index: 6, kind: input, shape index: {}]
  %s7 = inlined_call_operand.vmem [shape: f32[32,128], index: 7, kind: input, shape index: {}]
  %s8 = inlined_call_operand.vmem [shape: f32[1,128], index: 8, kind: input, shape index: {}]
  %s9 = inlined_call_operand.vmem [shape: f32[6,16,128], index: 9, kind: output, shape index: {}]
  %s10 = sld [smem:[#allocation0]]
  $region141: #{attention_forward.1} parent=0
    _
  %s12 = ssub.s32 1, %s10
  %s13 = scalar_select 0, %s12, %s10
  $region1: #{attention_forward.1} parent=0
    #allocation2 [shape = 'u8[49152]{0}', space=vmem, size = 0xc000, scoped, tag = 'input window, operand 1']
    #allocation3 [shape = 'u8[49152]{0}', space=vmem, size = 0xc000, scoped, tag = 'output window, operand 0']
    loop: start=0, step=1, limit=4
    $region2: #{attention_forward.1} parent=1 // loop_pre_header
      _
    $region3: #{attention_forward.1} parent=1 // loop_header
      %s15 = sphi 0, %s19
      %p16 = scmp.ge.s32.totalorder %s15, 4
      %s25 = sphi 0, %s27
      %s28 = sphi 0, %s25
      %s29 = sphi 0, %s28
      %s45 = sphi 0, %s29
      %s51 = sphi 0, %s53
      %s54 = sphi 0, %s51
      %s55 = sphi 0, %s54
      %s71 = sphi 0, %s55
      %s75 = sphi 0, %s75
      %s77 = sphi 0, %s75
      %s78 = sphi 0, %s77
      %s92 = sphi 0, %s78
      %s96 = sphi 0, %s96
      %s98 = sphi 0, %s96
      %s99 = sphi 0, %s98
      %s113 = sphi 0, %s99
      %s117 = sphi 0, %s117
      %s119 = sphi 0, %s117
      %s120 = sphi 0, %s119
      %s134 = sphi 0, %s120
      %s138 = sphi 0, %s138
      %s140 = sphi 0, %s138
      %s141 = sphi 0, %s140
      %s155 = sphi 0, %s141
      %s159 = sphi 0, %s159
      %s161 = sphi 0, %s159
      %s162 = sphi 0, %s161
      %s176 = sphi 0, %s162
      %s180 = sphi 0, %s180
      %s182 = sphi 0, %s180
      %s183 = sphi 0, %s182
      %s197 = sphi 0, %s183
      %s201 = sphi 0, %s201
      %s203 = sphi 0, %s201
      %s204 = sphi 0, %s203
      %s218 = sphi 0, %s204
      %s224 = sphi 0, %s226
      %s227 = sphi 0, %s224
      %s228 = sphi 0, %s227
      %s244 = sphi 0, %s228
    $region4: #{attention_forward.1} parent=1 // loop_header_branch
      %18 = sbr.rel (%p16) target = $region8
    $region5: #{attention_forward.1} parent=1 // loop_body
      %s20 = ssub.s32 %s15, 1
      %s21 = ssub.s32 %s15, 2
      %s22 = sadd.s32 %s15, 1
      %s23 = ssub.s32 %s15, %s22
      %p24 = scmp.eq.s32.totalorder %s23, 0
      %s26 = sadd.s32 %s25, 1
      %s27 = scalar_select %p24, %s25, %s26
      %p30 = pneg %p24
      %p31 = scmp.eq.s32.totalorder %s15, 1
      %p32 = por %p30, %p31
      %p33 = scmp.ne.s32.totalorder %s25, %s28
      %p34 = scmp.eq.s32.totalorder %s15, 0
      %p35 = por %p33, %p34
      %p36 = scmp.ne.s32.totalorder %s25, %s28
      %p37 = scmp.eq.s32.totalorder %s20, 1
      %p38 = por %p36, %p37
      %p39 = scmp.ne.s32.totalorder %s28, %s29
      %p40 = scmp.eq.s32.totalorder %s20, 0
      %p41 = por %p39, %p40
      %p42 = scmp.ne.s32.totalorder %s28, %s29
      %p43 = scmp.eq.s32.totalorder %s21, 1
      %p44 = por %p42, %p43
      %p46 = scmp.ne.s32.totalorder %s29, %s45
      %p47 = scmp.eq.s32.totalorder %s21, 0
      %p48 = por %p46, %p47
      %s49 = ssub.s32 %s15, %s22
      %p50 = scmp.eq.s32.totalorder %s49, 0
      %s52 = sadd.s32 %s51, 1
      %s53 = scalar_select %p50, %s51, %s52
      %p56 = pneg %p50
      %p57 = scmp.eq.s32.totalorder %s15, 1
      %p58 = por %p56, %p57
      %p59 = scmp.ne.s32.totalorder %s51, %s54
      %p60 = scmp.eq.s32.totalorder %s15, 0
      %p61 = por %p59, %p60
      %p62 = scmp.ne.s32.totalorder %s51, %s54
      %p63 = scmp.eq.s32.totalorder %s20, 1
      %p64 = por %p62, %p63
      %p65 = scmp.ne.s32.totalorder %s54, %s55
      %p66 = scmp.eq.s32.totalorder %s20, 0
      %p67 = por %p65, %p66
      %p68 = scmp.ne.s32.totalorder %s54, %s55
      %p69 = scmp.eq.s32.totalorder %s21, 1
      %p70 = por %p68, %p69
      %p72 = scmp.ne.s32.totalorder %s55, %s71
      %p73 = scmp.eq.s32.totalorder %s21, 0
      %p74 = por %p72, %p73
      %s76 = sadd.s32 %s75, 1
      %p79 = scmp.eq.s32.totalorder %s15, 1
      %p80 = scmp.ne.s32.totalorder %s75, %s77
      %p81 = scmp.eq.s32.totalorder %s15, 0
      %p82 = por %p80, %p81
      %p83 = scmp.ne.s32.totalorder %s75, %s77
      %p84 = scmp.eq.s32.totalorder %s20, 1
      %p85 = por %p83, %p84
      %p86 = scmp.ne.s32.totalorder %s77, %s78
      %p87 = scmp.eq.s32.totalorder %s20, 0
      %p88 = por %p86, %p87
      %p89 = scmp.ne.s32.totalorder %s77, %s78
      %p90 = scmp.eq.s32.totalorder %s21, 1
      %p91 = por %p89, %p90
      %p93 = scmp.ne.s32.totalorder %s78, %s92
      %p94 = scmp.eq.s32.totalorder %s21, 0
      %p95 = por %p93, %p94
      %s97 = sadd.s32 %s96, 1
      %p100 = scmp.eq.s32.totalorder %s15, 1
      %p101 = scmp.ne.s32.totalorder %s96, %s98
      %p102 = scmp.eq.s32.totalorder %s15, 0
      %p103 = por %p101, %p102
      %p104 = scmp.ne.s32.totalorder %s96, %s98
      %p105 = scmp.eq.s32.totalorder %s20, 1
      %p106 = por %p104, %p105
      %p107 = scmp.ne.s32.totalorder %s98, %s99
      %p108 = scmp.eq.s32.totalorder %s20, 0
      %p109 = por %p107, %p108
      %p110 = scmp.ne.s32.totalorder %s98, %s99
      %p111 = scmp.eq.s32.totalorder %s21, 1
      %p112 = por %p110, %p111
      %p114 = scmp.ne.s32.totalorder %s99, %s113
      %p115 = scmp.eq.s32.totalorder %s21, 0
      %p116 = por %p114, %p115
      %s118 = sadd.s32 %s117, 1
      %p121 = scmp.eq.s32.totalorder %s15, 1
      %p122 = scmp.ne.s32.totalorder %s117, %s119
      %p123 = scmp.eq.s32.totalorder %s15, 0
      %p124 = por %p122, %p123
      %p125 = scmp.ne.s32.totalorder %s117, %s119
      %p126 = scmp.eq.s32.totalorder %s20, 1
      %p127 = por %p125, %p126
      %p128 = scmp.ne.s32.totalorder %s119, %s120
      %p129 = scmp.eq.s32.totalorder %s20, 0
      %p130 = por %p128, %p129
      %p131 = scmp.ne.s32.totalorder %s119, %s120
      %p132 = scmp.eq.s32.totalorder %s21, 1
      %p133 = por %p131, %p132
      %p135 = scmp.ne.s32.totalorder %s120, %s134
      %p136 = scmp.eq.s32.totalorder %s21, 0
      %p137 = por %p135, %p136
      %s139 = sadd.s32 %s138, 1
      %p142 = scmp.eq.s32.totalorder %s15, 1
      %p143 = scmp.ne.s32.totalorder %s138, %s140
      %p144 = scmp.eq.s32.totalorder %s15, 0
      %p145 = por %p143, %p144
      %p146 = scmp.ne.s32.totalorder %s138, %s140
      %p147 = scmp.eq.s32.totalorder %s20, 1
      %p148 = por %p146, %p147
      %p149 = scmp.ne.s32.totalorder %s140, %s141
      %p150 = scmp.eq.s32.totalorder %s20, 0
      %p151 = por %p149, %p150
      %p152 = scmp.ne.s32.totalorder %s140, %s141
      %p153 = scmp.eq.s32.totalorder %s21, 1
      %p154 = por %p152, %p153
      %p156 = scmp.ne.s32.totalorder %s141, %s155
      %p157 = scmp.eq.s32.totalorder %s21, 0
      %p158 = por %p156, %p157
      %s160 = sadd.s32 %s159, 1
      %p163 = scmp.eq.s32.totalorder %s15, 1
      %p164 = scmp.ne.s32.totalorder %s159, %s161
      %p165 = scmp.eq.s32.totalorder %s15, 0
      %p166 = por %p164, %p165
      %p167 = scmp.ne.s32.totalorder %s159, %s161
      %p168 = scmp.eq.s32.totalorder %s20, 1
      %p169 = por %p167, %p168
      %p170 = scmp.ne.s32.totalorder %s161, %s162
      %p171 = scmp.eq.s32.totalorder %s20, 0
      %p172 = por %p170, %p171
      %p173 = scmp.ne.s32.totalorder %s161, %s162
      %p174 = scmp.eq.s32.totalorder %s21, 1
      %p175 = por %p173, %p174
      %p177 = scmp.ne.s32.totalorder %s162, %s176
      %p178 = scmp.eq.s32.totalorder %s21, 0
      %p179 = por %p177, %p178
      %s181 = sadd.s32 %s180, 1
      %p184 = scmp.eq.s32.totalorder %s15, 1
      %p185 = scmp.ne.s32.totalorder %s180, %s182
      %p186 = scmp.eq.s32.totalorder %s15, 0
      %p187 = por %p185, %p186
      %p188 = scmp.ne.s32.totalorder %s180, %s182
      %p189 = scmp.eq.s32.totalorder %s20, 1
      %p190 = por %p188, %p189
      %p191 = scmp.ne.s32.totalorder %s182, %s183
      %p192 = scmp.eq.s32.totalorder %s20, 0
      %p193 = por %p191, %p192
      %p194 = scmp.ne.s32.totalorder %s182, %s183
      %p195 = scmp.eq.s32.totalorder %s21, 1
      %p196 = por %p194, %p195
      %p198 = scmp.ne.s32.totalorder %s183, %s197
      %p199 = scmp.eq.s32.totalorder %s21, 0
      %p200 = por %p198, %p199
      %s202 = sadd.s32 %s201, 1
      %p205 = scmp.eq.s32.totalorder %s15, 1
      %p206 = scmp.ne.s32.totalorder %s201, %s203
      %p207 = scmp.eq.s32.totalorder %s15, 0
      %p208 = por %p206, %p207
      %p209 = scmp.ne.s32.totalorder %s201, %s203
      %p210 = scmp.eq.s32.totalorder %s20, 1
      %p211 = por %p209, %p210
      %p212 = scmp.ne.s32.totalorder %s203, %s204
      %p213 = scmp.eq.s32.totalorder %s20, 0
      %p214 = por %p212, %p213
      %p215 = scmp.ne.s32.totalorder %s203, %s204
      %p216 = scmp.eq.s32.totalorder %s21, 1
      %p217 = por %p215, %p216
      %p219 = scmp.ne.s32.totalorder %s204, %s218
      %p220 = scmp.eq.s32.totalorder %s21, 0
      %p221 = por %p219, %p220
      %s222 = ssub.s32 %s15, %s22
      %p223 = scmp.eq.s32.totalorder %s222, 0
      %s225 = sadd.s32 %s224, 1
      %s226 = scalar_select %p223, %s224, %s225
      %p229 = pneg %p223
      %p230 = scmp.eq.s32.totalorder %s15, 1
      %p231 = por %p229, %p230
      %p232 = scmp.ne.s32.totalorder %s224, %s227
      %p233 = scmp.eq.s32.totalorder %s15, 0
      %p234 = por %p232, %p233
      %p235 = scmp.ne.s32.totalorder %s224, %s227
      %p236 = scmp.eq.s32.totalorder %s20, 1
      %p237 = por %p235, %p236
      %p238 = scmp.ne.s32.totalorder %s227, %s228
      %p239 = scmp.eq.s32.totalorder %s20, 0
      %p240 = por %p238, %p239
      %p241 = scmp.ne.s32.totalorder %s227, %s228
      %p242 = scmp.eq.s32.totalorder %s21, 1
      %p243 = por %p241, %p242
      %p245 = scmp.ne.s32.totalorder %s228, %s244
      %p246 = scmp.eq.s32.totalorder %s21, 0
      %p247 = por %p245, %p246
      %p248 = scmp.le.s32.totalorder 1, %s15
      %p249 = scmp.lt.s32.totalorder %s15, 3
      %p250 = pnand %p248, %p249
      %p251 = pneg %p250
      // Predicated region
      $region9: #{attention_forward.1} parent=5 // pred_check
        _
      $region10: #{attention_forward.1} parent=5 // pred_check_branch
        %253 = sbr.rel (%p250) target = $region12
      $region11: #{attention_forward.1} parent=5 // pred_region
        %s254 = ssub.s32 %s15, 1
        // Predicated region
        $region13: #{attention_forward.1} parent=11 // pred_check
          %p255 = pneg %p88
        $region14: #{attention_forward.1} parent=11 // pred_check_branch
          %257 = sbr.rel (%p255) target = $region16
        $region15: #{attention_forward.1} parent=11 // pred_region
          _
        $region16: #{attention_forward.1} parent=11 // pred_fallthru
          _
        // Predicated region
        $region17: #{attention_forward.1} parent=11 // pred_check
          %p258 = pneg %p109
        $region18: #{attention_forward.1} parent=11 // pred_check_branch
          %260 = sbr.rel (%p258) target = $region20
        $region19: #{attention_forward.1} parent=11 // pred_region
          _
        $region20: #{attention_forward.1} parent=11 // pred_fallthru
          _
        // Predicated region
        $region21: #{attention_forward.1} parent=11 // pred_check
          %p261 = pneg %p130
        $region22: #{attention_forward.1} parent=11 // pred_check_branch
          %263 = sbr.rel (%p261) target = $region24
        $region23: #{attention_forward.1} parent=11 // pred_region
          _
        $region24: #{attention_forward.1} parent=11 // pred_fallthru
          _
        // Predicated region
        $region25: #{attention_forward.1} parent=11 // pred_check
          %p264 = pneg %p151
        $region26: #{attention_forward.1} parent=11 // pred_check_branch
          %266 = sbr.rel (%p264) target = $region28
        $region27: #{attention_forward.1} parent=11 // pred_region
          _
        $region28: #{attention_forward.1} parent=11 // pred_fallthru
          _
        // Predicated region
        $region29: #{attention_forward.1} parent=11 // pred_check
          %p267 = pneg %p172
        $region30: #{attention_forward.1} parent=11 // pred_check_branch
          %269 = sbr.rel (%p267) target = $region32
        $region31: #{attention_forward.1} parent=11 // pred_region
          _
        $region32: #{attention_forward.1} parent=11 // pred_fallthru
          _
        // Predicated region
        $region33: #{attention_forward.1} parent=11 // pred_check
          %p270 = pneg %p193
        $region34: #{attention_forward.1} parent=11 // pred_check_branch
          %272 = sbr.rel (%p270) target = $region36
        $region35: #{attention_forward.1} parent=11 // pred_region
          _
        $region36: #{attention_forward.1} parent=11 // pred_fallthru
          _
        // Predicated region
        $region37: #{attention_forward.1} parent=11 // pred_check
          %p273 = pneg %p214
        $region38: #{attention_forward.1} parent=11 // pred_check_branch
          %275 = sbr.rel (%p273) target = $region40
        $region39: #{attention_forward.1} parent=11 // pred_region
          _
        $region40: #{attention_forward.1} parent=11 // pred_fallthru
          _
      $region12: #{attention_forward.1} parent=5 // pred_fallthru
        _
      %p276 = scmp.lt.s32.totalorder %s15, 2
      // Predicated region
      $region41: #{attention_forward.1} parent=5 // pred_check
        %p277 = pneg %p276
      $region42: #{attention_forward.1} parent=5 // pred_check_branch
        %279 = sbr.rel (%p277) target = $region44
      $region43: #{attention_forward.1} parent=5 // pred_region
        // Predicated region
        $region45: #{attention_forward.1} parent=43 // pred_check
          %p280 = pneg %p35
        $region46: #{attention_forward.1} parent=43 // pred_check_branch
          %282 = sbr.rel (%p280) target = $region48
        $region47: #{attention_forward.1} parent=43 // pred_region
          %s283 = smul.u32 8, %s15
          %p284 = scmp.lt.s32.totalorder %s283, 15
          %s285 = scalar_select %p284, %s283, 15
          %s286 = smul.addr %s285, 8
          %s287 = scalar_lea.vmem %s0, %s286
          %s288 = smul.u32 8, %s15
        $region48: #{attention_forward.1} parent=43 // pred_fallthru
          _
        // Predicated region
        $region49: #{attention_forward.1} parent=43 // pred_check
          %p289 = pneg %p61
        $region50: #{attention_forward.1} parent=43 // pred_check_branch
          %291 = sbr.rel (%p289) target = $region52
        $region51: #{attention_forward.1} parent=43 // pred_region
          %s292 = sand.u32 %s51, 1
          %s293 = sand.u32 %s51, 1
          %s294 = smul.addr %s293, 48
          %s295 = scalar_lea.vmem [#allocation2], %s294
          %s296 = smul.addr %s15, 8
          %s297 = scalar_lea.vmem %s1, %s296
          // Predicated region
          $region53: #{attention_forward.1} parent=51 // pred_check
            _
          $region54: #{attention_forward.1} parent=51 // pred_check_branch
            %299 = sbr.rel (0) target = $region56
          $region55: #{attention_forward.1} parent=51 // pred_region
            // Predicated region
            $region57: #{attention_forward.1} parent=55 // pred_check
              _
            $region58: #{attention_forward.1} parent=55 // pred_check_branch
              %301 = sbr.rel (0) target = $region60
            $region59: #{attention_forward.1} parent=55 // pred_region
              // Predicated region
              $region72: #{attention_forward.1} parent=59 // pred_check
                _
              $region73: #{attention_forward.1} parent=59 // pred_check_branch
                %326 = sbr.rel (0) target = $region75
              $region74: #{attention_forward.1} parent=59 // pred_region
                loop: start=0, step=1, limit=1
                $region76: #{attention_forward.1} parent=74 // loop_pre_header
                  _
                $region77: #{attention_forward.1} parent=74 // loop_header
                  %s328 = sphi 0, %s332
                  %p329 = scmp.ge.s32.totalorder %s328, 1
                  %s333 = sphi %s297, %s297
                  %s334 = sphi %s295, %s295
                $region78: #{attention_forward.1} parent=74 // loop_header_branch
                  %331 = sbr.rel (%p329) target = $region82
                $region79: #{attention_forward.1} parent=74 // loop_body
                  %v335 = vld [vmem:[%s333] sm:$0xff]
                  %336 = vst [vmem:[%s334] sm:$0xff] %v335
                  %v337 = vld [vmem:[%s333 + $0x10] sm:$0xff]
                  %338 = vst [vmem:[%s334 + $0x8] sm:$0xff] %v337
                  %v339 = vld [vmem:[%s333 + $0x20] sm:$0xff]
                  %340 = vst [vmem:[%s334 + $0x10] sm:$0xff] %v339
                  %v341 = vld [vmem:[%s333 + $0x30] sm:$0xff]
                  %342 = vst [vmem:[%s334 + $0x18] sm:$0xff] %v341
                  %v343 = vld [vmem:[%s333 + $0x40] sm:$0xff]
                  %344 = vst [vmem:[%s334 + $0x20] sm:$0xff] %v343
                  %v345 = vld [vmem:[%s333 + $0x50] sm:$0xff]
                  %346 = vst [vmem:[%s334 + $0x28] sm:$0xff] %v345
                $region80: #{attention_forward.1} parent=74 // loop_footer
                  %s332 = sadd.s32 1, %s328
                $region81: #{attention_forward.1} parent=74 // loop_footer_branch
                  %327 = sbr.rel target = $region77
                $region82: #{attention_forward.1} parent=74 // loop_exit
                  _
              $region75: #{attention_forward.1} parent=59 // pred_fallthru
                _
              // Predicated region
              $region83: #{attention_forward.1} parent=59 // pred_check
                _
              $region84: #{attention_forward.1} parent=59 // pred_check_branch
                %348 = sbr.rel target = $region86
              $region85: #{attention_forward.1} parent=59 // pred_region
                _
              $region86: #{attention_forward.1} parent=59 // pred_fallthru
                _
            $region60: #{attention_forward.1} parent=55 // pred_fallthru
              _
            // Predicated region
            $region61: #{attention_forward.1} parent=55 // pred_check
              _
            $region62: #{attention_forward.1} parent=55 // pred_check_branch
              %303 = sbr.rel target = $region64
            $region63: #{attention_forward.1} parent=55 // pred_region
              loop: start=0, step=1, limit=1
              $region65: #{attention_forward.1} parent=63 // loop_pre_header
                _
              $region66: #{attention_forward.1} parent=63 // loop_header
                %s306 = sphi 0, %s310
                %p307 = scmp.ge.s32.totalorder %s306, 1
                %s311 = sphi %s297, %s297
                %s312 = sphi %s295, %s295
              $region67: #{attention_forward.1} parent=63 // loop_header_branch
                %309 = sbr.rel (%p307) target = $region71
              $region68: #{attention_forward.1} parent=63 // loop_body
                %v313 = vld [vmem:[%s311] sm:$0xff]
                %314 = vst [vmem:[%s312] sm:$0xff] %v313
                %v315 = vld [vmem:[%s311 + $0x10] sm:$0xff]
                %316 = vst [vmem:[%s312 + $0x8] sm:$0xff] %v315
                %v317 = vld [vmem:[%s311 + $0x20] sm:$0xff]
                %318 = vst [vmem:[%s312 + $0x10] sm:$0xff] %v317
                %v319 = vld [vmem:[%s311 + $0x30] sm:$0xff]
                %320 = vst [vmem:[%s312 + $0x18] sm:$0xff] %v319
                %v321 = vld [vmem:[%s311 + $0x40] sm:$0xff]
                %322 = vst [vmem:[%s312 + $0x20] sm:$0xff] %v321
                %v323 = vld [vmem:[%s311 + $0x50] sm:$0xff]
                %324 = vst [vmem:[%s312 + $0x28] sm:$0xff] %v323
              $region69: #{attention_forward.1} parent=63 // loop_footer
                %s310 = sadd.s32 1, %s306
              $region70: #{attention_forward.1} parent=63 // loop_footer_branch
                %305 = sbr.rel target = $region66
              $region71: #{attention_forward.1} parent=63 // loop_exit
                _
            $region64: #{attention_forward.1} parent=55 // pred_fallthru
              _
          $region56: #{attention_forward.1} parent=51 // pred_fallthru
            _
          %349 = vnop
        $region52: #{attention_forward.1} parent=43 // pred_fallthru
          _
      $region44: #{attention_forward.1} parent=5 // pred_fallthru
        _
      %p350 = scmp.le.s32.totalorder 1, %s15
      %p351 = scmp.lt.s32.totalorder %s15, 3
      %p352 = pnand %p350, %p351
      %p353 = pneg %p352
      // Predicated region
      $region87: #{attention_forward.1} parent=5 // pred_check
        _
      $region88: #{attention_forward.1} parent=5 // pred_check_branch
        %355 = sbr.rel (%p352) target = $region90
      $region89: #{attention_forward.1} parent=5 // pred_region
        %s356 = ssub.s32 %s15, 1
        %s357 = sand.u32 %s54, 1
        %s358 = sand.u32 %s54, 1
        %s359 = smul.addr %s358, 48
        %s360 = scalar_lea.vmem [#allocation2], %s359
        // Predicated region
        $region91: #{attention_forward.1} parent=89 // pred_check
          %p361 = pneg %p67
        $region92: #{attention_forward.1} parent=89 // pred_check_branch
          %363 = sbr.rel (%p361) target = $region94
        $region93: #{attention_forward.1} parent=89 // pred_region
          _
        $region94: #{attention_forward.1} parent=89 // pred_fallthru
          _
        %s364 = smul.u32 8, %s20
        %p365 = scmp.lt.s32.totalorder %s364, 15
        %s366 = scalar_select %p365, %s364, 15
        %s367 = smul.addr %s366, 8
        %s368 = scalar_lea.vmem %s0, %s367
        %p369 = pneg %p41
        %p370 = pneg %p38
        %s371 = sand.u32 %s54, 1
        %s372 = sand.u32 %s54, 1
        %s373 = smul.addr %s372, 48
        %s374 = scalar_lea.vmem [#allocation2], %s373
        %p375 = pneg %p67
        %p376 = pneg %p64
        %p377 = pneg %p88
        %p378 = pneg %p85
        %p379 = pneg %p109
        %p380 = pneg %p106
        %p381 = pneg %p130
        %p382 = pneg %p127
        %p383 = pneg %p151
        %p384 = pneg %p148
        %p385 = pneg %p172
        %p386 = pneg %p169
        %p387 = pneg %p193
        %p388 = pneg %p190
        %p389 = pneg %p214
        %p390 = pneg %p211
        %p391 = pneg %p240
        %p392 = pneg %p237
        %s393 = sand.u32 %s227, 1
        %s394 = sand.u32 %s227, 1
        %s395 = smul.addr %s394, 48
        %s396 = scalar_lea.vmem [#allocation3], %s395
        %s397 = smul.u32 8, %s20
        %p398 = scmp.lt.s32.totalorder %s397, 15
        %s399 = scalar_select %p398, %s397, 15
        %s400 = smul.addr %s399, 8
        %s401 = scalar_lea.vmem %s0, %s400
        %s402 = smul.u32 8, %s20
        %v403 = vld [vmem:[%s401] sm:$0xff]
        %v404 = vld [vmem:[%s401 + $0x8] sm:$0xff]
        %v405 = vld [vmem:[%s401 + $0x10] sm:$0xff]
        %v406 = vld [vmem:[%s401 + $0x18] sm:$0xff]
        %v407 = vld [vmem:[%s401 + $0x20] sm:$0xff]
        %v408 = vld [vmem:[%s401 + $0x28] sm:$0xff]
        %v409 = vld [vmem:[%s401 + $0x30] sm:$0xff]
        %v410 = vld [vmem:[%s401 + $0x38] sm:$0xff]
        %v411 = vld [vmem:[%s2] sm:$0xff]
        %v412 = vld [vmem:[%s2 + $0x8] sm:$0xff]
        %v413 = vld [vmem:[%s2 + $0x10] sm:$0xff]
        %v414 = vld [vmem:[%s2 + $0x18] sm:$0xff]
        %v415 = vld [vmem:[%s3] sm:$0x1]
        %v417 = vlaneseq
        %v418 = vshrl.u32 %v417, 7
        %v419 = vsub.s32 0, %v418
        %v420 = vrot.slane %v415, %v419
        %vm422 = vcmask 261120
        %v424 = vsel %vm422, %v403, 0
        %v427 = vsel %vm422, %v404, 0
        %v430 = vsel %vm422, %v405, 0
        %v433 = vsel %vm422, %v406, 0
        %v436 = vsel %vm422, %v407, 0
        %v439 = vsel %vm422, %v408, 0
        %v442 = vsel %vm422, %v409, 0
        %v445 = vsel %vm422, %v410, 0
        %447 = vmatprep.subr.mxu0 0.0
        %448 = vmatpush1.msra.mxu0 %v411
        %449 = vmatprep.subr.mxu0 0.0
        %450 = vmatpush1.msra.mxu0 %v412
        %451 = vmatprep.subr.mxu0 0.0
        %452 = vmatpush1.msra.mxu0 %v413
        %453 = vmatprep.subr.mxu0 0.0
        %454 = vmatpush1.msra.mxu0 %v414
        %455 = vmatprep.subr.mxu0 0.0
        %456 = vmatpush1.msra.mxu0 0.0
        %457 = vmatprep.subr.mxu0 0.0
        %458 = vmatpush1.msra.mxu0 0.0
        %459 = vmatprep.subr.mxu0 0.0
        %460 = vmatpush1.msra.mxu0 0.0
        %461 = vmatprep.subr.mxu0 0.0
        %462 = vmatpush1.msra.mxu0 0.0
        %463 = vmatprep.subr.mxu0 0.0
        %464 = vmatpush1.msra.mxu0 0.0
        %465 = vmatprep.subr.mxu0 0.0
        %466 = vmatpush1.msra.mxu0 0.0
        %467 = vmatprep.subr.mxu0 0.0
        %468 = vmatpush1.msra.mxu0 0.0
        %469 = vmatprep.subr.mxu0 0.0
        %470 = vmatpush1.msra.mxu0 0.0
        %471 = vmatprep.subr.mxu0 0.0
        %472 = vmatpush1.msra.mxu0 0.0
        %473 = vmatprep.subr.mxu0 0.0
        %474 = vmatpush1.msra.mxu0 0.0
        %475 = vmatprep.subr.mxu0 0.0
        %476 = vmatpush1.msra.mxu0 0.0
        %477 = vmatprep.subr.mxu0 0.0
        %478 = vmatpush1.msra.mxu0 0.0
        %479 = vmatprep.subr.mxu0 0.0
        %480 = vmatpush1.msra.mxu0 0.0
        %481 = vmatprep.subr.mxu0 0.0
        %482 = vmatpush1.msra.mxu0 0.0
        %483 = vmatprep.subr.mxu0 0.0
        %484 = vmatpush1.msra.mxu0 0.0
        %485 = vmatprep.subr.mxu0 0.0
        %486 = vmatpush1.msra.mxu0 0.0
        %487 = vmatprep.subr.mxu0 0.0
        %488 = vmatpush1.msra.mxu0 0.0
        %489 = vmatprep.subr.mxu0 0.0
        %490 = vmatpush1.msra.mxu0 0.0
        %491 = vmatprep.subr.mxu0 0.0
        %492 = vmatpush1.msra.mxu0 0.0
        %493 = vmatprep.subr.mxu0 0.0
        %494 = vmatpush1.msra.mxu0 0.0
        %495 = vmatprep.subr.mxu0 0.0
        %496 = vmatpush1.msra.mxu0 0.0
        %497 = vmatprep.subr.mxu0 0.0
        %498 = vmatpush1.msra.mxu0 0.0
        %499 = vmatprep.subr.mxu0 0.0
        %500 = vmatpush1.msra.mxu0 0.0
        %501 = vmatprep.subr.mxu0 0.0
        %502 = vmatpush1.msra.mxu0 0.0
        %503 = vmatprep.subr.mxu0 0.0
        %504 = vmatpush1.msra.mxu0 0.0
        %505 = vmatprep.subr.mxu0 0.0
        %506 = vmatpush1.msra.mxu0 0.0
        %507 = vmatprep.subr.mxu0 0.0
        %508 = vmatpush1.msra.mxu0 0.0
        %509 = vmatprep.subr.mxu0 0.0
        %510 = vmatpush1.msra.mxu0 0.0
        %511 = vmatprep.mubr.f32.mxu0 0.0
        %512 = vmatmul.mubr.f32.gmra.mrb[0].mxu0 %v424
        %v513 = vpop.f32.mrb[0].mxu0
        %v514 = vadd.f32 %v420, %v513
        %v515 = vpop.f32.mrb[0].mxu0
        %516 = vmatprep.mubr.f32.mxu0 0.0
        %517 = vmatmul.mubr.f32.gmra.mrb[0].mxu0 %v427
        %v518 = vpop.f32.mrb[0].mxu0
        %v519 = vadd.f32 %v420, %v518
        %v520 = vpop.f32.mrb[0].mxu0
        %521 = vmatprep.mubr.f32.mxu0 0.0
        %522 = vmatmul.mubr.f32.gmra.mrb[0].mxu0 %v430
        %v523 = vpop.f32.mrb[0].mxu0
        %v524 = vadd.f32 %v420, %v523
        %v525 = vpop.f32.mrb[0].mxu0
        %526 = vmatprep.mubr.f32.mxu0 0.0
        %527 = vmatmul.mubr.f32.gmra.mrb[0].mxu0 %v433
        %v528 = vpop.f32.mrb[0].mxu0
        %v529 = vadd.f32 %v420, %v528
        %v530 = vpop.f32.mrb[0].mxu0
        %531 = vmatprep.mubr.f32.mxu0 0.0
        %532 = vmatmul.mubr.f32.gmra.mrb[0].mxu0 %v436
        %v533 = vpop.f32.mrb[0].mxu0
        %v534 = vadd.f32 %v420, %v533
        %v535 = vpop.f32.mrb[0].mxu0
        %536 = vmatprep.mubr.f32.mxu0 0.0
        %537 = vmatmul.mubr.f32.gmra.mrb[0].mxu0 %v439
        %v538 = vpop.f32.mrb[0].mxu0
        %v539 = vadd.f32 %v420, %v538
        %v540 = vpop.f32.mrb[0].mxu0
        %541 = vmatprep.mubr.f32.mxu0 0.0
        %542 = vmatmul.mubr.f32.gmra.mrb[0].mxu0 %v442
        %v543 = vpop.f32.mrb[0].mxu0
        %v544 = vadd.f32 %v420, %v543
        %v545 = vpop.f32.mrb[0].mxu0
        %546 = vmatprep.mubr.f32.mxu0 0.0
        %547 = vmatmul.mubr.f32.gmra.mrb[0].mxu0 %v445
        %v548 = vpop.f32.mrb[0].mxu0
        %v549 = vadd.f32 %v420, %v548
        %v550 = vpop.f32.mrb[0].mxu0
        %551 = vdwg.mxu0
        %v552 = vld [vmem:[%s5] sm:$0xff]
        %v553 = vld [vmem:[%s5 + $0x8] sm:$0xff]
        %v554 = vld [vmem:[%s5 + $0x10] sm:$0xff]
        %v555 = vld [vmem:[%s5 + $0x18] sm:$0xff]
        %v556 = vld [vmem:[%s5 + $0x20] sm:$0xff]
        %v557 = vld [vmem:[%s5 + $0x28] sm:$0xff]
        %v558 = vld [vmem:[%s5 + $0x30] sm:$0xff]
        %v559 = vld [vmem:[%s5 + $0x38] sm:$0xff]
        %v560 = vld [vmem:[%s6] sm:$0xff]
        %v561 = vld [vmem:[%s6 + $0x8] sm:$0xff]
        %v562 = vld [vmem:[%s6 + $0x10] sm:$0xff]
        %v563 = vld [vmem:[%s6 + $0x18] sm:$0xff]
        %v564 = vld [vmem:[%s7] sm:$0xff]
        %v565 = vld [vmem:[%s7 + $0x8] sm:$0xff]
        %v566 = vld [vmem:[%s7 + $0x10] sm:$0xff]
        %v567 = vld [vmem:[%s7 + $0x18] sm:$0xff]
        %v568 = vld [vmem:[%s4] sm:$0x1]
        %v570 = vlaneseq
        %v571 = vshrl.u32 %v570, 7
        %v572 = vsub.s32 0, %v571
        %v573 = vrot.slane %v568, %v572
        %v575 = vld [vmem:[%s8] sm:$0x1]
        %v577 = vlaneseq
        %v578 = vshrl.u32 %v577, 7
        %v579 = vsub.s32 0, %v578
        %v580 = vrot.slane %v575, %v579
        %v583 = vsel %vm422, 0.0, 0
        %585 = vmatprep.subr.mxu0 %v553
        %586 = vmatpush1.msra.mxu0 %v552
        %587 = vmatprep.subr.mxu0 %v555
        %588 = vmatpush1.msra.mxu0 %v554
        %589 = vmatprep.subr.mxu0 %v557
        %590 = vmatpush1.msra.mxu0 %v556
        %591 = vmatprep.subr.mxu0 %v559
        %592 = vmatpush1.msra.mxu0 %v558
        %593 = vmatprep.subr.mxu0 0.0
        %594 = vmatpush1.msra.mxu0 0.0
        %595 = vmatprep.subr.mxu0 0.0
        %596 = vmatpush1.msra.mxu0 0.0
        %597 = vmatprep.subr.mxu0 0.0
        %598 = vmatpush1.msra.mxu0 0.0
        %599 = vmatprep.subr.mxu0 0.0
        %600 = vmatpush1.msra.mxu0 0.0
        %601 = vmatprep.subr.mxu0 0.0
        %602 = vmatpush1.msra.mxu0 0.0
        %603 = vmatprep.subr.mxu0 0.0
        %604 = vmatpush1.msra.mxu0 0.0
        %605 = vmatprep.subr.mxu0 0.0
        %606 = vmatpush1.msra.mxu0 0.0
        %607 = vmatprep.subr.mxu0 0.0
        %608 = vmatpush1.msra.mxu0 0.0
        %609 = vmatprep.subr.mxu0 0.0
        %610 = vmatpush1.msra.mxu0 0.0
        %611 = vmatprep.subr.mxu0 0.0
        %612 = vmatpush1.msra.mxu0 0.0
        %613 = vmatprep.subr.mxu0 0.0
        %614 = vmatpush1.msra.mxu0 0.0
        %615 = vmatprep.subr.mxu0 0.0
        %616 = vmatpush1.msra.mxu0 0.0
        %617 = vmatprep.subr.mxu0 0.0
        %618 = vmatpush1.msra.mxu0 0.0
        %619 = vmatprep.subr.mxu0 0.0
        %620 = vmatpush1.msra.mxu0 0.0
        %621 = vmatprep.subr.mxu0 0.0
        %622 = vmatpush1.msra.mxu0 0.0
        %623 = vmatprep.subr.mxu0 0.0
        %624 = vmatpush1.msra.mxu0 0.0
        %625 = vmatprep.subr.mxu0 0.0
        %626 = vmatpush1.msra.mxu0 0.0
        %627 = vmatprep.subr.mxu0 0.0
        %628 = vmatpush1.msra.mxu0 0.0
        %629 = vmatprep.subr.mxu0 0.0
        %630 = vmatpush1.msra.mxu0 0.0
        %631 = vmatprep.subr.mxu0 0.0
        %632 = vmatpush1.msra.mxu0 0.0
        %633 = vmatprep.subr.mxu0 0.0
        %634 = vmatpush1.msra.mxu0 0.0
        %635 = vmatprep.subr.mxu0 0.0
        %636 = vmatpush1.msra.mxu0 0.0
        %637 = vmatprep.subr.mxu0 0.0
        %638 = vmatpush1.msra.mxu0 0.0
        %639 = vmatprep.subr.mxu0 0.0
        %640 = vmatpush1.msra.mxu0 0.0
        %641 = vmatprep.subr.mxu0 0.0
        %642 = vmatpush1.msra.mxu0 0.0
        %643 = vmatprep.subr.mxu0 0.0
        %644 = vmatpush1.msra.mxu0 0.0
        %645 = vmatprep.subr.mxu0 0.0
        %646 = vmatpush1.msra.mxu0 0.0
        %647 = vmatprep.subr.mxu0 0.0
        %648 = vmatpush1.msra.mxu0 0.0
        %649 = vmatprep.mubr.f32.mxu0 0.0
        %650 = vmatmul.mubr.f32.gmra.mrb[0].mxu0 %v583
        %v651 = vpop.f32.mrb[0].mxu0
        %v652 = vadd.f32 0.0, %v651
        %v653 = vpop.f32.mrb[0].mxu0
        %v654 = vadd.f32 0.0, %v653
        %655 = vdwg.mxu0
        %v657 = vcombine.high %v652, %v652
        %v659 = vunpack.c.l.s4 1966171168
        %v660 = vunpack.c.0.s8 %v659
        %v661 = vlaneseq
        %v662 = vshrl.u32 %v661, 7
        %v663 = vsub.s32 %v660, %v662
        %v664 = vrot.slane %v652, %v663
        %v666 = vunpack.c.l.s4 1966171168
        %v667 = vunpack.c.0.s8 %v666
        %v668 = vlaneseq
        %v669 = vshrl.u32 %v668, 7
        %v670 = vsub.s32 %v667, %v669
        %v671 = vrot.slane %v657, %v670
        %v672 = vcombine.high %v664, %v664
        %v673 = vcombine.high %v671, %v671
        %v675 = vunpack.c.l.s4 1966171168
        %v676 = vunpack.c.0.s8 %v675
        %v677 = vlaneseq
        %v678 = vshrl.u32 %v677, 7
        %v679 = vsub.s32 %v676, %v678
        %v680 = vrot.slane %v664, %v679
        %v682 = vunpack.c.l.s4 1966171168
        %v683 = vunpack.c.0.s8 %v682
        %v684 = vlaneseq
        %v685 = vshrl.u32 %v684, 7
        %v686 = vsub.s32 %v683, %v685
        %v687 = vrot.slane %v671, %v686
        %v689 = vunpack.c.l.s4 1966171168
        %v690 = vunpack.c.0.s8 %v689
        %v691 = vlaneseq
        %v692 = vshrl.u32 %v691, 7
        %v693 = vsub.s32 %v690, %v692
        %v694 = vrot.slane %v672, %v693
        %v696 = vunpack.c.l.s4 1966171168
        %v697 = vunpack.c.0.s8 %v696
        %v698 = vlaneseq
        %v699 = vshrl.u32 %v698, 7
        %v700 = vsub.s32 %v697, %v699
        %v701 = vrot.slane %v673, %v700
        %v702 = vcombine.high %v680, %v680
        %v703 = vcombine.high %v687, %v687
        %v704 = vcombine.high %v694, %v694
        %v705 = vcombine.high %v701, %v701
        %v706 = vlaneseq
        %v707 = vshrl.u32 %v706, 7
        %v708 = vsub.s32 0, %v707
        %v709 = vrot.slane %v680, %v708
        %v710 = vlaneseq
        %v711 = vshrl.u32 %v710, 7
        %v712 = vsub.s32 0, %v711
        %v713 = vrot.slane %v694, %v712
        %v714 = vlaneseq
        %v715 = vshrl.u32 %v714, 7
        %v716 = vsub.s32 0, %v715
        %v717 = vrot.slane %v702, %v716
        %v718 = vlaneseq
        %v719 = vshrl.u32 %v718, 7
        %v720 = vsub.s32 0, %v719
        %v721 = vrot.slane %v704, %v720
        %v722 = vlaneseq
        %v723 = vshrl.u32 %v722, 7
        %v724 = vsub.s32 0, %v723
        %v725 = vrot.slane %v687, %v724
        %v726 = vlaneseq
        %v727 = vshrl.u32 %v726, 7
        %v728 = vsub.s32 0, %v727
        %v729 = vrot.slane %v701, %v728
        %v730 = vlaneseq
        %v731 = vshrl.u32 %v730, 7
        %v732 = vsub.s32 0, %v731
        %v733 = vrot.slane %v703, %v732
        %v734 = vlaneseq
        %v735 = vshrl.u32 %v734, 7
        %v736 = vsub.s32 0, %v735
        %v737 = vrot.slane %v705, %v736
        %v746 = vadd.f32 %v514, %v709
        %v747 = vadd.f32 %v519, %v713
        %v748 = vadd.f32 %v524, %v717
        %v749 = vadd.f32 %v529, %v721
        %v750 = vadd.f32 %v534, %v725
        %v751 = vadd.f32 %v539, %v729
        %v752 = vadd.f32 %v544, %v733
        %v753 = vadd.f32 %v549, %v737
        %v754 = vtanh.pop %v746
        %v755 = vtanh.pop %v747
        %v756 = vtanh.pop %v748
        %v757 = vtanh.pop %v749
        %v758 = vtanh.pop %v750
        %v759 = vtanh.pop %v751
        %v760 = vtanh.pop %v752
        %v761 = vtanh.pop %v753
        %v762 = vmul.f32 %v754, %v573
        %v763 = vmul.f32 %v755, %v573
        %v764 = vmul.f32 %v756, %v573
        %v765 = vmul.f32 %v757, %v573
        %v766 = vmul.f32 %v758, %v573
        %v767 = vmul.f32 %v759, %v573
        %v768 = vmul.f32 %v760, %v573
        %v769 = vmul.f32 %v761, %v573
        %v770 = vsel %vm422, %v762, 0.0
        %771 = vadd.xlane.f32.xlu0 %v770
        %v772 = vpop.xlane.xlu0 %771
        %v773 = vsel %vm422, %v763, 0.0
        %774 = vadd.xlane.f32.xlu0 %v773
        %v775 = vpop.xlane.xlu0 %774
        %v776 = vsel %vm422, %v764, 0.0
        %777 = vadd.xlane.f32.xlu0 %v776
        %v778 = vpop.xlane.xlu0 %777
        %v779 = vsel %vm422, %v765, 0.0
        %780 = vadd.xlane.f32.xlu0 %v779
        %v781 = vpop.xlane.xlu0 %780
        %v782 = vsel %vm422, %v766, 0.0
        %783 = vadd.xlane.f32.xlu0 %v782
        %v784 = vpop.xlane.xlu0 %783
        %v785 = vsel %vm422, %v767, 0.0
        %786 = vadd.xlane.f32.xlu0 %v785
        %v787 = vpop.xlane.xlu0 %786
        %v788 = vsel %vm422, %v768, 0.0
        %789 = vadd.xlane.f32.xlu0 %v788
        %v790 = vpop.xlane.xlu0 %789
        %v791 = vsel %vm422, %v769, 0.0
        %792 = vadd.xlane.f32.xlu0 %v791
        %v793 = vpop.xlane.xlu0 %792
        %v802 = vlaneseq
        %v803 = vand.u32 %v802, 127
        %v804 = vlaneseq
        %v805 = vshrl.u32 %v804, 7
        %v806 = vsub.s32 %v803, %v805
        %v807 = vrot.slane %v772, %v806
        %v808 = vlaneseq
        %v809 = vshrl.u32 %v808, 7
        %v810 = vsub.s32 %v803, %v809
        %v811 = vrot.slane %v775, %v810
        %v812 = vlaneseq
        %v813 = vshrl.u32 %v812, 7
        %v814 = vsub.s32 %v803, %v813
        %v815 = vrot.slane %v778, %v814
        %v816 = vlaneseq
        %v817 = vshrl.u32 %v816, 7
        %v818 = vsub.s32 %v803, %v817
        %v819 = vrot.slane %v781, %v818
        %v820 = vlaneseq
        %v821 = vshrl.u32 %v820, 7
        %v822 = vsub.s32 %v803, %v821
        %v823 = vrot.slane %v784, %v822
        %v824 = vlaneseq
        %v825 = vshrl.u32 %v824, 7
        %v826 = vsub.s32 %v803, %v825
        %v827 = vrot.slane %v787, %v826
        %v828 = vlaneseq
        %v829 = vshrl.u32 %v828, 7
        %v830 = vsub.s32 %v803, %v829
        %v831 = vrot.slane %v790, %v830
        %v832 = vlaneseq
        %v833 = vshrl.u32 %v832, 7
        %v834 = vsub.s32 %v803, %v833
        %v835 = vrot.slane %v793, %v834
        %vm836 = vcmask 1041409
        %v837 = vsel %vm836, %v811, %v807
        %vm838 = vcmask 1042434
        %v839 = vsel %vm838, %v815, %v837
        %vm840 = vcmask 1043459
        %v841 = vsel %vm840, %v819, %v839
        %vm842 = vcmask 1044484
        %v843 = vsel %vm842, %v823, %v841
        %vm844 = vcmask 1045509
        %v845 = vsel %vm844, %v827, %v843
        %vm846 = vcmask 1046534
        %v847 = vsel %vm846, %v831, %v845
        %vm848 = vcmask 1047559
        %v849 = vsel %vm848, %v835, %v847
        %vm851 = vcmask 64512
        %v852 = vsel %vm851, %v849, -inf
        %853 = vmax.xlane.f32.xlu0 %v852
        %v854 = vpop.xlane.xlu0 %853
        %v856 = vlaneseq
        %v857 = vshrl.u32 %v856, 7
        %v858 = vsub.s32 0, %v857
        %v859 = vrot.slane %v854, %v858
        %v860 = vlaneseq
        %v861 = vshrl.u32 %v860, 7
        %v862 = vsub.s32 1, %v861
        %v863 = vrot.slane %v854, %v862
        %v864 = vlaneseq
        %v865 = vshrl.u32 %v864, 7
        %v866 = vsub.s32 2, %v865
        %v867 = vrot.slane %v854, %v866
        %v868 = vlaneseq
        %v869 = vshrl.u32 %v868, 7
        %v870 = vsub.s32 3, %v869
        %v871 = vrot.slane %v854, %v870
        %v872 = vlaneseq
        %v873 = vshrl.u32 %v872, 7
        %v874 = vsub.s32 4, %v873
        %v875 = vrot.slane %v854, %v874
        %v876 = vlaneseq
        %v877 = vshrl.u32 %v876, 7
        %v878 = vsub.s32 5, %v877
        %v879 = vrot.slane %v854, %v878
        %v880 = vlaneseq
        %v881 = vshrl.u32 %v880, 7
        %v882 = vsub.s32 6, %v881
        %v883 = vrot.slane %v854, %v882
        %v884 = vlaneseq
        %v885 = vshrl.u32 %v884, 7
        %v886 = vsub.s32 7, %v885
        %v887 = vrot.slane %v854, %v886
        %v896 = vsub.f32 %v772, %v859
        %v897 = vsub.f32 %v775, %v863
        %v898 = vsub.f32 %v778, %v867
        %v899 = vsub.f32 %v781, %v871
        %v900 = vsub.f32 %v784, %v875
        %v901 = vsub.f32 %v787, %v879
        %v902 = vsub.f32 %v790, %v883
        %v903 = vsub.f32 %v793, %v887
        %v904 = vmul.f32 %v896, 1.442695
        %v905 = vpow.pop %v904
        %v906 = vmul.f32 %v897, 1.442695
        %v907 = vpow.pop %v906
        %v908 = vmul.f32 %v898, 1.442695
        %v909 = vpow.pop %v908
        %v910 = vmul.f32 %v899, 1.442695
        %v911 = vpow.pop %v910
        %v912 = vmul.f32 %v900, 1.442695
        %v913 = vpow.pop %v912
        %v914 = vmul.f32 %v901, 1.442695
        %v915 = vpow.pop %v914
        %v916 = vmul.f32 %v902, 1.442695
        %v917 = vpow.pop %v916
        %v918 = vmul.f32 %v903, 1.442695
        %v919 = vpow.pop %v918
        %928 = vset.pattern.permute.xlu0 0
        %929 = vperm.xlu0 %928, %v905
        %v930 = vpop.permute.xlu0 %929
        %931 = vset.pattern.permute.xlu0 0
        %932 = vperm.xlu0 %931, %v907
        %v933 = vpop.permute.xlu0 %932
        %934 = vset.pattern.permute.xlu0 0
        %935 = vperm.xlu0 %934, %v909
        %v936 = vpop.permute.xlu0 %935
        %937 = vset.pattern.permute.xlu0 0
        %938 = vperm.xlu0 %937, %v911
        %v939 = vpop.permute.xlu0 %938
        %940 = vset.pattern.permute.xlu0 0
        %941 = vperm.xlu0 %940, %v913
        %v942 = vpop.permute.xlu0 %941
        %943 = vset.pattern.permute.xlu0 0
        %944 = vperm.xlu0 %943, %v915
        %v945 = vpop.permute.xlu0 %944
        %946 = vset.pattern.permute.xlu0 0
        %947 = vperm.xlu0 %946, %v917
        %v948 = vpop.permute.xlu0 %947
        %949 = vset.pattern.permute.xlu0 0
        %950 = vperm.xlu0 %949, %v919
        %v951 = vpop.permute.xlu0 %950
        %v952 = vlaneseq
        %v953 = vshrl.u32 %v952, 7
        %v954 = vsub.s32 %v803, %v953
        %v955 = vrot.slane %v930, %v954
        %v956 = vlaneseq
        %v957 = vshrl.u32 %v956, 7
        %v958 = vsub.s32 %v803, %v957
        %v959 = vrot.slane %v933, %v958
        %v960 = vlaneseq
        %v961 = vshrl.u32 %v960, 7
        %v962 = vsub.s32 %v803, %v961
        %v963 = vrot.slane %v936, %v962
        %v964 = vlaneseq
        %v965 = vshrl.u32 %v964, 7
        %v966 = vsub.s32 %v803, %v965
        %v967 = vrot.slane %v939, %v966
        %v968 = vlaneseq
        %v969 = vshrl.u32 %v968, 7
        %v970 = vsub.s32 %v803, %v969
        %v971 = vrot.slane %v942, %v970
        %v972 = vlaneseq
        %v973 = vshrl.u32 %v972, 7
        %v974 = vsub.s32 %v803, %v973
        %v975 = vrot.slane %v945, %v974
        %v976 = vlaneseq
        %v977 = vshrl.u32 %v976, 7
        %v978 = vsub.s32 %v803, %v977
        %v979 = vrot.slane %v948, %v978
        %v980 = vlaneseq
        %v981 = vshrl.u32 %v980, 7
        %v982 = vsub.s32 %v803, %v981
        %v983 = vrot.slane %v951, %v982
        %v984 = vsel %vm836, %v959, %v955
        %v985 = vsel %vm838, %v963, %v984
        %v986 = vsel %vm840, %v967, %v985
        %v987 = vsel %vm842, %v971, %v986
        %v988 = vsel %vm844, %v975, %v987
        %v989 = vsel %vm846, %v979, %v988
        %v990 = vsel %vm848, %v983, %v989
        %v992 = vsel %vm851, %v990, 0.0
        %993 = vadd.xlane.f32.xlu0 %v992
        %v994 = vpop.xlane.xlu0 %993
        %v995 = vrcp.pop %v994
        %v997 = vlaneseq
        %v998 = vshrl.u32 %v997, 7
        %v999 = vsub.s32 0, %v998
        %v1000 = vrot.slane %v995, %v999
        %v1001 = vlaneseq
        %v1002 = vshrl.u32 %v1001, 7
        %v1003 = vsub.s32 1, %v1002
        %v1004 = vrot.slane %v995, %v1003
        %v1005 = vlaneseq
        %v1006 = vshrl.u32 %v1005, 7
        %v1007 = vsub.s32 2, %v1006
        %v1008 = vrot.slane %v995, %v1007
        %v1009 = vlaneseq
        %v1010 = vshrl.u32 %v1009, 7
        %v1011 = vsub.s32 3, %v1010
        %v1012 = vrot.slane %v995, %v1011
        %v1013 = vlaneseq
        %v1014 = vshrl.u32 %v1013, 7
        %v1015 = vsub.s32 4, %v1014
        %v1016 = vrot.slane %v995, %v1015
        %v1017 = vlaneseq
        %v1018 = vshrl.u32 %v1017, 7
        %v1019 = vsub.s32 5, %v1018
        %v1020 = vrot.slane %v995, %v1019
        %v1021 = vlaneseq
        %v1022 = vshrl.u32 %v1021, 7
        %v1023 = vsub.s32 6, %v1022
        %v1024 = vrot.slane %v995, %v1023
        %v1025 = vlaneseq
        %v1026 = vshrl.u32 %v1025, 7
        %v1027 = vsub.s32 7, %v1026
        %v1028 = vrot.slane %v995, %v1027
        %v1037 = vmul.f32 %v905, %v1000
        %v1038 = vmul.f32 %v907, %v1004
        %v1039 = vmul.f32 %v909, %v1008
        %v1040 = vmul.f32 %v911, %v1012
        %v1041 = vmul.f32 %v913, %v1016
        %v1042 = vmul.f32 %v915, %v1020
        %v1043 = vmul.f32 %v917, %v1024
        %v1044 = vmul.f32 %v919, %v1028
        %1046 = vset.pattern.permute.xlu0 0
        %1047 = vperm.xlu0 %1046, %v1037
        %v1048 = vpop.permute.xlu0 %1047
        %1051 = vset.pattern.permute.xlu0 0
        %1052 = vperm.xlu0 %1051, %v1038
        %v1053 = vpop.permute.xlu0 %1052
        %1056 = vset.pattern.permute.xlu0 0
        %1057 = vperm.xlu0 %1056, %v1039
        %v1058 = vpop.permute.xlu0 %1057
        %1061 = vset.pattern.permute.xlu0 0
        %1062 = vperm.xlu0 %1061, %v1040
        %v1063 = vpop.permute.xlu0 %1062
        %1066 = vset.pattern.permute.xlu0 0
        %1067 = vperm.xlu0 %1066, %v1041
        %v1068 = vpop.permute.xlu0 %1067
        %1071 = vset.pattern.permute.xlu0 0
        %1072 = vperm.xlu0 %1071, %v1042
        %v1073 = vpop.permute.xlu0 %1072
        %1076 = vset.pattern.permute.xlu0 0
        %1077 = vperm.xlu0 %1076, %v1043
        %v1078 = vpop.permute.xlu0 %1077
        %1081 = vset.pattern.permute.xlu0 0
        %1082 = vperm.xlu0 %1081, %v1044
        %v1083 = vpop.permute.xlu0 %1082
        %v1085 = vmul.f32 %v1048, %v403
        %v1086 = vmul.f32 %v1053, %v404
        %v1087 = vmul.f32 %v1058, %v405
        %v1088 = vmul.f32 %v1063, %v406
        %v1089 = vmul.f32 %v1068, %v407
        %v1090 = vmul.f32 %v1073, %v408
        %v1091 = vmul.f32 %v1078, %v409
        %v1092 = vmul.f32 %v1083, %v410
        %v1093 = vsel %vm422, %v1085, 0.0
        %v1094 = vrot.slane %v1093, 4
        %v1095 = vadd.f32 %v1093, %v1094
        %v1096 = vrot.slane %v1095, 2
        %v1097 = vadd.f32 %v1095, %v1096
        %v1098 = vrot.slane %v1097, 1
        %v1099 = vadd.f32 %v1097, %v1098
        %v1100 = vsel %vm422, %v1086, 0.0
        %v1101 = vrot.slane %v1100, 4
        %v1102 = vadd.f32 %v1100, %v1101
        %v1103 = vrot.slane %v1102, 2
        %v1104 = vadd.f32 %v1102, %v1103
        %v1105 = vrot.slane %v1104, 1
        %v1106 = vadd.f32 %v1104, %v1105
        %v1107 = vsel %vm422, %v1087, 0.0
        %v1108 = vrot.slane %v1107, 4
        %v1109 = vadd.f32 %v1107, %v1108
        %v1110 = vrot.slane %v1109, 2
        %v1111 = vadd.f32 %v1109, %v1110
        %v1112 = vrot.slane %v1111, 1
        %v1113 = vadd.f32 %v1111, %v1112
        %v1114 = vsel %vm422, %v1088, 0.0
        %v1115 = vrot.slane %v1114, 4
        %v1116 = vadd.f32 %v1114, %v1115
        %v1117 = vrot.slane %v1116, 2
        %v1118 = vadd.f32 %v1116, %v1117
        %v1119 = vrot.slane %v1118, 1
        %v1120 = vadd.f32 %v1118, %v1119
        %v1121 = vsel %vm422, %v1089, 0.0
        %v1122 = vrot.slane %v1121, 4
        %v1123 = vadd.f32 %v1121, %v1122
        %v1124 = vrot.slane %v1123, 2
        %v1125 = vadd.f32 %v1123, %v1124
        %v1126 = vrot.slane %v1125, 1
        %v1127 = vadd.f32 %v1125, %v1126
        %v1128 = vsel %vm422, %v1090, 0.0
        %v1129 = vrot.slane %v1128, 4
        %v1130 = vadd.f32 %v1128, %v1129
        %v1131 = vrot.slane %v1130, 2
        %v1132 = vadd.f32 %v1130, %v1131
        %v1133 = vrot.slane %v1132, 1
        %v1134 = vadd.f32 %v1132, %v1133
        %v1135 = vsel %vm422, %v1091, 0.0
        %v1136 = vrot.slane %v1135, 4
        %v1137 = vadd.f32 %v1135, %v1136
        %v1138 = vrot.slane %v1137, 2
        %v1139 = vadd.f32 %v1137, %v1138
        %v1140 = vrot.slane %v1139, 1
        %v1141 = vadd.f32 %v1139, %v1140
        %v1142 = vsel %vm422, %v1092, 0.0
        %v1143 = vrot.slane %v1142, 4
        %v1144 = vadd.f32 %v1142, %v1143
        %v1145 = vrot.slane %v1144, 2
        %v1146 = vadd.f32 %v1144, %v1145
        %v1147 = vrot.slane %v1146, 1
        %v1148 = vadd.f32 %v1146, %v1147
        %v1157 = vsel %vm836, %v1106, %v1099
        %v1158 = vsel %vm838, %v1113, %v1157
        %v1159 = vsel %vm840, %v1120, %v1158
        %v1160 = vsel %vm842, %v1127, %v1159
        %v1161 = vsel %vm844, %v1134, %v1160
        %v1162 = vsel %vm846, %v1141, %v1161
        %v1163 = vsel %vm848, %v1148, %v1162
        %1165 = vrot.lane.b32.xlu0 %v652, 96
        %v1166 = vpop.permute.xlu0 %1165
        %1167 = vrot.lane.b32.xlu0 %v654, 96
        %v1168 = vpop.permute.xlu0 %1167
        %vm1169 = vcmask 785408
        %v1170 = vsel %vm1169, %v1166, %v1168
        %v1172 = vsel %vm422, %v1163, 0
        %1174 = vmatprep.subr.mxu0 0.0
        %1175 = vmatpush1.msra.mxu0 %v560
        %1176 = vmatprep.subr.mxu0 0.0
        %1177 = vmatpush1.msra.mxu0 %v561
        %1178 = vmatprep.subr.mxu0 0.0
        %1179 = vmatpush1.msra.mxu0 %v562
        %1180 = vmatprep.subr.mxu0 0.0
        %1181 = vmatpush1.msra.mxu0 %v563
        %1182 = vmatprep.subr.mxu0 0.0
        %1183 = vmatpush1.msra.mxu0 0.0
        %1184 = vmatprep.subr.mxu0 0.0
        %1185 = vmatpush1.msra.mxu0 0.0
        %1186 = vmatprep.subr.mxu0 0.0
        %1187 = vmatpush1.msra.mxu0 0.0
        %1188 = vmatprep.subr.mxu0 0.0
        %1189 = vmatpush1.msra.mxu0 0.0
        %1190 = vmatprep.subr.mxu0 0.0
        %1191 = vmatpush1.msra.mxu0 0.0
        %1192 = vmatprep.subr.mxu0 0.0
        %1193 = vmatpush1.msra.mxu0 0.0
        %1194 = vmatprep.subr.mxu0 0.0
        %1195 = vmatpush1.msra.mxu0 0.0
        %1196 = vmatprep.subr.mxu0 0.0
        %1197 = vmatpush1.msra.mxu0 0.0
        %1198 = vmatprep.subr.mxu0 0.0
        %1199 = vmatpush1.msra.mxu0 0.0
        %1200 = vmatprep.subr.mxu0 0.0
        %1201 = vmatpush1.msra.mxu0 0.0
        %1202 = vmatprep.subr.mxu0 0.0
        %1203 = vmatpush1.msra.mxu0 0.0
        %1204 = vmatprep.subr.mxu0 0.0
        %1205 = vmatpush1.msra.mxu0 0.0
        %1206 = vmatprep.subr.mxu0 0.0
        %1207 = vmatpush1.msra.mxu0 0.0
        %1208 = vmatprep.subr.mxu0 0.0
        %1209 = vmatpush1.msra.mxu0 0.0
        %1210 = vmatprep.subr.mxu0 0.0
        %1211 = vmatpush1.msra.mxu0 0.0
        %1212 = vmatprep.subr.mxu0 0.0
        %1213 = vmatpush1.msra.mxu0 0.0
        %1214 = vmatprep.subr.mxu0 0.0
        %1215 = vmatpush1.msra.mxu0 0.0
        %1216 = vmatprep.subr.mxu0 0.0
        %1217 = vmatpush1.msra.mxu0 0.0
        %1218 = vmatprep.subr.mxu0 0.0
        %1219 = vmatpush1.msra.mxu0 0.0
        %1220 = vmatprep.subr.mxu0 0.0
        %1221 = vmatpush1.msra.mxu0 0.0
        %1222 = vmatprep.subr.mxu0 0.0
        %1223 = vmatpush1.msra.mxu0 0.0
        %1224 = vmatprep.subr.mxu0 0.0
        %1225 = vmatpush1.msra.mxu0 0.0
        %1226 = vmatprep.subr.mxu0 0.0
        %1227 = vmatpush1.msra.mxu0 0.0
        %1228 = vmatprep.subr.mxu0 0.0
        %1229 = vmatpush1.msra.mxu0 0.0
        %1230 = vmatprep.subr.mxu0 0.0
        %1231 = vmatpush1.msra.mxu0 0.0
        %1232 = vmatprep.subr.mxu0 0.0
        %1233 = vmatpush1.msra.mxu0 0.0
        %1234 = vmatprep.subr.mxu0 0.0
        %1235 = vmatpush1.msra.mxu0 0.0
        %1236 = vmatprep.subr.mxu0 0.0
        %1237 = vmatpush1.msra.mxu0 0.0
        %1238 = vmatprep.mubr.f32.mxu0 0.0
        %1239 = vmatmul.mubr.f32.gmra.mrb[0].mxu0 %v1172
        %v1240 = vpop.f32.mrb[0].mxu0
        %v1241 = vadd.f32 %v1170, %v1240
        %v1242 = vpop.f32.mrb[0].mxu0
        %1243 = vdwg.mxu0
        %v1244 = vld [vmem:[%s360] sm:$0xff]
        %v1245 = vadd.f32 %v1241, %v1244
        %v1246 = vxor.u32 %v1245, 2147483648
        %v1247 = vmul.f32 %v1246, 1.442695
        %v1248 = vpow.pop %v1247
        %v1249 = vadd.f32 %v1248, 1.0
        %v1250 = vrcp.pop %v1249
        %v1251 = vmul.f32 1.0, %v1250
        %v1252 = vtanh.pop %v1245
        %v1253 = vmul.f32 %v1251, 0.0
        %1255 = vrot.lane.b32.xlu0 %v1252, 64
        %v1256 = vpop.permute.xlu0 %1255
        %v1258 = vmul.f32 %v1251, %v1256
        %1260 = vrot.lane.b32.xlu0 %v1258, 32
        %v1261 = vpop.permute.xlu0 %1260
        %v1263 = vadd.f32 %v1253, %v1261
        %v1264 = vtanh.pop %v1263
        %1266 = vrot.lane.b32.xlu0 %v1264, 64
        %v1267 = vpop.permute.xlu0 %1266
        %v1269 = vmul.f32 %v1251, %v1267
        %1271 = vrot.lane.b32.xlu0 %v1269, 32
        %v1272 = vpop.permute.xlu0 %1271
        %v1273 = vsel %vm422, %v1272, 0
        %1275 = vmatprep.subr.mxu0 0.0
        %1276 = vmatpush1.msra.mxu0 %v564
        %1277 = vmatprep.subr.mxu0 0.0
        %1278 = vmatpush1.msra.mxu0 %v565
        %1279 = vmatprep.subr.mxu0 0.0
        %1280 = vmatpush1.msra.mxu0 %v566
        %1281 = vmatprep.subr.mxu0 0.0
        %1282 = vmatpush1.msra.mxu0 %v567
        %1283 = vmatprep.subr.mxu0 0.0
        %1284 = vmatpush1.msra.mxu0 0.0
        %1285 = vmatprep.subr.mxu0 0.0
        %1286 = vmatpush1.msra.mxu0 0.0
        %1287 = vmatprep.subr.mxu0 0.0
        %1288 = vmatpush1.msra.mxu0 0.0
        %1289 = vmatprep.subr.mxu0 0.0
        %1290 = vmatpush1.msra.mxu0 0.0
        %1291 = vmatprep.subr.mxu0 0.0
        %1292 = vmatpush1.msra.mxu0 0.0
        %1293 = vmatprep.subr.mxu0 0.0
        %1294 = vmatpush1.msra.mxu0 0.0
        %1295 = vmatprep.subr.mxu0 0.0
        %1296 = vmatpush1.msra.mxu0 0.0
        %1297 = vmatprep.subr.mxu0 0.0
        %1298 = vmatpush1.msra.mxu0 0.0
        %1299 = vmatprep.subr.mxu0 0.0
        %1300 = vmatpush1.msra.mxu0 0.0
        %1301 = vmatprep.subr.mxu0 0.0
        %1302 = vmatpush1.msra.mxu0 0.0
        %1303 = vmatprep.subr.mxu0 0.0
        %1304 = vmatpush1.msra.mxu0 0.0
        %1305 = vmatprep.subr.mxu0 0.0
        %1306 = vmatpush1.msra.mxu0 0.0
        %1307 = vmatprep.subr.mxu0 0.0
        %1308 = vmatpush1.msra.mxu0 0.0
        %1309 = vmatprep.subr.mxu0 0.0
        %1310 = vmatpush1.msra.mxu0 0.0
        %1311 = vmatprep.subr.mxu0 0.0
        %1312 = vmatpush1.msra.mxu0 0.0
        %1313 = vmatprep.subr.mxu0 0.0
        %1314 = vmatpush1.msra.mxu0 0.0
        %1315 = vmatprep.subr.mxu0 0.0
        %1316 = vmatpush1.msra.mxu0 0.0
        %1317 = vmatprep.subr.mxu0 0.0
        %1318 = vmatpush1.msra.mxu0 0.0
        %1319 = vmatprep.subr.mxu0 0.0
        %1320 = vmatpush1.msra.mxu0 0.0
        %1321 = vmatprep.subr.mxu0 0.0
        %1322 = vmatpush1.msra.mxu0 0.0
        %1323 = vmatprep.subr.mxu0 0.0
        %1324 = vmatpush1.msra.mxu0 0.0
        %1325 = vmatprep.subr.mxu0 0.0
        %1326 = vmatpush1.msra.mxu0 0.0
        %1327 = vmatprep.subr.mxu0 0.0
        %1328 = vmatpush1.msra.mxu0 0.0
        %1329 = vmatprep.subr.mxu0 0.0
        %1330 = vmatpush1.msra.mxu0 0.0
        %1331 = vmatprep.subr.mxu0 0.0
        %1332 = vmatpush1.msra.mxu0 0.0
        %1333 = vmatprep.subr.mxu0 0.0
        %1334 = vmatpush1.msra.mxu0 0.0
        %1335 = vmatprep.subr.mxu0 0.0
        %1336 = vmatpush1.msra.mxu0 0.0
        %1337 = vmatprep.subr.mxu0 0.0
        %1338 = vmatpush1.msra.mxu0 0.0
        %1339 = vmatprep.mubr.f32.mxu0 0.0
        %1340 = vmatmul.mubr.f32.gmra.mrb[0].mxu0 %v1273
        %v1341 = vpop.f32.mrb[0].mxu0
        %v1342 = vadd.f32 %v580, %v1341
        %v1343 = vpop.f32.mrb[0].mxu0
        %1344 = vdwg.mxu0
        %1345 = vst [vmem:[%s396] sm:$0xff] %v1342
        %1346 = vmatprep.subr.mxu0 %v553
        %1347 = vmatpush1.msra.mxu0 %v552
        %1348 = vmatprep.subr.mxu0 %v555
        %1349 = vmatpush1.msra.mxu0 %v554
        %1350 = vmatprep.subr.mxu0 %v557
        %1351 = vmatpush1.msra.mxu0 %v556
        %1352 = vmatprep.subr.mxu0 %v559
        %1353 = vmatpush1.msra.mxu0 %v558
        %1354 = vmatprep.subr.mxu0 0.0
        %1355 = vmatpush1.msra.mxu0 0.0
        %1356 = vmatprep.subr.mxu0 0.0
        %1357 = vmatpush1.msra.mxu0 0.0
        %1358 = vmatprep.subr.mxu0 0.0
        %1359 = vmatpush1.msra.mxu0 0.0
        %1360 = vmatprep.subr.mxu0 0.0
        %1361 = vmatpush1.msra.mxu0 0.0
        %1362 = vmatprep.subr.mxu0 0.0
        %1363 = vmatpush1.msra.mxu0 0.0
        %1364 = vmatprep.subr.mxu0 0.0
        %1365 = vmatpush1.msra.mxu0 0.0
        %1366 = vmatprep.subr.mxu0 0.0
        %1367 = vmatpush1.msra.mxu0 0.0
        %1368 = vmatprep.subr.mxu0 0.0
        %1369 = vmatpush1.msra.mxu0 0.0
        %1370 = vmatprep.subr.mxu0 0.0
        %1371 = vmatpush1.msra.mxu0 0.0
        %1372 = vmatprep.subr.mxu0 0.0
        %1373 = vmatpush1.msra.mxu0 0.0
        %1374 = vmatprep.subr.mxu0 0.0
        %1375 = vmatpush1.msra.mxu0 0.0
        %1376 = vmatprep.subr.mxu0 0.0
        %1377 = vmatpush1.msra.mxu0 0.0
        %1378 = vmatprep.subr.mxu0 0.0
        %1379 = vmatpush1.msra.mxu0 0.0
        %1380 = vmatprep.subr.mxu0 0.0
        %1381 = vmatpush1.msra.mxu0 0.0
        %1382 = vmatprep.subr.mxu0 0.0
        %1383 = vmatpush1.msra.mxu0 0.0
        %1384 = vmatprep.subr.mxu0 0.0
        %1385 = vmatpush1.msra.mxu0 0.0
        %1386 = vmatprep.subr.mxu0 0.0
        %1387 = vmatpush1.msra.mxu0 0.0
        %1388 = vmatprep.subr.mxu0 0.0
        %1389 = vmatpush1.msra.mxu0 0.0
        %1390 = vmatprep.subr.mxu0 0.0
        %1391 = vmatpush1.msra.mxu0 0.0
        %1392 = vmatprep.subr.mxu0 0.0
        %1393 = vmatpush1.msra.mxu0 0.0
        %1394 = vmatprep.subr.mxu0 0.0
        %1395 = vmatpush1.msra.mxu0 0.0
        %1396 = vmatprep.subr.mxu0 0.0
        %1397 = vmatpush1.msra.mxu0 0.0
        %1398 = vmatprep.subr.mxu0 0.0
        %1399 = vmatpush1.msra.mxu0 0.0
        %1400 = vmatprep.subr.mxu0 0.0
        %1401 = vmatpush1.msra.mxu0 0.0
        %1402 = vmatprep.subr.mxu0 0.0
        %1403 = vmatpush1.msra.mxu0 0.0
        %1404 = vmatprep.subr.mxu0 0.0
        %1405 = vmatpush1.msra.mxu0 0.0
        %1406 = vmatprep.subr.mxu0 0.0
        %1407 = vmatpush1.msra.mxu0 0.0
        %1408 = vmatprep.subr.mxu0 0.0
        %1409 = vmatpush1.msra.mxu0 0.0
        %1410 = vmatprep.mubr.f32.mxu0 0.0
        %1411 = vmatmul.mubr.f32.gmra.mrb[0].mxu0 %v1273
        %v1412 = vpop.f32.mrb[0].mxu0
        %v1413 = vadd.f32 0.0, %v1412
        %v1414 = vpop.f32.mrb[0].mxu0
        %v1415 = vadd.f32 0.0, %v1414
        %1416 = vdwg.mxu0
        %v1418 = vcombine.high %v1413, %v1413
        %v1420 = vunpack.c.l.s4 1966171168
        %v1421 = vunpack.c.0.s8 %v1420
        %v1422 = vlaneseq
        %v1423 = vshrl.u32 %v1422, 7
        %v1424 = vsub.s32 %v1421, %v1423
        %v1425 = vrot.slane %v1413, %v1424
        %v1427 = vunpack.c.l.s4 1966171168
        %v1428 = vunpack.c.0.s8 %v1427
        %v1429 = vlaneseq
        %v1430 = vshrl.u32 %v1429, 7
        %v1431 = vsub.s32 %v1428, %v1430
        %v1432 = vrot.slane %v1418, %v1431
        %v1433 = vcombine.high %v1425, %v1425
        %v1434 = vcombine.high %v1432, %v1432
        %v1436 = vunpack.c.l.s4 1966171168
        %v1437 = vunpack.c.0.s8 %v1436
        %v1438 = vlaneseq
        %v1439 = vshrl.u32 %v1438, 7
        %v1440 = vsub.s32 %v1437, %v1439
        %v1441 = vrot.slane %v1425, %v1440
        %v1443 = vunpack.c.l.s4 1966171168
        %v1444 = vunpack.c.0.s8 %v1443
        %v1445 = vlaneseq
        %v1446 = vshrl.u32 %v1445, 7
        %v1447 = vsub.s32 %v1444, %v1446
        %v1448 = vrot.slane %v1432, %v1447
        %v1450 = vunpack.c.l.s4 1966171168
        %v1451 = vunpack.c.0.s8 %v1450
        %v1452 = vlaneseq
        %v1453 = vshrl.u32 %v1452, 7
        %v1454 = vsub.s32 %v1451, %v1453
        %v1455 = vrot.slane %v1433, %v1454
        %v1457 = vunpack.c.l.s4 1966171168
        %v1458 = vunpack.c.0.s8 %v1457
        %v1459 = vlaneseq
        %v1460 = vshrl.u32 %v1459, 7
        %v1461 = vsub.s32 %v1458, %v1460
        %v1462 = vrot.slane %v1434, %v1461
        %v1463 = vcombine.high %v1441, %v1441
        %v1464 = vcombine.high %v1448, %v1448
        %v1465 = vcombine.high %v1455, %v1455
        %v1466 = vcombine.high %v1462, %v1462
        %v1467 = vlaneseq
        %v1468 = vshrl.u32 %v1467, 7
        %v1469 = vsub.s32 0, %v1468
        %v1470 = vrot.slane %v1441, %v1469
        %v1471 = vlaneseq
        %v1472 = vshrl.u32 %v1471, 7
        %v1473 = vsub.s32 0, %v1472
        %v1474 = vrot.slane %v1455, %v1473
        %v1475 = vlaneseq
        %v1476 = vshrl.u32 %v1475, 7
        %v1477 = vsub.s32 0, %v1476
        %v1478 = vrot.slane %v1463, %v1477
        %v1479 = vlaneseq
        %v1480 = vshrl.u32 %v1479, 7
        %v1481 = vsub.s32 0, %v1480
        %v1482 = vrot.slane %v1465, %v1481
        %v1483 = vlaneseq
        %v1484 = vshrl.u32 %v1483, 7
        %v1485 = vsub.s32 0, %v1484
        %v1486 = vrot.slane %v1448, %v1485
        %v1487 = vlaneseq
        %v1488 = vshrl.u32 %v1487, 7
        %v1489 = vsub.s32 0, %v1488
        %v1490 = vrot.slane %v1462, %v1489
        %v1491 = vlaneseq
        %v1492 = vshrl.u32 %v1491, 7
        %v1493 = vsub.s32 0, %v1492
        %v1494 = vrot.slane %v1464, %v1493
        %v1495 = vlaneseq
        %v1496 = vshrl.u32 %v1495, 7
        %v1497 = vsub.s32 0, %v1496
        %v1498 = vrot.slane %v1466, %v1497
        %v1507 = vadd.f32 %v514, %v1470
        %v1508 = vadd.f32 %v519, %v1474
        %v1509 = vadd.f32 %v524, %v1478
        %v1510 = vadd.f32 %v529, %v1482
        %v1511 = vadd.f32 %v534, %v1486
        %v1512 = vadd.f32 %v539, %v1490
        %v1513 = vadd.f32 %v544, %v1494
        %v1514 = vadd.f32 %v549, %v1498
        %v1515 = vtanh.pop %v1507
        %v1516 = vtanh.pop %v1508
        %v1517 = vtanh.pop %v1509
        %v1518 = vtanh.pop %v1510
        %v1519 = vtanh.pop %v1511
        %v1520 = vtanh.pop %v1512
        %v1521 = vtanh.pop %v1513
        %v1522 = vtanh.pop %v1514
        %v1523 = vmul.f32 %v1515, %v573
        %v1524 = vmul.f32 %v1516, %v573
        %v1525 = vmul.f32 %v1517, %v573
        %v1526 = vmul.f32 %v1518, %v573
        %v1527 = vmul.f32 %v1519, %v573
        %v1528 = vmul.f32 %v1520, %v573
        %v1529 = vmul.f32 %v1521, %v573
        %v1530 = vmul.f32 %v1522, %v573
        %v1531 = vsel %vm422, %v1523, 0.0
        %1532 = vadd.xlane.f32.xlu0 %v1531
        %v1533 = vpop.xlane.xlu0 %1532
        %v1534 = vsel %vm422, %v1524, 0.0
        %1535 = vadd.xlane.f32.xlu0 %v1534
        %v1536 = vpop.xlane.xlu0 %1535
        %v1537 = vsel %vm422, %v1525, 0.0
        %1538 = vadd.xlane.f32.xlu0 %v1537
        %v1539 = vpop.xlane.xlu0 %1538
        %v1540 = vsel %vm422, %v1526, 0.0
        %1541 = vadd.xlane.f32.xlu0 %v1540
        %v1542 = vpop.xlane.xlu0 %1541
        %v1543 = vsel %vm422, %v1527, 0.0
        %1544 = vadd.xlane.f32.xlu0 %v1543
        %v1545 = vpop.xlane.xlu0 %1544
        %v1546 = vsel %vm422, %v1528, 0.0
        %1547 = vadd.xlane.f32.xlu0 %v1546
        %v1548 = vpop.xlane.xlu0 %1547
        %v1549 = vsel %vm422, %v1529, 0.0
        %1550 = vadd.xlane.f32.xlu0 %v1549
        %v1551 = vpop.xlane.xlu0 %1550
        %v1552 = vsel %vm422, %v1530, 0.0
        %1553 = vadd.xlane.f32.xlu0 %v1552
        %v1554 = vpop.xlane.xlu0 %1553
        %v1563 = vlaneseq
        %v1564 = vshrl.u32 %v1563, 7
        %v1565 = vsub.s32 %v803, %v1564
        %v1566 = vrot.slane %v1533, %v1565
        %v1567 = vlaneseq
        %v1568 = vshrl.u32 %v1567, 7
        %v1569 = vsub.s32 %v803, %v1568
        %v1570 = vrot.slane %v1536, %v1569
        %v1571 = vlaneseq
        %v1572 = vshrl.u32 %v1571, 7
        %v1573 = vsub.s32 %v803, %v1572
        %v1574 = vrot.slane %v1539, %v1573
        %v1575 = vlaneseq
        %v1576 = vshrl.u32 %v1575, 7
        %v1577 = vsub.s32 %v803, %v1576
        %v1578 = vrot.slane %v1542, %v1577
        %v1579 = vlaneseq
        %v1580 = vshrl.u32 %v1579, 7
        %v1581 = vsub.s32 %v803, %v1580
        %v1582 = vrot.slane %v1545, %v1581
        %v1583 = vlaneseq
        %v1584 = vshrl.u32 %v1583, 7
        %v1585 = vsub.s32 %v803, %v1584
        %v1586 = vrot.slane %v1548, %v1585
        %v1587 = vlaneseq
        %v1588 = vshrl.u32 %v1587, 7
        %v1589 = vsub.s32 %v803, %v1588
        %v1590 = vrot.slane %v1551, %v1589
        %v1591 = vlaneseq
        %v1592 = vshrl.u32 %v1591, 7
        %v1593 = vsub.s32 %v803, %v1592
        %v1594 = vrot.slane %v1554, %v1593
        %v1595 = vsel %vm836, %v1570, %v1566
        %v1596 = vsel %vm838, %v1574, %v1595
        %v1597 = vsel %vm840, %v1578, %v1596
        %v1598 = vsel %vm842, %v1582, %v1597
        %v1599 = vsel %vm844, %v1586, %v1598
        %v1600 = vsel %vm846, %v1590, %v1599
        %v1601 = vsel %vm848, %v1594, %v1600
        %v1603 = vsel %vm851, %v1601, -inf
        %1604 = vmax.xlane.f32.xlu0 %v1603
        %v1605 = vpop.xlane.xlu0 %1604
        %v1607 = vlaneseq
        %v1608 = vshrl.u32 %v1607, 7
        %v1609 = vsub.s32 0, %v1608
        %v1610 = vrot.slane %v1605, %v1609
        %v1611 = vlaneseq
        %v1612 = vshrl.u32 %v1611, 7
        %v1613 = vsub.s32 1, %v1612
        %v1614 = vrot.slane %v1605, %v1613
        %v1615 = vlaneseq
        %v1616 = vshrl.u32 %v1615, 7
        %v1617 = vsub.s32 2, %v1616
        %v1618 = vrot.slane %v1605, %v1617
        %v1619 = vlaneseq
        %v1620 = vshrl.u32 %v1619, 7
        %v1621 = vsub.s32 3, %v1620
        %v1622 = vrot.slane %v1605, %v1621
        %v1623 = vlaneseq
        %v1624 = vshrl.u32 %v1623, 7
        %v1625 = vsub.s32 4, %v1624
        %v1626 = vrot.slane %v1605, %v1625
        %v1627 = vlaneseq
        %v1628 = vshrl.u32 %v1627, 7
        %v1629 = vsub.s32 5, %v1628
        %v1630 = vrot.slane %v1605, %v1629
        %v1631 = vlaneseq
        %v1632 = vshrl.u32 %v1631, 7
        %v1633 = vsub.s32 6, %v1632
        %v1634 = vrot.slane %v1605, %v1633
        %v1635 = vlaneseq
        %v1636 = vshrl.u32 %v1635, 7
        %v1637 = vsub.s32 7, %v1636
        %v1638 = vrot.slane %v1605, %v1637
        %v1647 = vsub.f32 %v1533, %v1610
        %v1648 = vsub.f32 %v1536, %v1614
        %v1649 = vsub.f32 %v1539, %v1618
        %v1650 = vsub.f32 %v1542, %v1622
        %v1651 = vsub.f32 %v1545, %v1626
        %v1652 = vsub.f32 %v1548, %v1630
        %v1653 = vsub.f32 %v1551, %v1634
        %v1654 = vsub.f32 %v1554, %v1638
        %v1655 = vmul.f32 %v1647, 1.442695
        %v1656 = vpow.pop %v1655
        %v1657 = vmul.f32 %v1648, 1.442695
        %v1658 = vpow.pop %v1657
        %v1659 = vmul.f32 %v1649, 1.442695
        %v1660 = vpow.pop %v1659
        %v1661 = vmul.f32 %v1650, 1.442695
        %v1662 = vpow.pop %v1661
        %v1663 = vmul.f32 %v1651, 1.442695
        %v1664 = vpow.pop %v1663
        %v1665 = vmul.f32 %v1652, 1.442695
        %v1666 = vpow.pop %v1665
        %v1667 = vmul.f32 %v1653, 1.442695
        %v1668 = vpow.pop %v1667
        %v1669 = vmul.f32 %v1654, 1.442695
        %v1670 = vpow.pop %v1669
        %1679 = vset.pattern.permute.xlu0 0
        %1680 = vperm.xlu0 %1679, %v1656
        %v1681 = vpop.permute.xlu0 %1680
        %1682 = vset.pattern.permute.xlu0 0
        %1683 = vperm.xlu0 %1682, %v1658
        %v1684 = vpop.permute.xlu0 %1683
        %1685 = vset.pattern.permute.xlu0 0
        %1686 = vperm.xlu0 %1685, %v1660
        %v1687 = vpop.permute.xlu0 %1686
        %1688 = vset.pattern.permute.xlu0 0
        %1689 = vperm.xlu0 %1688, %v1662
        %v1690 = vpop.permute.xlu0 %1689
        %1691 = vset.pattern.permute.xlu0 0
        %1692 = vperm.xlu0 %1691, %v1664
        %v1693 = vpop.permute.xlu0 %1692
        %1694 = vset.pattern.permute.xlu0 0
        %1695 = vperm.xlu0 %1694, %v1666
        %v1696 = vpop.permute.xlu0 %1695
        %1697 = vset.pattern.permute.xlu0 0
        %1698 = vperm.xlu0 %1697, %v1668
        %v1699 = vpop.permute.xlu0 %1698
        %1700 = vset.pattern.permute.xlu0 0
        %1701 = vperm.xlu0 %1700, %v1670
        %v1702 = vpop.permute.xlu0 %1701
        %v1703 = vlaneseq
        %v1704 = vshrl.u32 %v1703, 7
        %v1705 = vsub.s32 %v803, %v1704
        %v1706 = vrot.slane %v1681, %v1705
        %v1707 = vlaneseq
        %v1708 = vshrl.u32 %v1707, 7
        %v1709 = vsub.s32 %v803, %v1708
        %v1710 = vrot.slane %v1684, %v1709
        %v1711 = vlaneseq
        %v1712 = vshrl.u32 %v1711, 7
        %v1713 = vsub.s32 %v803, %v1712
        %v1714 = vrot.slane %v1687, %v1713
        %v1715 = vlaneseq
        %v1716 = vshrl.u32 %v1715, 7
        %v1717 = vsub.s32 %v803, %v1716
        %v1718 = vrot.slane %v1690, %v1717
        %v1719 = vlaneseq
        %v1720 = vshrl.u32 %v1719, 7
        %v1721 = vsub.s32 %v803, %v1720
        %v1722 = vrot.slane %v1693, %v1721
        %v1723 = vlaneseq
        %v1724 = vshrl.u32 %v1723, 7
        %v1725 = vsub.s32 %v803, %v1724
        %v1726 = vrot.slane %v1696, %v1725
        %v1727 = vlaneseq
        %v1728 = vshrl.u32 %v1727, 7
        %v1729 = vsub.s32 %v803, %v1728
        %v1730 = vrot.slane %v1699, %v1729
        %v1731 = vlaneseq
        %v1732 = vshrl.u32 %v1731, 7
        %v1733 = vsub.s32 %v803, %v1732
        %v1734 = vrot.slane %v1702, %v1733
        %v1735 = vsel %vm836, %v1710, %v1706
        %v1736 = vsel %vm838, %v1714, %v1735
        %v1737 = vsel %vm840, %v1718, %v1736
        %v1738 = vsel %vm842, %v1722, %v1737
        %v1739 = vsel %vm844, %v1726, %v1738
        %v1740 = vsel %vm846, %v1730, %v1739
        %v1741 = vsel %vm848, %v1734, %v1740
        %v1743 = vsel %vm851, %v1741, 0.0
        %1744 = vadd.xlane.f32.xlu0 %v1743
        %v1745 = vpop.xlane.xlu0 %1744
        %v1746 = vrcp.pop %v1745
        %v1748 = vlaneseq
        %v1749 = vshrl.u32 %v1748, 7
        %v1750 = vsub.s32 0, %v1749
        %v1751 = vrot.slane %v1746, %v1750
        %v1752 = vlaneseq
        %v1753 = vshrl.u32 %v1752, 7
        %v1754 = vsub.s32 1, %v1753
        %v1755 = vrot.slane %v1746, %v1754
        %v1756 = vlaneseq
        %v1757 = vshrl.u32 %v1756, 7
        %v1758 = vsub.s32 2, %v1757
        %v1759 = vrot.slane %v1746, %v1758
        %v1760 = vlaneseq
        %v1761 = vshrl.u32 %v1760, 7
        %v1762 = vsub.s32 3, %v1761
        %v1763 = vrot.slane %v1746, %v1762
        %v1764 = vlaneseq
        %v1765 = vshrl.u32 %v1764, 7
        %v1766 = vsub.s32 4, %v1765
        %v1767 = vrot.slane %v1746, %v1766
        %v1768 = vlaneseq
        %v1769 = vshrl.u32 %v1768, 7
        %v1770 = vsub.s32 5, %v1769
        %v1771 = vrot.slane %v1746, %v1770
        %v1772 = vlaneseq
        %v1773 = vshrl.u32 %v1772, 7
        %v1774 = vsub.s32 6, %v1773
        %v1775 = vrot.slane %v1746, %v1774
        %v1776 = vlaneseq
        %v1777 = vshrl.u32 %v1776, 7
        %v1778 = vsub.s32 7, %v1777
        %v1779 = vrot.slane %v1746, %v1778
        %v1788 = vmul.f32 %v1656, %v1751
        %v1789 = vmul.f32 %v1658, %v1755
        %v1790 = vmul.f32 %v1660, %v1759
        %v1791 = vmul.f32 %v1662, %v1763
        %v1792 = vmul.f32 %v1664, %v1767
        %v1793 = vmul.f32 %v1666, %v1771
        %v1794 = vmul.f32 %v1668, %v1775
        %v1795 = vmul.f32 %v1670, %v1779
        %1797 = vset.pattern.permute.xlu0 0
        %1798 = vperm.xlu0 %1797, %v1788
        %v1799 = vpop.permute.xlu0 %1798
        %1802 = vset.pattern.permute.xlu0 0
        %1803 = vperm.xlu0 %1802, %v1789
        %v1804 = vpop.permute.xlu0 %1803
        %1807 = vset.pattern.permute.xlu0 0
        %1808 = vperm.xlu0 %1807, %v1790
        %v1809 = vpop.permute.xlu0 %1808
        %1812 = vset.pattern.permute.xlu0 0
        %1813 = vperm.xlu0 %1812, %v1791
        %v1814 = vpop.permute.xlu0 %1813
        %1817 = vset.pattern.permute.xlu0 0
        %1818 = vperm.xlu0 %1817, %v1792
        %v1819 = vpop.permute.xlu0 %1818
        %1822 = vset.pattern.permute.xlu0 0
        %1823 = vperm.xlu0 %1822, %v1793
        %v1824 = vpop.permute.xlu0 %1823
        %1827 = vset.pattern.permute.xlu0 0
        %1828 = vperm.xlu0 %1827, %v1794
        %v1829 = vpop.permute.xlu0 %1828
        %1832 = vset.pattern.permute.xlu0 0
        %1833 = vperm.xlu0 %1832, %v1795
        %v1834 = vpop.permute.xlu0 %1833
        %v1836 = vmul.f32 %v1799, %v403
        %v1837 = vmul.f32 %v1804, %v404
        %v1838 = vmul.f32 %v1809, %v405
        %v1839 = vmul.f32 %v1814, %v406
        %v1840 = vmul.f32 %v1819, %v407
        %v1841 = vmul.f32 %v1824, %v408
        %v1842 = vmul.f32 %v1829, %v409
        %v1843 = vmul.f32 %v1834, %v410
        %v1844 = vsel %vm422, %v1836, 0.0
        %v1845 = vrot.slane %v1844, 4
        %v1846 = vadd.f32 %v1844, %v1845
        %v1847 = vrot.slane %v1846, 2
        %v1848 = vadd.f32 %v1846, %v1847
        %v1849 = vrot.slane %v1848, 1
        %v1850 = vadd.f32 %v1848, %v1849
        %v1851 = vsel %vm422, %v1837, 0.0
        %v1852 = vrot.slane %v1851, 4
        %v1853 = vadd.f32 %v1851, %v1852
        %v1854 = vrot.slane %v1853, 2
        %v1855 = vadd.f32 %v1853, %v1854
        %v1856 = vrot.slane %v1855, 1
        %v1857 = vadd.f32 %v1855, %v1856
        %v1858 = vsel %vm422, %v1838, 0.0
        %v1859 = vrot.slane %v1858, 4
        %v1860 = vadd.f32 %v1858, %v1859
        %v1861 = vrot.slane %v1860, 2
        %v1862 = vadd.f32 %v1860, %v1861
        %v1863 = vrot.slane %v1862, 1
        %v1864 = vadd.f32 %v1862, %v1863
        %v1865 = vsel %vm422, %v1839, 0.0
        %v1866 = vrot.slane %v1865, 4
        %v1867 = vadd.f32 %v1865, %v1866
        %v1868 = vrot.slane %v1867, 2
        %v1869 = vadd.f32 %v1867, %v1868
        %v1870 = vrot.slane %v1869, 1
        %v1871 = vadd.f32 %v1869, %v1870
        %v1872 = vsel %vm422, %v1840, 0.0
        %v1873 = vrot.slane %v1872, 4
        %v1874 = vadd.f32 %v1872, %v1873
        %v1875 = vrot.slane %v1874, 2
        %v1876 = vadd.f32 %v1874, %v1875
        %v1877 = vrot.slane %v1876, 1
        %v1878 = vadd.f32 %v1876, %v1877
        %v1879 = vsel %vm422, %v1841, 0.0
        %v1880 = vrot.slane %v1879, 4
        %v1881 = vadd.f32 %v1879, %v1880
        %v1882 = vrot.slane %v1881, 2
        %v1883 = vadd.f32 %v1881, %v1882
        %v1884 = vrot.slane %v1883, 1
        %v1885 = vadd.f32 %v1883, %v1884
        %v1886 = vsel %vm422, %v1842, 0.0
        %v1887 = vrot.slane %v1886, 4
        %v1888 = vadd.f32 %v1886, %v1887
        %v1889 = vrot.slane %v1888, 2
        %v1890 = vadd.f32 %v1888, %v1889
        %v1891 = vrot.slane %v1890, 1
        %v1892 = vadd.f32 %v1890, %v1891
        %v1893 = vsel %vm422, %v1843, 0.0
        %v1894 = vrot.slane %v1893, 4
        %v1895 = vadd.f32 %v1893, %v1894
        %v1896 = vrot.slane %v1895, 2
        %v1897 = vadd.f32 %v1895, %v1896
        %v1898 = vrot.slane %v1897, 1
        %v1899 = vadd.f32 %v1897, %v1898
        %v1908 = vsel %vm836, %v1857, %v1850
        %v1909 = vsel %vm838, %v1864, %v1908
        %v1910 = vsel %vm840, %v1871, %v1909
        %v1911 = vsel %vm842, %v1878, %v1910
        %v1912 = vsel %vm844, %v1885, %v1911
        %v1913 = vsel %vm846, %v1892, %v1912
        %v1914 = vsel %vm848, %v1899, %v1913
        %1916 = vrot.lane.b32.xlu0 %v1413, 96
        %v1917 = vpop.permute.xlu0 %1916
        %1918 = vrot.lane.b32.xlu0 %v1415, 96
        %v1919 = vpop.permute.xlu0 %1918
        %v1920 = vsel %vm1169, %v1917, %v1919
        %v1922 = vsel %vm422, %v1914, 0
        %1924 = vmatprep.subr.mxu0 0.0
        %1925 = vmatpush1.msra.mxu0 %v560
        %1926 = vmatprep.subr.mxu0 0.0
        %1927 = vmatpush1.msra.mxu0 %v561
        %1928 = vmatprep.subr.mxu0 0.0
        %1929 = vmatpush1.msra.mxu0 %v562
        %1930 = vmatprep.subr.mxu0 0.0
        %1931 = vmatpush1.msra.mxu0 %v563
        %1932 = vmatprep.subr.mxu0 0.0
        %1933 = vmatpush1.msra.mxu0 0.0
        %1934 = vmatprep.subr.mxu0 0.0
        %1935 = vmatpush1.msra.mxu0 0.0
        %1936 = vmatprep.subr.mxu0 0.0
        %1937 = vmatpush1.msra.mxu0 0.0
        %1938 = vmatprep.subr.mxu0 0.0
        %1939 = vmatpush1.msra.mxu0 0.0
        %1940 = vmatprep.subr.mxu0 0.0
        %1941 = vmatpush1.msra.mxu0 0.0
        %1942 = vmatprep.subr.mxu0 0.0
        %1943 = vmatpush1.msra.mxu0 0.0
        %1944 = vmatprep.subr.mxu0 0.0
        %1945 = vmatpush1.msra.mxu0 0.0
        %1946 = vmatprep.subr.mxu0 0.0
        %1947 = vmatpush1.msra.mxu0 0.0
        %1948 = vmatprep.subr.mxu0 0.0
        %1949 = vmatpush1.msra.mxu0 0.0
        %1950 = vmatprep.subr.mxu0 0.0
        %1951 = vmatpush1.msra.mxu0 0.0
        %1952 = vmatprep.subr.mxu0 0.0
        %1953 = vmatpush1.msra.mxu0 0.0
        %1954 = vmatprep.subr.mxu0 0.0
        %1955 = vmatpush1.msra.mxu0 0.0
        %1956 = vmatprep.subr.mxu0 0.0
        %1957 = vmatpush1.msra.mxu0 0.0
        %1958 = vmatprep.subr.mxu0 0.0
        %1959 = vmatpush1.msra.mxu0 0.0
        %1960 = vmatprep.subr.mxu0 0.0
        %1961 = vmatpush1.msra.mxu0 0.0
        %1962 = vmatprep.subr.mxu0 0.0
        %1963 = vmatpush1.msra.mxu0 0.0
        %1964 = vmatprep.subr.mxu0 0.0
        %1965 = vmatpush1.msra.mxu0 0.0
        %1966 = vmatprep.subr.mxu0 0.0
        %1967 = vmatpush1.msra.mxu0 0.0
        %1968 = vmatprep.subr.mxu0 0.0
        %1969 = vmatpush1.msra.mxu0 0.0
        %1970 = vmatprep.subr.mxu0 0.0
        %1971 = vmatpush1.msra.mxu0 0.0
        %1972 = vmatprep.subr.mxu0 0.0
        %1973 = vmatpush1.msra.mxu0 0.0
        %1974 = vmatprep.subr.mxu0 0.0
        %1975 = vmatpush1.msra.mxu0 0.0
        %1976 = vmatprep.subr.mxu0 0.0
        %1977 = vmatpush1.msra.mxu0 0.0
        %1978 = vmatprep.subr.mxu0 0.0
        %1979 = vmatpush1.msra.mxu0 0.0
        %1980 = vmatprep.subr.mxu0 0.0
        %1981 = vmatpush1.msra.mxu0 0.0
        %1982 = vmatprep.subr.mxu0 0.0
        %1983 = vmatpush1.msra.mxu0 0.0
        %1984 = vmatprep.subr.mxu0 0.0
        %1985 = vmatpush1.msra.mxu0 0.0
        %1986 = vmatprep.subr.mxu0 0.0
        %1987 = vmatpush1.msra.mxu0 0.0
        %1988 = vmatprep.mubr.f32.mxu0 0.0
        %1989 = vmatmul.mubr.f32.gmra.mrb[0].mxu0 %v1922
        %v1990 = vpop.f32.mrb[0].mxu0
        %v1991 = vadd.f32 %v1920, %v1990
        %v1992 = vpop.f32.mrb[0].mxu0
        %1993 = vdwg.mxu0
        %s1994 = scalar_lea.vmem %s360, 8 [#allocation2]
        %v1995 = vld [vmem:[%s1994] sm:$0xff]
        %v1996 = vadd.f32 %v1991, %v1995
        %v1997 = vxor.u32 %v1996, 2147483648
        %v1998 = vmul.f32 %v1997, 1.442695
        %v1999 = vpow.pop %v1998
        %v2000 = vadd.f32 %v1999, 1.0
        %v2001 = vrcp.pop %v2000
        %v2002 = vmul.f32 1.0, %v2001
        %v2003 = vtanh.pop %v1996
        %v2004 = vmul.f32 %v2002, %v1263
        %2006 = vrot.lane.b32.xlu0 %v2003, 64
        %v2007 = vpop.permute.xlu0 %2006
        %v2009 = vmul.f32 %v2002, %v2007
        %2011 = vrot.lane.b32.xlu0 %v2009, 32
        %v2012 = vpop.permute.xlu0 %2011
        %v2014 = vadd.f32 %v2004, %v2012
        %v2015 = vtanh.pop %v2014
        %2017 = vrot.lane.b32.xlu0 %v2015, 64
        %v2018 = vpop.permute.xlu0 %2017
        %v2020 = vmul.f32 %v2002, %v2018
        %2022 = vrot.lane.b32.xlu0 %v2020, 32
        %v2023 = vpop.permute.xlu0 %2022
        %v2024 = vsel %vm422, %v2023, 0
        %2026 = vmatprep.subr.mxu0 0.0
        %2027 = vmatpush1.msra.mxu0 %v564
        %2028 = vmatprep.subr.mxu0 0.0
        %2029 = vmatpush1.msra.mxu0 %v565
        %2030 = vmatprep.subr.mxu0 0.0
        %2031 = vmatpush1.msra.mxu0 %v566
        %2032 = vmatprep.subr.mxu0 0.0
        %2033 = vmatpush1.msra.mxu0 %v567
        %2034 = vmatprep.subr.mxu0 0.0
        %2035 = vmatpush1.msra.mxu0 0.0
        %2036 = vmatprep.subr.mxu0 0.0
        %2037 = vmatpush1.msra.mxu0 0.0
        %2038 = vmatprep.subr.mxu0 0.0
        %2039 = vmatpush1.msra.mxu0 0.0
        %2040 = vmatprep.subr.mxu0 0.0
        %2041 = vmatpush1.msra.mxu0 0.0
        %2042 = vmatprep.subr.mxu0 0.0
        %2043 = vmatpush1.msra.mxu0 0.0
        %2044 = vmatprep.subr.mxu0 0.0
        %2045 = vmatpush1.msra.mxu0 0.0
        %2046 = vmatprep.subr.mxu0 0.0
        %2047 = vmatpush1.msra.mxu0 0.0
        %2048 = vmatprep.subr.mxu0 0.0
        %2049 = vmatpush1.msra.mxu0 0.0
        %2050 = vmatprep.subr.mxu0 0.0
        %2051 = vmatpush1.msra.mxu0 0.0
        %2052 = vmatprep.subr.mxu0 0.0
        %2053 = vmatpush1.msra.mxu0 0.0
        %2054 = vmatprep.subr.mxu0 0.0
        %2055 = vmatpush1.msra.mxu0 0.0
        %2056 = vmatprep.subr.mxu0 0.0
        %2057 = vmatpush1.msra.mxu0 0.0
        %2058 = vmatprep.subr.mxu0 0.0
        %2059 = vmatpush1.msra.mxu0 0.0
        %2060 = vmatprep.subr.mxu0 0.0
        %2061 = vmatpush1.msra.mxu0 0.0
        %2062 = vmatprep.subr.mxu0 0.0
        %2063 = vmatpush1.msra.mxu0 0.0
        %2064 = vmatprep.subr.mxu0 0.0
        %2065 = vmatpush1.msra.mxu0 0.0
        %2066 = vmatprep.subr.mxu0 0.0
        %2067 = vmatpush1.msra.mxu0 0.0
        %2068 = vmatprep.subr.mxu0 0.0
        %2069 = vmatpush1.msra.mxu0 0.0
        %2070 = vmatprep.subr.mxu0 0.0
        %2071 = vmatpush1.msra.mxu0 0.0
        %2072 = vmatprep.subr.mxu0 0.0
        %2073 = vmatpush1.msra.mxu0 0.0
        %2074 = vmatprep.subr.mxu0 0.0
        %2075 = vmatpush1.msra.mxu0 0.0
        %2076 = vmatprep.subr.mxu0 0.0
        %2077 = vmatpush1.msra.mxu0 0.0
        %2078 = vmatprep.subr.mxu0 0.0
        %2079 = vmatpush1.msra.mxu0 0.0
        %2080 = vmatprep.subr.mxu0 0.0
        %2081 = vmatpush1.msra.mxu0 0.0
        %2082 = vmatprep.subr.mxu0 0.0
        %2083 = vmatpush1.msra.mxu0 0.0
        %2084 = vmatprep.subr.mxu0 0.0
        %2085 = vmatpush1.msra.mxu0 0.0
        %2086 = vmatprep.subr.mxu0 0.0
        %2087 = vmatpush1.msra.mxu0 0.0
        %2088 = vmatprep.subr.mxu0 0.0
        %2089 = vmatpush1.msra.mxu0 0.0
        %2090 = vmatprep.mubr.f32.mxu0 0.0
        %2091 = vmatmul.mubr.f32.gmra.mrb[0].mxu0 %v2024
        %v2092 = vpop.f32.mrb[0].mxu0
        %v2093 = vadd.f32 %v580, %v2092
        %v2094 = vpop.f32.mrb[0].mxu0
        %2095 = vdwg.mxu0
        %s2096 = scalar_lea.vmem %s396, 8 [#allocation3]
        %2097 = vst [vmem:[%s2096] sm:$0xff] %v2093
        %2098 = vmatprep.subr.mxu0 %v553
        %2099 = vmatpush1.msra.mxu0 %v552
        %2100 = vmatprep.subr.mxu0 %v555
        %2101 = vmatpush1.msra.mxu0 %v554
        %2102 = vmatprep.subr.mxu0 %v557
        %2103 = vmatpush1.msra.mxu0 %v556
        %2104 = vmatprep.subr.mxu0 %v559
        %2105 = vmatpush1.msra.mxu0 %v558
        %2106 = vmatprep.subr.mxu0 0.0
        %2107 = vmatpush1.msra.mxu0 0.0
        %2108 = vmatprep.subr.mxu0 0.0
        %2109 = vmatpush1.msra.mxu0 0.0
        %2110 = vmatprep.subr.mxu0 0.0
        %2111 = vmatpush1.msra.mxu0 0.0
        %2112 = vmatprep.subr.mxu0 0.0
        %2113 = vmatpush1.msra.mxu0 0.0
        %2114 = vmatprep.subr.mxu0 0.0
        %2115 = vmatpush1.msra.mxu0 0.0
        %2116 = vmatprep.subr.mxu0 0.0
        %2117 = vmatpush1.msra.mxu0 0.0
        %2118 = vmatprep.subr.mxu0 0.0
        %2119 = vmatpush1.msra.mxu0 0.0
        %2120 = vmatprep.subr.mxu0 0.0
        %2121 = vmatpush1.msra.mxu0 0.0
        %2122 = vmatprep.subr.mxu0 0.0
        %2123 = vmatpush1.msra.mxu0 0.0
        %2124 = vmatprep.subr.mxu0 0.0
        %2125 = vmatpush1.msra.mxu0 0.0
        %2126 = vmatprep.subr.mxu0 0.0
        %2127 = vmatpush1.msra.mxu0 0.0
        %2128 = vmatprep.subr.mxu0 0.0
        %2129 = vmatpush1.msra.mxu0 0.0
        %2130 = vmatprep.subr.mxu0 0.0
        %2131 = vmatpush1.msra.mxu0 0.0
        %2132 = vmatprep.subr.mxu0 0.0
        %2133 = vmatpush1.msra.mxu0 0.0
        %2134 = vmatprep.subr.mxu0 0.0
        %2135 = vmatpush1.msra.mxu0 0.0
        %2136 = vmatprep.subr.mxu0 0.0
        %2137 = vmatpush1.msra.mxu0 0.0
        %2138 = vmatprep.subr.mxu0 0.0
        %2139 = vmatpush1.msra.mxu0 0.0
        %2140 = vmatprep.subr.mxu0 0.0
        %2141 = vmatpush1.msra.mxu0 0.0
        %2142 = vmatprep.subr.mxu0 0.0
        %2143 = vmatpush1.msra.mxu0 0.0
        %2144 = vmatprep.subr.mxu0 0.0
        %2145 = vmatpush1.msra.mxu0 0.0
        %2146 = vmatprep.subr.mxu0 0.0
        %2147 = vmatpush1.msra.mxu0 0.0
        %2148 = vmatprep.subr.mxu0 0.0
        %2149 = vmatpush1.msra.mxu0 0.0
        %2150 = vmatprep.subr.mxu0 0.0
        %2151 = vmatpush1.msra.mxu0 0.0
        %2152 = vmatprep.subr.mxu0 0.0
        %2153 = vmatpush1.msra.mxu0 0.0
        %2154 = vmatprep.subr.mxu0 0.0
        %2155 = vmatpush1.msra.mxu0 0.0
        %2156 = vmatprep.subr.mxu0 0.0
        %2157 = vmatpush1.msra.mxu0 0.0
        %2158 = vmatprep.subr.mxu0 0.0
        %2159 = vmatpush1.msra.mxu0 0.0
        %2160 = vmatprep.subr.mxu0 0.0
        %2161 = vmatpush1.msra.mxu0 0.0
        %2162 = vmatprep.mubr.f32.mxu0 0.0
        %2163 = vmatmul.mubr.f32.gmra.mrb[0].mxu0 %v2024
        %v2164 = vpop.f32.mrb[0].mxu0
        %v2165 = vadd.f32 0.0, %v2164
        %v2166 = vpop.f32.mrb[0].mxu0
        %v2167 = vadd.f32 0.0, %v2166
        %2168 = vdwg.mxu0
        %v2170 = vcombine.high %v2165, %v2165
        %v2172 = vunpack.c.l.s4 1966171168
        %v2173 = vunpack.c.0.s8 %v2172
        %v2174 = vlaneseq
        %v2175 = vshrl.u32 %v2174, 7
        %v2176 = vsub.s32 %v2173, %v2175
        %v2177 = vrot.slane %v2165, %v2176
        %v2179 = vunpack.c.l.s4 1966171168
        %v2180 = vunpack.c.0.s8 %v2179
        %v2181 = vlaneseq
        %v2182 = vshrl.u32 %v2181, 7
        %v2183 = vsub.s32 %v2180, %v2182
        %v2184 = vrot.slane %v2170, %v2183
        %v2185 = vcombine.high %v2177, %v2177
        %v2186 = vcombine.high %v2184, %v2184
        %v2188 = vunpack.c.l.s4 1966171168
        %v2189 = vunpack.c.0.s8 %v2188
        %v2190 = vlaneseq
        %v2191 = vshrl.u32 %v2190, 7
        %v2192 = vsub.s32 %v2189, %v2191
        %v2193 = vrot.slane %v2177, %v2192
        %v2195 = vunpack.c.l.s4 1966171168
        %v2196 = vunpack.c.0.s8 %v2195
        %v2197 = vlaneseq
        %v2198 = vshrl.u32 %v2197, 7
        %v2199 = vsub.s32 %v2196, %v2198
        %v2200 = vrot.slane %v2184, %v2199
        %v2202 = vunpack.c.l.s4 1966171168
        %v2203 = vunpack.c.0.s8 %v2202
        %v2204 = vlaneseq
        %v2205 = vshrl.u32 %v2204, 7
        %v2206 = vsub.s32 %v2203, %v2205
        %v2207 = vrot.slane %v2185, %v2206
        %v2209 = vunpack.c.l.s4 1966171168
        %v2210 = vunpack.c.0.s8 %v2209
        %v2211 = vlaneseq
        %v2212 = vshrl.u32 %v2211, 7
        %v2213 = vsub.s32 %v2210, %v2212
        %v2214 = vrot.slane %v2186, %v2213
        %v2215 = vcombine.high %v2193, %v2193
        %v2216 = vcombine.high %v2200, %v2200
        %v2217 = vcombine.high %v2207, %v2207
        %v2218 = vcombine.high %v2214, %v2214
        %v2219 = vlaneseq
        %v2220 = vshrl.u32 %v2219, 7
        %v2221 = vsub.s32 0, %v2220
        %v2222 = vrot.slane %v2193, %v2221
        %v2223 = vlaneseq
        %v2224 = vshrl.u32 %v2223, 7
        %v2225 = vsub.s32 0, %v2224
        %v2226 = vrot.slane %v2207, %v2225
        %v2227 = vlaneseq
        %v2228 = vshrl.u32 %v2227, 7
        %v2229 = vsub.s32 0, %v2228
        %v2230 = vrot.slane %v2215, %v2229
        %v2231 = vlaneseq
        %v2232 = vshrl.u32 %v2231, 7
        %v2233 = vsub.s32 0, %v2232
        %v2234 = vrot.slane %v2217, %v2233
        %v2235 = vlaneseq
        %v2236 = vshrl.u32 %v2235, 7
        %v2237 = vsub.s32 0, %v2236
        %v2238 = vrot.slane %v2200, %v2237
        %v2239 = vlaneseq
        %v2240 = vshrl.u32 %v2239, 7
        %v2241 = vsub.s32 0, %v2240
        %v2242 = vrot.slane %v2214, %v2241
        %v2243 = vlaneseq
        %v2244 = vshrl.u32 %v2243, 7
        %v2245 = vsub.s32 0, %v2244
        %v2246 = vrot.slane %v2216, %v2245
        %v2247 = vlaneseq
        %v2248 = vshrl.u32 %v2247, 7
        %v2249 = vsub.s32 0, %v2248
        %v2250 = vrot.slane %v2218, %v2249
        %v2259 = vadd.f32 %v514, %v2222
        %v2260 = vadd.f32 %v519, %v2226
        %v2261 = vadd.f32 %v524, %v2230
        %v2262 = vadd.f32 %v529, %v2234
        %v2263 = vadd.f32 %v534, %v2238
        %v2264 = vadd.f32 %v539, %v2242
        %v2265 = vadd.f32 %v544, %v2246
        %v2266 = vadd.f32 %v549, %v2250
        %v2267 = vtanh.pop %v2259
        %v2268 = vtanh.pop %v2260
        %v2269 = vtanh.pop %v2261
        %v2270 = vtanh.pop %v2262
        %v2271 = vtanh.pop %v2263
        %v2272 = vtanh.pop %v2264
        %v2273 = vtanh.pop %v2265
        %v2274 = vtanh.pop %v2266
        %v2275 = vmul.f32 %v2267, %v573
        %v2276 = vmul.f32 %v2268, %v573
        %v2277 = vmul.f32 %v2269, %v573
        %v2278 = vmul.f32 %v2270, %v573
        %v2279 = vmul.f32 %v2271, %v573
        %v2280 = vmul.f32 %v2272, %v573
        %v2281 = vmul.f32 %v2273, %v573
        %v2282 = vmul.f32 %v2274, %v573
        %v2283 = vsel %vm422, %v2275, 0.0
        %2284 = vadd.xlane.f32.xlu0 %v2283
        %v2285 = vpop.xlane.xlu0 %2284
        %v2286 = vsel %vm422, %v2276, 0.0
        %2287 = vadd.xlane.f32.xlu0 %v2286
        %v2288 = vpop.xlane.xlu0 %2287
        %v2289 = vsel %vm422, %v2277, 0.0
        %2290 = vadd.xlane.f32.xlu0 %v2289
        %v2291 = vpop.xlane.xlu0 %2290
        %v2292 = vsel %vm422, %v2278, 0.0
        %2293 = vadd.xlane.f32.xlu0 %v2292
        %v2294 = vpop.xlane.xlu0 %2293
        %v2295 = vsel %vm422, %v2279, 0.0
        %2296 = vadd.xlane.f32.xlu0 %v2295
        %v2297 = vpop.xlane.xlu0 %2296
        %v2298 = vsel %vm422, %v2280, 0.0
        %2299 = vadd.xlane.f32.xlu0 %v2298
        %v2300 = vpop.xlane.xlu0 %2299
        %v2301 = vsel %vm422, %v2281, 0.0
        %2302 = vadd.xlane.f32.xlu0 %v2301
        %v2303 = vpop.xlane.xlu0 %2302
        %v2304 = vsel %vm422, %v2282, 0.0
        %2305 = vadd.xlane.f32.xlu0 %v2304
        %v2306 = vpop.xlane.xlu0 %2305
        %v2315 = vlaneseq
        %v2316 = vshrl.u32 %v2315, 7
        %v2317 = vsub.s32 %v803, %v2316
        %v2318 = vrot.slane %v2285, %v2317
        %v2319 = vlaneseq
        %v2320 = vshrl.u32 %v2319, 7
        %v2321 = vsub.s32 %v803, %v2320
        %v2322 = vrot.slane %v2288, %v2321
        %v2323 = vlaneseq
        %v2324 = vshrl.u32 %v2323, 7
        %v2325 = vsub.s32 %v803, %v2324
        %v2326 = vrot.slane %v2291, %v2325
        %v2327 = vlaneseq
        %v2328 = vshrl.u32 %v2327, 7
        %v2329 = vsub.s32 %v803, %v2328
        %v2330 = vrot.slane %v2294, %v2329
        %v2331 = vlaneseq
        %v2332 = vshrl.u32 %v2331, 7
        %v2333 = vsub.s32 %v803, %v2332
        %v2334 = vrot.slane %v2297, %v2333
        %v2335 = vlaneseq
        %v2336 = vshrl.u32 %v2335, 7
        %v2337 = vsub.s32 %v803, %v2336
        %v2338 = vrot.slane %v2300, %v2337
        %v2339 = vlaneseq
        %v2340 = vshrl.u32 %v2339, 7
        %v2341 = vsub.s32 %v803, %v2340
        %v2342 = vrot.slane %v2303, %v2341
        %v2343 = vlaneseq
        %v2344 = vshrl.u32 %v2343, 7
        %v2345 = vsub.s32 %v803, %v2344
        %v2346 = vrot.slane %v2306, %v2345
        %v2347 = vsel %vm836, %v2322, %v2318
        %v2348 = vsel %vm838, %v2326, %v2347
        %v2349 = vsel %vm840, %v2330, %v2348
        %v2350 = vsel %vm842, %v2334, %v2349
        %v2351 = vsel %vm844, %v2338, %v2350
        %v2352 = vsel %vm846, %v2342, %v2351
        %v2353 = vsel %vm848, %v2346, %v2352
        %v2355 = vsel %vm851, %v2353, -inf
        %2356 = vmax.xlane.f32.xlu0 %v2355
        %v2357 = vpop.xlane.xlu0 %2356
        %v2359 = vlaneseq
        %v2360 = vshrl.u32 %v2359, 7
        %v2361 = vsub.s32 0, %v2360
        %v2362 = vrot.slane %v2357, %v2361
        %v2363 = vlaneseq
        %v2364 = vshrl.u32 %v2363, 7
        %v2365 = vsub.s32 1, %v2364
        %v2366 = vrot.slane %v2357, %v2365
        %v2367 = vlaneseq
        %v2368 = vshrl.u32 %v2367, 7
        %v2369 = vsub.s32 2, %v2368
        %v2370 = vrot.slane %v2357, %v2369
        %v2371 = vlaneseq
        %v2372 = vshrl.u32 %v2371, 7
        %v2373 = vsub.s32 3, %v2372
        %v2374 = vrot.slane %v2357, %v2373
        %v2375 = vlaneseq
        %v2376 = vshrl.u32 %v2375, 7
        %v2377 = vsub.s32 4, %v2376
        %v2378 = vrot.slane %v2357, %v2377
        %v2379 = vlaneseq
        %v2380 = vshrl.u32 %v2379, 7
        %v2381 = vsub.s32 5, %v2380
        %v2382 = vrot.slane %v2357, %v2381
        %v2383 = vlaneseq
        %v2384 = vshrl.u32 %v2383, 7
        %v2385 = vsub.s32 6, %v2384
        %v2386 = vrot.slane %v2357, %v2385
        %v2387 = vlaneseq
        %v2388 = vshrl.u32 %v2387, 7
        %v2389 = vsub.s32 7, %v2388
        %v2390 = vrot.slane %v2357, %v2389
        %v2399 = vsub.f32 %v2285, %v2362
        %v2400 = vsub.f32 %v2288, %v2366
        %v2401 = vsub.f32 %v2291, %v2370
        %v2402 = vsub.f32 %v2294, %v2374
        %v2403 = vsub.f32 %v2297, %v2378
        %v2404 = vsub.f32 %v2300, %v2382
        %v2405 = vsub.f32 %v2303, %v2386
        %v2406 = vsub.f32 %v2306, %v2390
        %v2407 = vmul.f32 %v2399, 1.442695
        %v2408 = vpow.pop %v2407
        %v2409 = vmul.f32 %v2400, 1.442695
        %v2410 = vpow.pop %v2409
        %v2411 = vmul.f32 %v2401, 1.442695
        %v2412 = vpow.pop %v2411
        %v2413 = vmul.f32 %v2402, 1.442695
        %v2414 = vpow.pop %v2413
        %v2415 = vmul.f32 %v2403, 1.442695
        %v2416 = vpow.pop %v2415
        %v2417 = vmul.f32 %v2404, 1.442695
        %v2418 = vpow.pop %v2417
        %v2419 = vmul.f32 %v2405, 1.442695
        %v2420 = vpow.pop %v2419
        %v2421 = vmul.f32 %v2406, 1.442695
        %v2422 = vpow.pop %v2421
        %2431 = vset.pattern.permute.xlu0 0
        %2432 = vperm.xlu0 %2431, %v2408
        %v2433 = vpop.permute.xlu0 %2432
        %2434 = vset.pattern.permute.xlu0 0
        %2435 = vperm.xlu0 %2434, %v2410
        %v2436 = vpop.permute.xlu0 %2435
        %2437 = vset.pattern.permute.xlu0 0
        %2438 = vperm.xlu0 %2437, %v2412
        %v2439 = vpop.permute.xlu0 %2438
        %2440 = vset.pattern.permute.xlu0 0
        %2441 = vperm.xlu0 %2440, %v2414
        %v2442 = vpop.permute.xlu0 %2441
        %2443 = vset.pattern.permute.xlu0 0
        %2444 = vperm.xlu0 %2443, %v2416
        %v2445 = vpop.permute.xlu0 %2444
        %2446 = vset.pattern.permute.xlu0 0
        %2447 = vperm.xlu0 %2446, %v2418
        %v2448 = vpop.permute.xlu0 %2447
        %2449 = vset.pattern.permute.xlu0 0
        %2450 = vperm.xlu0 %2449, %v2420
        %v2451 = vpop.permute.xlu0 %2450
        %2452 = vset.pattern.permute.xlu0 0
        %2453 = vperm.xlu0 %2452, %v2422
        %v2454 = vpop.permute.xlu0 %2453
        %v2455 = vlaneseq
        %v2456 = vshrl.u32 %v2455, 7
        %v2457 = vsub.s32 %v803, %v2456
        %v2458 = vrot.slane %v2433, %v2457
        %v2459 = vlaneseq
        %v2460 = vshrl.u32 %v2459, 7
        %v2461 = vsub.s32 %v803, %v2460
        %v2462 = vrot.slane %v2436, %v2461
        %v2463 = vlaneseq
        %v2464 = vshrl.u32 %v2463, 7
        %v2465 = vsub.s32 %v803, %v2464
        %v2466 = vrot.slane %v2439, %v2465
        %v2467 = vlaneseq
        %v2468 = vshrl.u32 %v2467, 7
        %v2469 = vsub.s32 %v803, %v2468
        %v2470 = vrot.slane %v2442, %v2469
        %v2471 = vlaneseq
        %v2472 = vshrl.u32 %v2471, 7
        %v2473 = vsub.s32 %v803, %v2472
        %v2474 = vrot.slane %v2445, %v2473
        %v2475 = vlaneseq
        %v2476 = vshrl.u32 %v2475, 7
        %v2477 = vsub.s32 %v803, %v2476
        %v2478 = vrot.slane %v2448, %v2477
        %v2479 = vlaneseq
        %v2480 = vshrl.u32 %v2479, 7
        %v2481 = vsub.s32 %v803, %v2480
        %v2482 = vrot.slane %v2451, %v2481
        %v2483 = vlaneseq
        %v2484 = vshrl.u32 %v2483, 7
        %v2485 = vsub.s32 %v803, %v2484
        %v2486 = vrot.slane %v2454, %v2485
        %v2487 = vsel %vm836, %v2462, %v2458
        %v2488 = vsel %vm838, %v2466, %v2487
        %v2489 = vsel %vm840, %v2470, %v2488
        %v2490 = vsel %vm842, %v2474, %v2489
        %v2491 = vsel %vm844, %v2478, %v2490
        %v2492 = vsel %vm846, %v2482, %v2491
        %v2493 = vsel %vm848, %v2486, %v2492
        %v2495 = vsel %vm851, %v2493, 0.0
        %2496 = vadd.xlane.f32.xlu0 %v2495
        %v2497 = vpop.xlane.xlu0 %2496
        %v2498 = vrcp.pop %v2497
        %v2500 = vlaneseq
        %v2501 = vshrl.u32 %v2500, 7
        %v2502 = vsub.s32 0, %v2501
        %v2503 = vrot.slane %v2498, %v2502
        %v2504 = vlaneseq
        %v2505 = vshrl.u32 %v2504, 7
        %v2506 = vsub.s32 1, %v2505
        %v2507 = vrot.slane %v2498, %v2506
        %v2508 = vlaneseq
        %v2509 = vshrl.u32 %v2508, 7
        %v2510 = vsub.s32 2, %v2509
        %v2511 = vrot.slane %v2498, %v2510
        %v2512 = vlaneseq
        %v2513 = vshrl.u32 %v2512, 7
        %v2514 = vsub.s32 3, %v2513
        %v2515 = vrot.slane %v2498, %v2514
        %v2516 = vlaneseq
        %v2517 = vshrl.u32 %v2516, 7
        %v2518 = vsub.s32 4, %v2517
        %v2519 = vrot.slane %v2498, %v2518
        %v2520 = vlaneseq
        %v2521 = vshrl.u32 %v2520, 7
        %v2522 = vsub.s32 5, %v2521
        %v2523 = vrot.slane %v2498, %v2522
        %v2524 = vlaneseq
        %v2525 = vshrl.u32 %v2524, 7
        %v2526 = vsub.s32 6, %v2525
        %v2527 = vrot.slane %v2498, %v2526
        %v2528 = vlaneseq
        %v2529 = vshrl.u32 %v2528, 7
        %v2530 = vsub.s32 7, %v2529
        %v2531 = vrot.slane %v2498, %v2530
        %v2540 = vmul.f32 %v2408, %v2503
        %v2541 = vmul.f32 %v2410, %v2507
        %v2542 = vmul.f32 %v2412, %v2511
        %v2543 = vmul.f32 %v2414, %v2515
        %v2544 = vmul.f32 %v2416, %v2519
        %v2545 = vmul.f32 %v2418, %v2523
        %v2546 = vmul.f32 %v2420, %v2527
        %v2547 = vmul.f32 %v2422, %v2531
        %2549 = vset.pattern.permute.xlu0 0
        %2550 = vperm.xlu0 %2549, %v2540
        %v2551 = vpop.permute.xlu0 %2550
        %2554 = vset.pattern.permute.xlu0 0
        %2555 = vperm.xlu0 %2554, %v2541
        %v2556 = vpop.permute.xlu0 %2555
        %2559 = vset.pattern.permute.xlu0 0
        %2560 = vperm.xlu0 %2559, %v2542
        %v2561 = vpop.permute.xlu0 %2560
        %2564 = vset.pattern.permute.xlu0 0
        %2565 = vperm.xlu0 %2564, %v2543
        %v2566 = vpop.permute.xlu0 %2565
        %2569 = vset.pattern.permute.xlu0 0
        %2570 = vperm.xlu0 %2569, %v2544
        %v2571 = vpop.permute.xlu0 %2570
        %2574 = vset.pattern.permute.xlu0 0
        %2575 = vperm.xlu0 %2574, %v2545
        %v2576 = vpop.permute.xlu0 %2575
        %2579 = vset.pattern.permute.xlu0 0
        %2580 = vperm.xlu0 %2579, %v2546
        %v2581 = vpop.permute.xlu0 %2580
        %2584 = vset.pattern.permute.xlu0 0
        %2585 = vperm.xlu0 %2584, %v2547
        %v2586 = vpop.permute.xlu0 %2585
        %v2588 = vmul.f32 %v2551, %v403
        %v2589 = vmul.f32 %v2556, %v404
        %v2590 = vmul.f32 %v2561, %v405
        %v2591 = vmul.f32 %v2566, %v406
        %v2592 = vmul.f32 %v2571, %v407
        %v2593 = vmul.f32 %v2576, %v408
        %v2594 = vmul.f32 %v2581, %v409
        %v2595 = vmul.f32 %v2586, %v410
        %v2596 = vsel %vm422, %v2588, 0.0
        %v2597 = vrot.slane %v2596, 4
        %v2598 = vadd.f32 %v2596, %v2597
        %v2599 = vrot.slane %v2598, 2
        %v2600 = vadd.f32 %v2598, %v2599
        %v2601 = vrot.slane %v2600, 1
        %v2602 = vadd.f32 %v2600, %v2601
        %v2603 = vsel %vm422, %v2589, 0.0
        %v2604 = vrot.slane %v2603, 4
        %v2605 = vadd.f32 %v2603, %v2604
        %v2606 = vrot.slane %v2605, 2
        %v2607 = vadd.f32 %v2605, %v2606
        %v2608 = vrot.slane %v2607, 1
        %v2609 = vadd.f32 %v2607, %v2608
        %v2610 = vsel %vm422, %v2590, 0.0
        %v2611 = vrot.slane %v2610, 4
        %v2612 = vadd.f32 %v2610, %v2611
        %v2613 = vrot.slane %v2612, 2
        %v2614 = vadd.f32 %v2612, %v2613
        %v2615 = vrot.slane %v2614, 1
        %v2616 = vadd.f32 %v2614, %v2615
        %v2617 = vsel %vm422, %v2591, 0.0
        %v2618 = vrot.slane %v2617, 4
        %v2619 = vadd.f32 %v2617, %v2618
        %v2620 = vrot.slane %v2619, 2
        %v2621 = vadd.f32 %v2619, %v2620
        %v2622 = vrot.slane %v2621, 1
        %v2623 = vadd.f32 %v2621, %v2622
        %v2624 = vsel %vm422, %v2592, 0.0
        %v2625 = vrot.slane %v2624, 4
        %v2626 = vadd.f32 %v2624, %v2625
        %v2627 = vrot.slane %v2626, 2
        %v2628 = vadd.f32 %v2626, %v2627
        %v2629 = vrot.slane %v2628, 1
        %v2630 = vadd.f32 %v2628, %v2629
        %v2631 = vsel %vm422, %v2593, 0.0
        %v2632 = vrot.slane %v2631, 4
        %v2633 = vadd.f32 %v2631, %v2632
        %v2634 = vrot.slane %v2633, 2
        %v2635 = vadd.f32 %v2633, %v2634
        %v2636 = vrot.slane %v2635, 1
        %v2637 = vadd.f32 %v2635, %v2636
        %v2638 = vsel %vm422, %v2594, 0.0
        %v2639 = vrot.slane %v2638, 4
        %v2640 = vadd.f32 %v2638, %v2639
        %v2641 = vrot.slane %v2640, 2
        %v2642 = vadd.f32 %v2640, %v2641
        %v2643 = vrot.slane %v2642, 1
        %v2644 = vadd.f32 %v2642, %v2643
        %v2645 = vsel %vm422, %v2595, 0.0
        %v2646 = vrot.slane %v2645, 4
        %v2647 = vadd.f32 %v2645, %v2646
        %v2648 = vrot.slane %v2647, 2
        %v2649 = vadd.f32 %v2647, %v2648
        %v2650 = vrot.slane %v2649, 1
        %v2651 = vadd.f32 %v2649, %v2650
        %v2660 = vsel %vm836, %v2609, %v2602
        %v2661 = vsel %vm838, %v2616, %v2660
        %v2662 = vsel %vm840, %v2623, %v2661
        %v2663 = vsel %vm842, %v2630, %v2662
        %v2664 = vsel %vm844, %v2637, %v2663
        %v2665 = vsel %vm846, %v2644, %v2664
        %v2666 = vsel %vm848, %v2651, %v2665
        %2668 = vrot.lane.b32.xlu0 %v2165, 96
        %v2669 = vpop.permute.xlu0 %2668
        %2670 = vrot.lane.b32.xlu0 %v2167, 96
        %v2671 = vpop.permute.xlu0 %2670
        %v2672 = vsel %vm1169, %v2669, %v2671
        %v2674 = vsel %vm422, %v2666, 0
        %2676 = vmatprep.subr.mxu0 0.0
        %2677 = vmatpush1.msra.mxu0 %v560
        %2678 = vmatprep.subr.mxu0 0.0
        %2679 = vmatpush1.msra.mxu0 %v561
        %2680 = vmatprep.subr.mxu0 0.0
        %2681 = vmatpush1.msra.mxu0 %v562
        %2682 = vmatprep.subr.mxu0 0.0
        %2683 = vmatpush1.msra.mxu0 %v563
        %2684 = vmatprep.subr.mxu0 0.0
        %2685 = vmatpush1.msra.mxu0 0.0
        %2686 = vmatprep.subr.mxu0 0.0
        %2687 = vmatpush1.msra.mxu0 0.0
        %2688 = vmatprep.subr.mxu0 0.0
        %2689 = vmatpush1.msra.mxu0 0.0
        %2690 = vmatprep.subr.mxu0 0.0
        %2691 = vmatpush1.msra.mxu0 0.0
        %2692 = vmatprep.subr.mxu0 0.0
        %2693 = vmatpush1.msra.mxu0 0.0
        %2694 = vmatprep.subr.mxu0 0.0
        %2695 = vmatpush1.msra.mxu0 0.0
        %2696 = vmatprep.subr.mxu0 0.0
        %2697 = vmatpush1.msra.mxu0 0.0
        %2698 = vmatprep.subr.mxu0 0.0
        %2699 = vmatpush1.msra.mxu0 0.0
        %2700 = vmatprep.subr.mxu0 0.0
        %2701 = vmatpush1.msra.mxu0 0.0
        %2702 = vmatprep.subr.mxu0 0.0
        %2703 = vmatpush1.msra.mxu0 0.0
        %2704 = vmatprep.subr.mxu0 0.0
        %2705 = vmatpush1.msra.mxu0 0.0
        %2706 = vmatprep.subr.mxu0 0.0
        %2707 = vmatpush1.msra.mxu0 0.0
        %2708 = vmatprep.subr.mxu0 0.0
        %2709 = vmatpush1.msra.mxu0 0.0
        %2710 = vmatprep.subr.mxu0 0.0
        %2711 = vmatpush1.msra.mxu0 0.0
        %2712 = vmatprep.subr.mxu0 0.0
        %2713 = vmatpush1.msra.mxu0 0.0
        %2714 = vmatprep.subr.mxu0 0.0
        %2715 = vmatpush1.msra.mxu0 0.0
        %2716 = vmatprep.subr.mxu0 0.0
        %2717 = vmatpush1.msra.mxu0 0.0
        %2718 = vmatprep.subr.mxu0 0.0
        %2719 = vmatpush1.msra.mxu0 0.0
        %2720 = vmatprep.subr.mxu0 0.0
        %2721 = vmatpush1.msra.mxu0 0.0
        %2722 = vmatprep.subr.mxu0 0.0
        %2723 = vmatpush1.msra.mxu0 0.0
        %2724 = vmatprep.subr.mxu0 0.0
        %2725 = vmatpush1.msra.mxu0 0.0
        %2726 = vmatprep.subr.mxu0 0.0
        %2727 = vmatpush1.msra.mxu0 0.0
        %2728 = vmatprep.subr.mxu0 0.0
        %2729 = vmatpush1.msra.mxu0 0.0
        %2730 = vmatprep.subr.mxu0 0.0
        %2731 = vmatpush1.msra.mxu0 0.0
        %2732 = vmatprep.subr.mxu0 0.0
        %2733 = vmatpush1.msra.mxu0 0.0
        %2734 = vmatprep.subr.mxu0 0.0
        %2735 = vmatpush1.msra.mxu0 0.0
        %2736 = vmatprep.subr.mxu0 0.0
        %2737 = vmatpush1.msra.mxu0 0.0
        %2738 = vmatprep.subr.mxu0 0.0
        %2739 = vmatpush1.msra.mxu0 0.0
        %2740 = vmatprep.mubr.f32.mxu0 0.0
        %2741 = vmatmul.mubr.f32.gmra.mrb[0].mxu0 %v2674
        %v2742 = vpop.f32.mrb[0].mxu0
        %v2743 = vadd.f32 %v2672, %v2742
        %v2744 = vpop.f32.mrb[0].mxu0
        %2745 = vdwg.mxu0
        %s2746 = scalar_lea.vmem %s360, 16 [#allocation2]
        %v2747 = vld [vmem:[%s2746] sm:$0xff]
        %v2748 = vadd.f32 %v2743, %v2747
        %v2749 = vxor.u32 %v2748, 2147483648
        %v2750 = vmul.f32 %v2749, 1.442695
        %v2751 = vpow.pop %v2750
        %v2752 = vadd.f32 %v2751, 1.0
        %v2753 = vrcp.pop %v2752
        %v2754 = vmul.f32 1.0, %v2753
        %v2755 = vtanh.pop %v2748
        %v2756 = vmul.f32 %v2754, %v2014
        %2758 = vrot.lane.b32.xlu0 %v2755, 64
        %v2759 = vpop.permute.xlu0 %2758
        %v2761 = vmul.f32 %v2754, %v2759
        %2763 = vrot.lane.b32.xlu0 %v2761, 32
        %v2764 = vpop.permute.xlu0 %2763
        %v2766 = vadd.f32 %v2756, %v2764
        %v2767 = vtanh.pop %v2766
        %2769 = vrot.lane.b32.xlu0 %v2767, 64
        %v2770 = vpop.permute.xlu0 %2769
        %v2772 = vmul.f32 %v2754, %v2770
        %2774 = vrot.lane.b32.xlu0 %v2772, 32
        %v2775 = vpop.permute.xlu0 %2774
        %v2776 = vsel %vm422, %v2775, 0
        %2778 = vmatprep.subr.mxu0 0.0
        %2779 = vmatpush1.msra.mxu0 %v564
        %2780 = vmatprep.subr.mxu0 0.0
        %2781 = vmatpush1.msra.mxu0 %v565
        %2782 = vmatprep.subr.mxu0 0.0
        %2783 = vmatpush1.msra.mxu0 %v566
        %2784 = vmatprep.subr.mxu0 0.0
        %2785 = vmatpush1.msra.mxu0 %v567
        %2786 = vmatprep.subr.mxu0 0.0
        %2787 = vmatpush1.msra.mxu0 0.0
        %2788 = vmatprep.subr.mxu0 0.0
        %2789 = vmatpush1.msra.mxu0 0.0
        %2790 = vmatprep.subr.mxu0 0.0
        %2791 = vmatpush1.msra.mxu0 0.0
        %2792 = vmatprep.subr.mxu0 0.0
        %2793 = vmatpush1.msra.mxu0 0.0
        %2794 = vmatprep.subr.mxu0 0.0
        %2795 = vmatpush1.msra.mxu0 0.0
        %2796 = vmatprep.subr.mxu0 0.0
        %2797 = vmatpush1.msra.mxu0 0.0
        %2798 = vmatprep.subr.mxu0 0.0
        %2799 = vmatpush1.msra.mxu0 0.0
        %2800 = vmatprep.subr.mxu0 0.0
        %2801 = vmatpush1.msra.mxu0 0.0
        %2802 = vmatprep.subr.mxu0 0.0
        %2803 = vmatpush1.msra.mxu0 0.0
        %2804 = vmatprep.subr.mxu0 0.0
        %2805 = vmatpush1.msra.mxu0 0.0
        %2806 = vmatprep.subr.mxu0 0.0
        %2807 = vmatpush1.msra.mxu0 0.0
        %2808 = vmatprep.subr.mxu0 0.0
        %2809 = vmatpush1.msra.mxu0 0.0
        %2810 = vmatprep.subr.mxu0 0.0
        %2811 = vmatpush1.msra.mxu0 0.0
        %2812 = vmatprep.subr.mxu0 0.0
        %2813 = vmatpush1.msra.mxu0 0.0
        %2814 = vmatprep.subr.mxu0 0.0
        %2815 = vmatpush1.msra.mxu0 0.0
        %2816 = vmatprep.subr.mxu0 0.0
        %2817 = vmatpush1.msra.mxu0 0.0
        %2818 = vmatprep.subr.mxu0 0.0
        %2819 = vmatpush1.msra.mxu0 0.0
        %2820 = vmatprep.subr.mxu0 0.0
        %2821 = vmatpush1.msra.mxu0 0.0
        %2822 = vmatprep.subr.mxu0 0.0
        %2823 = vmatpush1.msra.mxu0 0.0
        %2824 = vmatprep.subr.mxu0 0.0
        %2825 = vmatpush1.msra.mxu0 0.0
        %2826 = vmatprep.subr.mxu0 0.0
        %2827 = vmatpush1.msra.mxu0 0.0
        %2828 = vmatprep.subr.mxu0 0.0
        %2829 = vmatpush1.msra.mxu0 0.0
        %2830 = vmatprep.subr.mxu0 0.0
        %2831 = vmatpush1.msra.mxu0 0.0
        %2832 = vmatprep.subr.mxu0 0.0
        %2833 = vmatpush1.msra.mxu0 0.0
        %2834 = vmatprep.subr.mxu0 0.0
        %2835 = vmatpush1.msra.mxu0 0.0
        %2836 = vmatprep.subr.mxu0 0.0
        %2837 = vmatpush1.msra.mxu0 0.0
        %2838 = vmatprep.subr.mxu0 0.0
        %2839 = vmatpush1.msra.mxu0 0.0
        %2840 = vmatprep.subr.mxu0 0.0
        %2841 = vmatpush1.msra.mxu0 0.0
        %2842 = vmatprep.mubr.f32.mxu0 0.0
        %2843 = vmatmul.mubr.f32.gmra.mrb[0].mxu0 %v2776
        %v2844 = vpop.f32.mrb[0].mxu0
        %v2845 = vadd.f32 %v580, %v2844
        %v2846 = vpop.f32.mrb[0].mxu0
        %2847 = vdwg.mxu0
        %s2848 = scalar_lea.vmem %s396, 16 [#allocation3]
        %2849 = vst [vmem:[%s2848] sm:$0xff] %v2845
        %2850 = vmatprep.subr.mxu0 %v553
        %2851 = vmatpush1.msra.mxu0 %v552
        %2852 = vmatprep.subr.mxu0 %v555
        %2853 = vmatpush1.msra.mxu0 %v554
        %2854 = vmatprep.subr.mxu0 %v557
        %2855 = vmatpush1.msra.mxu0 %v556
        %2856 = vmatprep.subr.mxu0 %v559
        %2857 = vmatpush1.msra.mxu0 %v558
        %2858 = vmatprep.subr.mxu0 0.0
        %2859 = vmatpush1.msra.mxu0 0.0
        %2860 = vmatprep.subr.mxu0 0.0
        %2861 = vmatpush1.msra.mxu0 0.0
        %2862 = vmatprep.subr.mxu0 0.0
        %2863 = vmatpush1.msra.mxu0 0.0
        %2864 = vmatprep.subr.mxu0 0.0
        %2865 = vmatpush1.msra.mxu0 0.0
        %2866 = vmatprep.subr.mxu0 0.0
        %2867 = vmatpush1.msra.mxu0 0.0
        %2868 = vmatprep.subr.mxu0 0.0
        %2869 = vmatpush1.msra.mxu0 0.0
        %2870 = vmatprep.subr.mxu0 0.0
        %2871 = vmatpush1.msra.mxu0 0.0
        %2872 = vmatprep.subr.mxu0 0.0
        %2873 = vmatpush1.msra.mxu0 0.0
        %2874 = vmatprep.subr.mxu0 0.0
        %2875 = vmatpush1.msra.mxu0 0.0
        %2876 = vmatprep.subr.mxu0 0.0
        %2877 = vmatpush1.msra.mxu0 0.0
        %2878 = vmatprep.subr.mxu0 0.0
        %2879 = vmatpush1.msra.mxu0 0.0
        %2880 = vmatprep.subr.mxu0 0.0
        %2881 = vmatpush1.msra.mxu0 0.0
        %2882 = vmatprep.subr.mxu0 0.0
        %2883 = vmatpush1.msra.mxu0 0.0
        %2884 = vmatprep.subr.mxu0 0.0
        %2885 = vmatpush1.msra.mxu0 0.0
        %2886 = vmatprep.subr.mxu0 0.0
        %2887 = vmatpush1.msra.mxu0 0.0
        %2888 = vmatprep.subr.mxu0 0.0
        %2889 = vmatpush1.msra.mxu0 0.0
        %2890 = vmatprep.subr.mxu0 0.0
        %2891 = vmatpush1.msra.mxu0 0.0
        %2892 = vmatprep.subr.mxu0 0.0
        %2893 = vmatpush1.msra.mxu0 0.0
        %2894 = vmatprep.subr.mxu0 0.0
        %2895 = vmatpush1.msra.mxu0 0.0
        %2896 = vmatprep.subr.mxu0 0.0
        %2897 = vmatpush1.msra.mxu0 0.0
        %2898 = vmatprep.subr.mxu0 0.0
        %2899 = vmatpush1.msra.mxu0 0.0
        %2900 = vmatprep.subr.mxu0 0.0
        %2901 = vmatpush1.msra.mxu0 0.0
        %2902 = vmatprep.subr.mxu0 0.0
        %2903 = vmatpush1.msra.mxu0 0.0
        %2904 = vmatprep.subr.mxu0 0.0
        %2905 = vmatpush1.msra.mxu0 0.0
        %2906 = vmatprep.subr.mxu0 0.0
        %2907 = vmatpush1.msra.mxu0 0.0
        %2908 = vmatprep.subr.mxu0 0.0
        %2909 = vmatpush1.msra.mxu0 0.0
        %2910 = vmatprep.subr.mxu0 0.0
        %2911 = vmatpush1.msra.mxu0 0.0
        %2912 = vmatprep.subr.mxu0 0.0
        %2913 = vmatpush1.msra.mxu0 0.0
        %2914 = vmatprep.mubr.f32.mxu0 0.0
        %2915 = vmatmul.mubr.f32.gmra.mrb[0].mxu0 %v2776
        %v2916 = vpop.f32.mrb[0].mxu0
        %v2917 = vadd.f32 0.0, %v2916
        %v2918 = vpop.f32.mrb[0].mxu0
        %v2919 = vadd.f32 0.0, %v2918
        %2920 = vdwg.mxu0
        %v2922 = vcombine.high %v2917, %v2917
        %v2924 = vunpack.c.l.s4 1966171168
        %v2925 = vunpack.c.0.s8 %v2924
        %v2926 = vlaneseq
        %v2927 = vshrl.u32 %v2926, 7
        %v2928 = vsub.s32 %v2925, %v2927
        %v2929 = vrot.slane %v2917, %v2928
        %v2931 = vunpack.c.l.s4 1966171168
        %v2932 = vunpack.c.0.s8 %v2931
        %v2933 = vlaneseq
        %v2934 = vshrl.u32 %v2933, 7
        %v2935 = vsub.s32 %v2932, %v2934
        %v2936 = vrot.slane %v2922, %v2935
        %v2937 = vcombine.high %v2929, %v2929
        %v2938 = vcombine.high %v2936, %v2936
        %v2940 = vunpack.c.l.s4 1966171168
        %v2941 = vunpack.c.0.s8 %v2940
        %v2942 = vlaneseq
        %v2943 = vshrl.u32 %v2942, 7
        %v2944 = vsub.s32 %v2941, %v2943
        %v2945 = vrot.slane %v2929, %v2944
        %v2947 = vunpack.c.l.s4 1966171168
        %v2948 = vunpack.c.0.s8 %v2947
        %v2949 = vlaneseq
        %v2950 = vshrl.u32 %v2949, 7
        %v2951 = vsub.s32 %v2948, %v2950
        %v2952 = vrot.slane %v2936, %v2951
        %v2954 = vunpack.c.l.s4 1966171168
        %v2955 = vunpack.c.0.s8 %v2954
        %v2956 = vlaneseq
        %v2957 = vshrl.u32 %v2956, 7
        %v2958 = vsub.s32 %v2955, %v2957
        %v2959 = vrot.slane %v2937, %v2958
        %v2961 = vunpack.c.l.s4 1966171168
        %v2962 = vunpack.c.0.s8 %v2961
        %v2963 = vlaneseq
        %v2964 = vshrl.u32 %v2963, 7
        %v2965 = vsub.s32 %v2962, %v2964
        %v2966 = vrot.slane %v2938, %v2965
        %v2967 = vcombine.high %v2945, %v2945
        %v2968 = vcombine.high %v2952, %v2952
        %v2969 = vcombine.high %v2959, %v2959
        %v2970 = vcombine.high %v2966, %v2966
        %v2971 = vlaneseq
        %v2972 = vshrl.u32 %v2971, 7
        %v2973 = vsub.s32 0, %v2972
        %v2974 = vrot.slane %v2945, %v2973
        %v2975 = vlaneseq
        %v2976 = vshrl.u32 %v2975, 7
        %v2977 = vsub.s32 0, %v2976
        %v2978 = vrot.slane %v2959, %v2977
        %v2979 = vlaneseq
        %v2980 = vshrl.u32 %v2979, 7
        %v2981 = vsub.s32 0, %v2980
        %v2982 = vrot.slane %v2967, %v2981
        %v2983 = vlaneseq
        %v2984 = vshrl.u32 %v2983, 7
        %v2985 = vsub.s32 0, %v2984
        %v2986 = vrot.slane %v2969, %v2985
        %v2987 = vlaneseq
        %v2988 = vshrl.u32 %v2987, 7
        %v2989 = vsub.s32 0, %v2988
        %v2990 = vrot.slane %v2952, %v2989
        %v2991 = vlaneseq
        %v2992 = vshrl.u32 %v2991, 7
        %v2993 = vsub.s32 0, %v2992
        %v2994 = vrot.slane %v2966, %v2993
        %v2995 = vlaneseq
        %v2996 = vshrl.u32 %v2995, 7
        %v2997 = vsub.s32 0, %v2996
        %v2998 = vrot.slane %v2968, %v2997
        %v2999 = vlaneseq
        %v3000 = vshrl.u32 %v2999, 7
        %v3001 = vsub.s32 0, %v3000
        %v3002 = vrot.slane %v2970, %v3001
        %v3011 = vadd.f32 %v514, %v2974
        %v3012 = vadd.f32 %v519, %v2978
        %v3013 = vadd.f32 %v524, %v2982
        %v3014 = vadd.f32 %v529, %v2986
        %v3015 = vadd.f32 %v534, %v2990
        %v3016 = vadd.f32 %v539, %v2994
        %v3017 = vadd.f32 %v544, %v2998
        %v3018 = vadd.f32 %v549, %v3002
        %v3019 = vtanh.pop %v3011
        %v3020 = vtanh.pop %v3012
        %v3021 = vtanh.pop %v3013
        %v3022 = vtanh.pop %v3014
        %v3023 = vtanh.pop %v3015
        %v3024 = vtanh.pop %v3016
        %v3025 = vtanh.pop %v3017
        %v3026 = vtanh.pop %v3018
        %v3027 = vmul.f32 %v3019, %v573
        %v3028 = vmul.f32 %v3020, %v573
        %v3029 = vmul.f32 %v3021, %v573
        %v3030 = vmul.f32 %v3022, %v573
        %v3031 = vmul.f32 %v3023, %v573
        %v3032 = vmul.f32 %v3024, %v573
        %v3033 = vmul.f32 %v3025, %v573
        %v3034 = vmul.f32 %v3026, %v573
        %v3035 = vsel %vm422, %v3027, 0.0
        %3036 = vadd.xlane.f32.xlu0 %v3035
        %v3037 = vpop.xlane.xlu0 %3036
        %v3038 = vsel %vm422, %v3028, 0.0
        %3039 = vadd.xlane.f32.xlu0 %v3038
        %v3040 = vpop.xlane.xlu0 %3039
        %v3041 = vsel %vm422, %v3029, 0.0
        %3042 = vadd.xlane.f32.xlu0 %v3041
        %v3043 = vpop.xlane.xlu0 %3042
        %v3044 = vsel %vm422, %v3030, 0.0
        %3045 = vadd.xlane.f32.xlu0 %v3044
        %v3046 = vpop.xlane.xlu0 %3045
        %v3047 = vsel %vm422, %v3031, 0.0
        %3048 = vadd.xlane.f32.xlu0 %v3047
        %v3049 = vpop.xlane.xlu0 %3048
        %v3050 = vsel %vm422, %v3032, 0.0
        %3051 = vadd.xlane.f32.xlu0 %v3050
        %v3052 = vpop.xlane.xlu0 %3051
        %v3053 = vsel %vm422, %v3033, 0.0
        %3054 = vadd.xlane.f32.xlu0 %v3053
        %v3055 = vpop.xlane.xlu0 %3054
        %v3056 = vsel %vm422, %v3034, 0.0
        %3057 = vadd.xlane.f32.xlu0 %v3056
        %v3058 = vpop.xlane.xlu0 %3057
        %v3067 = vlaneseq
        %v3068 = vshrl.u32 %v3067, 7
        %v3069 = vsub.s32 %v803, %v3068
        %v3070 = vrot.slane %v3037, %v3069
        %v3071 = vlaneseq
        %v3072 = vshrl.u32 %v3071, 7
        %v3073 = vsub.s32 %v803, %v3072
        %v3074 = vrot.slane %v3040, %v3073
        %v3075 = vlaneseq
        %v3076 = vshrl.u32 %v3075, 7
        %v3077 = vsub.s32 %v803, %v3076
        %v3078 = vrot.slane %v3043, %v3077
        %v3079 = vlaneseq
        %v3080 = vshrl.u32 %v3079, 7
        %v3081 = vsub.s32 %v803, %v3080
        %v3082 = vrot.slane %v3046, %v3081
        %v3083 = vlaneseq
        %v3084 = vshrl.u32 %v3083, 7
        %v3085 = vsub.s32 %v803, %v3084
        %v3086 = vrot.slane %v3049, %v3085
        %v3087 = vlaneseq
        %v3088 = vshrl.u32 %v3087, 7
        %v3089 = vsub.s32 %v803, %v3088
        %v3090 = vrot.slane %v3052, %v3089
        %v3091 = vlaneseq
        %v3092 = vshrl.u32 %v3091, 7
        %v3093 = vsub.s32 %v803, %v3092
        %v3094 = vrot.slane %v3055, %v3093
        %v3095 = vlaneseq
        %v3096 = vshrl.u32 %v3095, 7
        %v3097 = vsub.s32 %v803, %v3096
        %v3098 = vrot.slane %v3058, %v3097
        %v3099 = vsel %vm836, %v3074, %v3070
        %v3100 = vsel %vm838, %v3078, %v3099
        %v3101 = vsel %vm840, %v3082, %v3100
        %v3102 = vsel %vm842, %v3086, %v3101
        %v3103 = vsel %vm844, %v3090, %v3102
        %v3104 = vsel %vm846, %v3094, %v3103
        %v3105 = vsel %vm848, %v3098, %v3104
        %v3107 = vsel %vm851, %v3105, -inf
        %3108 = vmax.xlane.f32.xlu0 %v3107
        %v3109 = vpop.xlane.xlu0 %3108
        %v3111 = vlaneseq
        %v3112 = vshrl.u32 %v3111, 7
        %v3113 = vsub.s32 0, %v3112
        %v3114 = vrot.slane %v3109, %v3113
        %v3115 = vlaneseq
        %v3116 = vshrl.u32 %v3115, 7
        %v3117 = vsub.s32 1, %v3116
        %v3118 = vrot.slane %v3109, %v3117
        %v3119 = vlaneseq
        %v3120 = vshrl.u32 %v3119, 7
        %v3121 = vsub.s32 2, %v3120
        %v3122 = vrot.slane %v3109, %v3121
        %v3123 = vlaneseq
        %v3124 = vshrl.u32 %v3123, 7
        %v3125 = vsub.s32 3, %v3124
        %v3126 = vrot.slane %v3109, %v3125
        %v3127 = vlaneseq
        %v3128 = vshrl.u32 %v3127, 7
        %v3129 = vsub.s32 4, %v3128
        %v3130 = vrot.slane %v3109, %v3129
        %v3131 = vlaneseq
        %v3132 = vshrl.u32 %v3131, 7
        %v3133 = vsub.s32 5, %v3132
        %v3134 = vrot.slane %v3109, %v3133
        %v3135 = vlaneseq
        %v3136 = vshrl.u32 %v3135, 7
        %v3137 = vsub.s32 6, %v3136
        %v3138 = vrot.slane %v3109, %v3137
        %v3139 = vlaneseq
        %v3140 = vshrl.u32 %v3139, 7
        %v3141 = vsub.s32 7, %v3140
        %v3142 = vrot.slane %v3109, %v3141
        %v3151 = vsub.f32 %v3037, %v3114
        %v3152 = vsub.f32 %v3040, %v3118
        %v3153 = vsub.f32 %v3043, %v3122
        %v3154 = vsub.f32 %v3046, %v3126
        %v3155 = vsub.f32 %v3049, %v3130
        %v3156 = vsub.f32 %v3052, %v3134
        %v3157 = vsub.f32 %v3055, %v3138
        %v3158 = vsub.f32 %v3058, %v3142
        %v3159 = vmul.f32 %v3151, 1.442695
        %v3160 = vpow.pop %v3159
        %v3161 = vmul.f32 %v3152, 1.442695
        %v3162 = vpow.pop %v3161
        %v3163 = vmul.f32 %v3153, 1.442695
        %v3164 = vpow.pop %v3163
        %v3165 = vmul.f32 %v3154, 1.442695
        %v3166 = vpow.pop %v3165
        %v3167 = vmul.f32 %v3155, 1.442695
        %v3168 = vpow.pop %v3167
        %v3169 = vmul.f32 %v3156, 1.442695
        %v3170 = vpow.pop %v3169
        %v3171 = vmul.f32 %v3157, 1.442695
        %v3172 = vpow.pop %v3171
        %v3173 = vmul.f32 %v3158, 1.442695
        %v3174 = vpow.pop %v3173
        %3183 = vset.pattern.permute.xlu0 0
        %3184 = vperm.xlu0 %3183, %v3160
        %v3185 = vpop.permute.xlu0 %3184
        %3186 = vset.pattern.permute.xlu0 0
        %3187 = vperm.xlu0 %3186, %v3162
        %v3188 = vpop.permute.xlu0 %3187
        %3189 = vset.pattern.permute.xlu0 0
        %3190 = vperm.xlu0 %3189, %v3164
        %v3191 = vpop.permute.xlu0 %3190
        %3192 = vset.pattern.permute.xlu0 0
        %3193 = vperm.xlu0 %3192, %v3166
        %v3194 = vpop.permute.xlu0 %3193
        %3195 = vset.pattern.permute.xlu0 0
        %3196 = vperm.xlu0 %3195, %v3168
        %v3197 = vpop.permute.xlu0 %3196
        %3198 = vset.pattern.permute.xlu0 0
        %3199 = vperm.xlu0 %3198, %v3170
        %v3200 = vpop.permute.xlu0 %3199
        %3201 = vset.pattern.permute.xlu0 0
        %3202 = vperm.xlu0 %3201, %v3172
        %v3203 = vpop.permute.xlu0 %3202
        %3204 = vset.pattern.permute.xlu0 0
        %3205 = vperm.xlu0 %3204, %v3174
        %v3206 = vpop.permute.xlu0 %3205
        %v3207 = vlaneseq
        %v3208 = vshrl.u32 %v3207, 7
        %v3209 = vsub.s32 %v803, %v3208
        %v3210 = vrot.slane %v3185, %v3209
        %v3211 = vlaneseq
        %v3212 = vshrl.u32 %v3211, 7
        %v3213 = vsub.s32 %v803, %v3212
        %v3214 = vrot.slane %v3188, %v3213
        %v3215 = vlaneseq
        %v3216 = vshrl.u32 %v3215, 7
        %v3217 = vsub.s32 %v803, %v3216
        %v3218 = vrot.slane %v3191, %v3217
        %v3219 = vlaneseq
        %v3220 = vshrl.u32 %v3219, 7
        %v3221 = vsub.s32 %v803, %v3220
        %v3222 = vrot.slane %v3194, %v3221
        %v3223 = vlaneseq
        %v3224 = vshrl.u32 %v3223, 7
        %v3225 = vsub.s32 %v803, %v3224
        %v3226 = vrot.slane %v3197, %v3225
        %v3227 = vlaneseq
        %v3228 = vshrl.u32 %v3227, 7
        %v3229 = vsub.s32 %v803, %v3228
        %v3230 = vrot.slane %v3200, %v3229
        %v3231 = vlaneseq
        %v3232 = vshrl.u32 %v3231, 7
        %v3233 = vsub.s32 %v803, %v3232
        %v3234 = vrot.slane %v3203, %v3233
        %v3235 = vlaneseq
        %v3236 = vshrl.u32 %v3235, 7
        %v3237 = vsub.s32 %v803, %v3236
        %v3238 = vrot.slane %v3206, %v3237
        %v3239 = vsel %vm836, %v3214, %v3210
        %v3240 = vsel %vm838, %v3218, %v3239
        %v3241 = vsel %vm840, %v3222, %v3240
        %v3242 = vsel %vm842, %v3226, %v3241
        %v3243 = vsel %vm844, %v3230, %v3242
        %v3244 = vsel %vm846, %v3234, %v3243
        %v3245 = vsel %vm848, %v3238, %v3244
        %v3247 = vsel %vm851, %v3245, 0.0
        %3248 = vadd.xlane.f32.xlu0 %v3247
        %v3249 = vpop.xlane.xlu0 %3248
        %v3250 = vrcp.pop %v3249
        %v3252 = vlaneseq
        %v3253 = vshrl.u32 %v3252, 7
        %v3254 = vsub.s32 0, %v3253
        %v3255 = vrot.slane %v3250, %v3254
        %v3256 = vlaneseq
        %v3257 = vshrl.u32 %v3256, 7
        %v3258 = vsub.s32 1, %v3257
        %v3259 = vrot.slane %v3250, %v3258
        %v3260 = vlaneseq
        %v3261 = vshrl.u32 %v3260, 7
        %v3262 = vsub.s32 2, %v3261
        %v3263 = vrot.slane %v3250, %v3262
        %v3264 = vlaneseq
        %v3265 = vshrl.u32 %v3264, 7
        %v3266 = vsub.s32 3, %v3265
        %v3267 = vrot.slane %v3250, %v3266
        %v3268 = vlaneseq
        %v3269 = vshrl.u32 %v3268, 7
        %v3270 = vsub.s32 4, %v3269
        %v3271 = vrot.slane %v3250, %v3270
        %v3272 = vlaneseq
        %v3273 = vshrl.u32 %v3272, 7
        %v3274 = vsub.s32 5, %v3273
        %v3275 = vrot.slane %v3250, %v3274
        %v3276 = vlaneseq
        %v3277 = vshrl.u32 %v3276, 7
        %v3278 = vsub.s32 6, %v3277
        %v3279 = vrot.slane %v3250, %v3278
        %v3280 = vlaneseq
        %v3281 = vshrl.u32 %v3280, 7
        %v3282 = vsub.s32 7, %v3281
        %v3283 = vrot.slane %v3250, %v3282
        %v3292 = vmul.f32 %v3160, %v3255
        %v3293 = vmul.f32 %v3162, %v3259
        %v3294 = vmul.f32 %v3164, %v3263
        %v3295 = vmul.f32 %v3166, %v3267
        %v3296 = vmul.f32 %v3168, %v3271
        %v3297 = vmul.f32 %v3170, %v3275
        %v3298 = vmul.f32 %v3172, %v3279
        %v3299 = vmul.f32 %v3174, %v3283
        %3301 = vset.pattern.permute.xlu0 0
        %3302 = vperm.xlu0 %3301, %v3292
        %v3303 = vpop.permute.xlu0 %3302
        %3306 = vset.pattern.permute.xlu0 0
        %3307 = vperm.xlu0 %3306, %v3293
        %v3308 = vpop.permute.xlu0 %3307
        %3311 = vset.pattern.permute.xlu0 0
        %3312 = vperm.xlu0 %3311, %v3294
        %v3313 = vpop.permute.xlu0 %3312
        %3316 = vset.pattern.permute.xlu0 0
        %3317 = vperm.xlu0 %3316, %v3295
        %v3318 = vpop.permute.xlu0 %3317
        %3321 = vset.pattern.permute.xlu0 0
        %3322 = vperm.xlu0 %3321, %v3296
        %v3323 = vpop.permute.xlu0 %3322
        %3326 = vset.pattern.permute.xlu0 0
        %3327 = vperm.xlu0 %3326, %v3297
        %v3328 = vpop.permute.xlu0 %3327
        %3331 = vset.pattern.permute.xlu0 0
        %3332 = vperm.xlu0 %3331, %v3298
        %v3333 = vpop.permute.xlu0 %3332
        %3336 = vset.pattern.permute.xlu0 0
        %3337 = vperm.xlu0 %3336, %v3299
        %v3338 = vpop.permute.xlu0 %3337
        %v3340 = vmul.f32 %v3303, %v403
        %v3341 = vmul.f32 %v3308, %v404
        %v3342 = vmul.f32 %v3313, %v405
        %v3343 = vmul.f32 %v3318, %v406
        %v3344 = vmul.f32 %v3323, %v407
        %v3345 = vmul.f32 %v3328, %v408
        %v3346 = vmul.f32 %v3333, %v409
        %v3347 = vmul.f32 %v3338, %v410
        %v3348 = vsel %vm422, %v3340, 0.0
        %v3349 = vrot.slane %v3348, 4
        %v3350 = vadd.f32 %v3348, %v3349
        %v3351 = vrot.slane %v3350, 2
        %v3352 = vadd.f32 %v3350, %v3351
        %v3353 = vrot.slane %v3352, 1
        %v3354 = vadd.f32 %v3352, %v3353
        %v3355 = vsel %vm422, %v3341, 0.0
        %v3356 = vrot.slane %v3355, 4
        %v3357 = vadd.f32 %v3355, %v3356
        %v3358 = vrot.slane %v3357, 2
        %v3359 = vadd.f32 %v3357, %v3358
        %v3360 = vrot.slane %v3359, 1
        %v3361 = vadd.f32 %v3359, %v3360
        %v3362 = vsel %vm422, %v3342, 0.0
        %v3363 = vrot.slane %v3362, 4
        %v3364 = vadd.f32 %v3362, %v3363
        %v3365 = vrot.slane %v3364, 2
        %v3366 = vadd.f32 %v3364, %v3365
        %v3367 = vrot.slane %v3366, 1
        %v3368 = vadd.f32 %v3366, %v3367
        %v3369 = vsel %vm422, %v3343, 0.0
        %v3370 = vrot.slane %v3369, 4
        %v3371 = vadd.f32 %v3369, %v3370
        %v3372 = vrot.slane %v3371, 2
        %v3373 = vadd.f32 %v3371, %v3372
        %v3374 = vrot.slane %v3373, 1
        %v3375 = vadd.f32 %v3373, %v3374
        %v3376 = vsel %vm422, %v3344, 0.0
        %v3377 = vrot.slane %v3376, 4
        %v3378 = vadd.f32 %v3376, %v3377
        %v3379 = vrot.slane %v3378, 2
        %v3380 = vadd.f32 %v3378, %v3379
        %v3381 = vrot.slane %v3380, 1
        %v3382 = vadd.f32 %v3380, %v3381
        %v3383 = vsel %vm422, %v3345, 0.0
        %v3384 = vrot.slane %v3383, 4
        %v3385 = vadd.f32 %v3383, %v3384
        %v3386 = vrot.slane %v3385, 2
        %v3387 = vadd.f32 %v3385, %v3386
        %v3388 = vrot.slane %v3387, 1
        %v3389 = vadd.f32 %v3387, %v3388
        %v3390 = vsel %vm422, %v3346, 0.0
        %v3391 = vrot.slane %v3390, 4
        %v3392 = vadd.f32 %v3390, %v3391
        %v3393 = vrot.slane %v3392, 2
        %v3394 = vadd.f32 %v3392, %v3393
        %v3395 = vrot.slane %v3394, 1
        %v3396 = vadd.f32 %v3394, %v3395
        %v3397 = vsel %vm422, %v3347, 0.0
        %v3398 = vrot.slane %v3397, 4
        %v3399 = vadd.f32 %v3397, %v3398
        %v3400 = vrot.slane %v3399, 2
        %v3401 = vadd.f32 %v3399, %v3400
        %v3402 = vrot.slane %v3401, 1
        %v3403 = vadd.f32 %v3401, %v3402
        %v3412 = vsel %vm836, %v3361, %v3354
        %v3413 = vsel %vm838, %v3368, %v3412
        %v3414 = vsel %vm840, %v3375, %v3413
        %v3415 = vsel %vm842, %v3382, %v3414
        %v3416 = vsel %vm844, %v3389, %v3415
        %v3417 = vsel %vm846, %v3396, %v3416
        %v3418 = vsel %vm848, %v3403, %v3417
        %3420 = vrot.lane.b32.xlu0 %v2917, 96
        %v3421 = vpop.permute.xlu0 %3420
        %3422 = vrot.lane.b32.xlu0 %v2919, 96
        %v3423 = vpop.permute.xlu0 %3422
        %v3424 = vsel %vm1169, %v3421, %v3423
        %v3426 = vsel %vm422, %v3418, 0
        %3428 = vmatprep.subr.mxu0 0.0
        %3429 = vmatpush1.msra.mxu0 %v560
        %3430 = vmatprep.subr.mxu0 0.0
        %3431 = vmatpush1.msra.mxu0 %v561
        %3432 = vmatprep.subr.mxu0 0.0
        %3433 = vmatpush1.msra.mxu0 %v562
        %3434 = vmatprep.subr.mxu0 0.0
        %3435 = vmatpush1.msra.mxu0 %v563
        %3436 = vmatprep.subr.mxu0 0.0
        %3437 = vmatpush1.msra.mxu0 0.0
        %3438 = vmatprep.subr.mxu0 0.0
        %3439 = vmatpush1.msra.mxu0 0.0
        %3440 = vmatprep.subr.mxu0 0.0
        %3441 = vmatpush1.msra.mxu0 0.0
        %3442 = vmatprep.subr.mxu0 0.0
        %3443 = vmatpush1.msra.mxu0 0.0
        %3444 = vmatprep.subr.mxu0 0.0
        %3445 = vmatpush1.msra.mxu0 0.0
        %3446 = vmatprep.subr.mxu0 0.0
        %3447 = vmatpush1.msra.mxu0 0.0
        %3448 = vmatprep.subr.mxu0 0.0
        %3449 = vmatpush1.msra.mxu0 0.0
        %3450 = vmatprep.subr.mxu0 0.0
        %3451 = vmatpush1.msra.mxu0 0.0
        %3452 = vmatprep.subr.mxu0 0.0
        %3453 = vmatpush1.msra.mxu0 0.0
        %3454 = vmatprep.subr.mxu0 0.0
        %3455 = vmatpush1.msra.mxu0 0.0
        %3456 = vmatprep.subr.mxu0 0.0
        %3457 = vmatpush1.msra.mxu0 0.0
        %3458 = vmatprep.subr.mxu0 0.0
        %3459 = vmatpush1.msra.mxu0 0.0
        %3460 = vmatprep.subr.mxu0 0.0
        %3461 = vmatpush1.msra.mxu0 0.0
        %3462 = vmatprep.subr.mxu0 0.0
        %3463 = vmatpush1.msra.mxu0 0.0
        %3464 = vmatprep.subr.mxu0 0.0
        %3465 = vmatpush1.msra.mxu0 0.0
        %3466 = vmatprep.subr.mxu0 0.0
        %3467 = vmatpush1.msra.mxu0 0.0
        %3468 = vmatprep.subr.mxu0 0.0
        %3469 = vmatpush1.msra.mxu0 0.0
        %3470 = vmatprep.subr.mxu0 0.0
        %3471 = vmatpush1.msra.mxu0 0.0
        %3472 = vmatprep.subr.mxu0 0.0
        %3473 = vmatpush1.msra.mxu0 0.0
        %3474 = vmatprep.subr.mxu0 0.0
        %3475 = vmatpush1.msra.mxu0 0.0
        %3476 = vmatprep.subr.mxu0 0.0
        %3477 = vmatpush1.msra.mxu0 0.0
        %3478 = vmatprep.subr.mxu0 0.0
        %3479 = vmatpush1.msra.mxu0 0.0
        %3480 = vmatprep.subr.mxu0 0.0
        %3481 = vmatpush1.msra.mxu0 0.0
        %3482 = vmatprep.subr.mxu0 0.0
        %3483 = vmatpush1.msra.mxu0 0.0
        %3484 = vmatprep.subr.mxu0 0.0
        %3485 = vmatpush1.msra.mxu0 0.0
        %3486 = vmatprep.subr.mxu0 0.0
        %3487 = vmatpush1.msra.mxu0 0.0
        %3488 = vmatprep.subr.mxu0 0.0
        %3489 = vmatpush1.msra.mxu0 0.0
        %3490 = vmatprep.subr.mxu0 0.0
        %3491 = vmatpush1.msra.mxu0 0.0
        %3492 = vmatprep.mubr.f32.mxu0 0.0
        %3493 = vmatmul.mubr.f32.gmra.mrb[0].mxu0 %v3426
        %v3494 = vpop.f32.mrb[0].mxu0
        %v3495 = vadd.f32 %v3424, %v3494
        %v3496 = vpop.f32.mrb[0].mxu0
        %3497 = vdwg.mxu0
        %s3498 = scalar_lea.vmem %s360, 24 [#allocation2]
        %v3499 = vld [vmem:[%s3498] sm:$0xff]
        %v3500 = vadd.f32 %v3495, %v3499
        %v3501 = vxor.u32 %v3500, 2147483648
        %v3502 = vmul.f32 %v3501, 1.442695
        %v3503 = vpow.pop %v3502
        %v3504 = vadd.f32 %v3503, 1.0
        %v3505 = vrcp.pop %v3504
        %v3506 = vmul.f32 1.0, %v3505
        %v3507 = vtanh.pop %v3500
        %v3508 = vmul.f32 %v3506, %v2766
        %3510 = vrot.lane.b32.xlu0 %v3507, 64
        %v3511 = vpop.permute.xlu0 %3510
        %v3513 = vmul.f32 %v3506, %v3511
        %3515 = vrot.lane.b32.xlu0 %v3513, 32
        %v3516 = vpop.permute.xlu0 %3515
        %v3518 = vadd.f32 %v3508, %v3516
        %v3519 = vtanh.pop %v3518
        %3521 = vrot.lane.b32.xlu0 %v3519, 64
        %v3522 = vpop.permute.xlu0 %3521
        %v3524 = vmul.f32 %v3506, %v3522
        %3526 = vrot.lane.b32.xlu0 %v3524, 32
        %v3527 = vpop.permute.xlu0 %3526
        %v3528 = vsel %vm422, %v3527, 0
        %3530 = vmatprep.subr.mxu0 0.0
        %3531 = vmatpush1.msra.mxu0 %v564
        %3532 = vmatprep.subr.mxu0 0.0
        %3533 = vmatpush1.msra.mxu0 %v565
        %3534 = vmatprep.subr.mxu0 0.0
        %3535 = vmatpush1.msra.mxu0 %v566
        %3536 = vmatprep.subr.mxu0 0.0
        %3537 = vmatpush1.msra.mxu0 %v567
        %3538 = vmatprep.subr.mxu0 0.0
        %3539 = vmatpush1.msra.mxu0 0.0
        %3540 = vmatprep.subr.mxu0 0.0
        %3541 = vmatpush1.msra.mxu0 0.0
        %3542 = vmatprep.subr.mxu0 0.0
        %3543 = vmatpush1.msra.mxu0 0.0
        %3544 = vmatprep.subr.mxu0 0.0
        %3545 = vmatpush1.msra.mxu0 0.0
        %3546 = vmatprep.subr.mxu0 0.0
        %3547 = vmatpush1.msra.mxu0 0.0
        %3548 = vmatprep.subr.mxu0 0.0
        %3549 = vmatpush1.msra.mxu0 0.0
        %3550 = vmatprep.subr.mxu0 0.0
        %3551 = vmatpush1.msra.mxu0 0.0
        %3552 = vmatprep.subr.mxu0 0.0
        %3553 = vmatpush1.msra.mxu0 0.0
        %3554 = vmatprep.subr.mxu0 0.0
        %3555 = vmatpush1.msra.mxu0 0.0
        %3556 = vmatprep.subr.mxu0 0.0
        %3557 = vmatpush1.msra.mxu0 0.0
        %3558 = vmatprep.subr.mxu0 0.0
        %3559 = vmatpush1.msra.mxu0 0.0
        %3560 = vmatprep.subr.mxu0 0.0
        %3561 = vmatpush1.msra.mxu0 0.0
        %3562 = vmatprep.subr.mxu0 0.0
        %3563 = vmatpush1.msra.mxu0 0.0
        %3564 = vmatprep.subr.mxu0 0.0
        %3565 = vmatpush1.msra.mxu0 0.0
        %3566 = vmatprep.subr.mxu0 0.0
        %3567 = vmatpush1.msra.mxu0 0.0
        %3568 = vmatprep.subr.mxu0 0.0
        %3569 = vmatpush1.msra.mxu0 0.0
        %3570 = vmatprep.subr.mxu0 0.0
        %3571 = vmatpush1.msra.mxu0 0.0
        %3572 = vmatprep.subr.mxu0 0.0
        %3573 = vmatpush1.msra.mxu0 0.0
        %3574 = vmatprep.subr.mxu0 0.0
        %3575 = vmatpush1.msra.mxu0 0.0
        %3576 = vmatprep.subr.mxu0 0.0
        %3577 = vmatpush1.msra.mxu0 0.0
        %3578 = vmatprep.subr.mxu0 0.0
        %3579 = vmatpush1.msra.mxu0 0.0
        %3580 = vmatprep.subr.mxu0 0.0
        %3581 = vmatpush1.msra.mxu0 0.0
        %3582 = vmatprep.subr.mxu0 0.0
        %3583 = vmatpush1.msra.mxu0 0.0
        %3584 = vmatprep.subr.mxu0 0.0
        %3585 = vmatpush1.msra.mxu0 0.0
        %3586 = vmatprep.subr.mxu0 0.0
        %3587 = vmatpush1.msra.mxu0 0.0
        %3588 = vmatprep.subr.mxu0 0.0
        %3589 = vmatpush1.msra.mxu0 0.0
        %3590 = vmatprep.subr.mxu0 0.0
        %3591 = vmatpush1.msra.mxu0 0.0
        %3592 = vmatprep.subr.mxu0 0.0
        %3593 = vmatpush1.msra.mxu0 0.0
        %3594 = vmatprep.mubr.f32.mxu0 0.0
        %3595 = vmatmul.mubr.f32.gmra.mrb[0].mxu0 %v3528
        %v3596 = vpop.f32.mrb[0].mxu0
        %v3597 = vadd.f32 %v580, %v3596
        %v3598 = vpop.f32.mrb[0].mxu0
        %3599 = vdwg.mxu0
        %s3600 = scalar_lea.vmem %s396, 24 [#allocation3]
        %3601 = vst [vmem:[%s3600] sm:$0xff] %v3597
        %3602 = vmatprep.subr.mxu0 %v553
        %3603 = vmatpush1.msra.mxu0 %v552
        %3604 = vmatprep.subr.mxu0 %v555
        %3605 = vmatpush1.msra.mxu0 %v554
        %3606 = vmatprep.subr.mxu0 %v557
        %3607 = vmatpush1.msra.mxu0 %v556
        %3608 = vmatprep.subr.mxu0 %v559
        %3609 = vmatpush1.msra.mxu0 %v558
        %3610 = vmatprep.subr.mxu0 0.0
        %3611 = vmatpush1.msra.mxu0 0.0
        %3612 = vmatprep.subr.mxu0 0.0
        %3613 = vmatpush1.msra.mxu0 0.0
        %3614 = vmatprep.subr.mxu0 0.0
        %3615 = vmatpush1.msra.mxu0 0.0
        %3616 = vmatprep.subr.mxu0 0.0
        %3617 = vmatpush1.msra.mxu0 0.0
        %3618 = vmatprep.subr.mxu0 0.0
        %3619 = vmatpush1.msra.mxu0 0.0
        %3620 = vmatprep.subr.mxu0 0.0
        %3621 = vmatpush1.msra.mxu0 0.0
        %3622 = vmatprep.subr.mxu0 0.0
        %3623 = vmatpush1.msra.mxu0 0.0
        %3624 = vmatprep.subr.mxu0 0.0
        %3625 = vmatpush1.msra.mxu0 0.0
        %3626 = vmatprep.subr.mxu0 0.0
        %3627 = vmatpush1.msra.mxu0 0.0
        %3628 = vmatprep.subr.mxu0 0.0
        %3629 = vmatpush1.msra.mxu0 0.0
        %3630 = vmatprep.subr.mxu0 0.0
        %3631 = vmatpush1.msra.mxu0 0.0
        %3632 = vmatprep.subr.mxu0 0.0
        %3633 = vmatpush1.msra.mxu0 0.0
        %3634 = vmatprep.subr.mxu0 0.0
        %3635 = vmatpush1.msra.mxu0 0.0
        %3636 = vmatprep.subr.mxu0 0.0
        %3637 = vmatpush1.msra.mxu0 0.0
        %3638 = vmatprep.subr.mxu0 0.0
        %3639 = vmatpush1.msra.mxu0 0.0
        %3640 = vmatprep.subr.mxu0 0.0
        %3641 = vmatpush1.msra.mxu0 0.0
        %3642 = vmatprep.subr.mxu0 0.0
        %3643 = vmatpush1.msra.mxu0 0.0
        %3644 = vmatprep.subr.mxu0 0.0
        %3645 = vmatpush1.msra.mxu0 0.0
        %3646 = vmatprep.subr.mxu0 0.0
        %3647 = vmatpush1.msra.mxu0 0.0
        %3648 = vmatprep.subr.mxu0 0.0
        %3649 = vmatpush1.msra.mxu0 0.0
        %3650 = vmatprep.subr.mxu0 0.0
        %3651 = vmatpush1.msra.mxu0 0.0
        %3652 = vmatprep.subr.mxu0 0.0
        %3653 = vmatpush1.msra.mxu0 0.0
        %3654 = vmatprep.subr.mxu0 0.0
        %3655 = vmatpush1.msra.mxu0 0.0
        %3656 = vmatprep.subr.mxu0 0.0
        %3657 = vmatpush1.msra.mxu0 0.0
        %3658 = vmatprep.subr.mxu0 0.0
        %3659 = vmatpush1.msra.mxu0 0.0
        %3660 = vmatprep.subr.mxu0 0.0
        %3661 = vmatpush1.msra.mxu0 0.0
        %3662 = vmatprep.subr.mxu0 0.0
        %3663 = vmatpush1.msra.mxu0 0.0
        %3664 = vmatprep.subr.mxu0 0.0
        %3665 = vmatpush1.msra.mxu0 0.0
        %3666 = vmatprep.mubr.f32.mxu0 0.0
        %3667 = vmatmul.mubr.f32.gmra.mrb[0].mxu0 %v3528
        %v3668 = vpop.f32.mrb[0].mxu0
        %v3669 = vadd.f32 0.0, %v3668
        %v3670 = vpop.f32.mrb[0].mxu0
        %v3671 = vadd.f32 0.0, %v3670
        %3672 = vdwg.mxu0
        %v3674 = vcombine.high %v3669, %v3669
        %v3676 = vunpack.c.l.s4 1966171168
        %v3677 = vunpack.c.0.s8 %v3676
        %v3678 = vlaneseq
        %v3679 = vshrl.u32 %v3678, 7
        %v3680 = vsub.s32 %v3677, %v3679
        %v3681 = vrot.slane %v3669, %v3680
        %v3683 = vunpack.c.l.s4 1966171168
        %v3684 = vunpack.c.0.s8 %v3683
        %v3685 = vlaneseq
        %v3686 = vshrl.u32 %v3685, 7
        %v3687 = vsub.s32 %v3684, %v3686
        %v3688 = vrot.slane %v3674, %v3687
        %v3689 = vcombine.high %v3681, %v3681
        %v3690 = vcombine.high %v3688, %v3688
        %v3692 = vunpack.c.l.s4 1966171168
        %v3693 = vunpack.c.0.s8 %v3692
        %v3694 = vlaneseq
        %v3695 = vshrl.u32 %v3694, 7
        %v3696 = vsub.s32 %v3693, %v3695
        %v3697 = vrot.slane %v3681, %v3696
        %v3699 = vunpack.c.l.s4 1966171168
        %v3700 = vunpack.c.0.s8 %v3699
        %v3701 = vlaneseq
        %v3702 = vshrl.u32 %v3701, 7
        %v3703 = vsub.s32 %v3700, %v3702
        %v3704 = vrot.slane %v3688, %v3703
        %v3706 = vunpack.c.l.s4 1966171168
        %v3707 = vunpack.c.0.s8 %v3706
        %v3708 = vlaneseq
        %v3709 = vshrl.u32 %v3708, 7
        %v3710 = vsub.s32 %v3707, %v3709
        %v3711 = vrot.slane %v3689, %v3710
        %v3713 = vunpack.c.l.s4 1966171168
        %v3714 = vunpack.c.0.s8 %v3713
        %v3715 = vlaneseq
        %v3716 = vshrl.u32 %v3715, 7
        %v3717 = vsub.s32 %v3714, %v3716
        %v3718 = vrot.slane %v3690, %v3717
        %v3719 = vcombine.high %v3697, %v3697
        %v3720 = vcombine.high %v3704, %v3704
        %v3721 = vcombine.high %v3711, %v3711
        %v3722 = vcombine.high %v3718, %v3718
        %v3723 = vlaneseq
        %v3724 = vshrl.u32 %v3723, 7
        %v3725 = vsub.s32 0, %v3724
        %v3726 = vrot.slane %v3697, %v3725
        %v3727 = vlaneseq
        %v3728 = vshrl.u32 %v3727, 7
        %v3729 = vsub.s32 0, %v3728
        %v3730 = vrot.slane %v3711, %v3729
        %v3731 = vlaneseq
        %v3732 = vshrl.u32 %v3731, 7
        %v3733 = vsub.s32 0, %v3732
        %v3734 = vrot.slane %v3719, %v3733
        %v3735 = vlaneseq
        %v3736 = vshrl.u32 %v3735, 7
        %v3737 = vsub.s32 0, %v3736
        %v3738 = vrot.slane %v3721, %v3737
        %v3739 = vlaneseq
        %v3740 = vshrl.u32 %v3739, 7
        %v3741 = vsub.s32 0, %v3740
        %v3742 = vrot.slane %v3704, %v3741
        %v3743 = vlaneseq
        %v3744 = vshrl.u32 %v3743, 7
        %v3745 = vsub.s32 0, %v3744
        %v3746 = vrot.slane %v3718, %v3745
        %v3747 = vlaneseq
        %v3748 = vshrl.u32 %v3747, 7
        %v3749 = vsub.s32 0, %v3748
        %v3750 = vrot.slane %v3720, %v3749
        %v3751 = vlaneseq
        %v3752 = vshrl.u32 %v3751, 7
        %v3753 = vsub.s32 0, %v3752
        %v3754 = vrot.slane %v3722, %v3753
        %v3763 = vadd.f32 %v514, %v3726
        %v3764 = vadd.f32 %v519, %v3730
        %v3765 = vadd.f32 %v524, %v3734
        %v3766 = vadd.f32 %v529, %v3738
        %v3767 = vadd.f32 %v534, %v3742
        %v3768 = vadd.f32 %v539, %v3746
        %v3769 = vadd.f32 %v544, %v3750
        %v3770 = vadd.f32 %v549, %v3754
        %v3771 = vtanh.pop %v3763
        %v3772 = vtanh.pop %v3764
        %v3773 = vtanh.pop %v3765
        %v3774 = vtanh.pop %v3766
        %v3775 = vtanh.pop %v3767
        %v3776 = vtanh.pop %v3768
        %v3777 = vtanh.pop %v3769
        %v3778 = vtanh.pop %v3770
        %v3779 = vmul.f32 %v3771, %v573
        %v3780 = vmul.f32 %v3772, %v573
        %v3781 = vmul.f32 %v3773, %v573
        %v3782 = vmul.f32 %v3774, %v573
        %v3783 = vmul.f32 %v3775, %v573
        %v3784 = vmul.f32 %v3776, %v573
        %v3785 = vmul.f32 %v3777, %v573
        %v3786 = vmul.f32 %v3778, %v573
        %v3787 = vsel %vm422, %v3779, 0.0
        %3788 = vadd.xlane.f32.xlu0 %v3787
        %v3789 = vpop.xlane.xlu0 %3788
        %v3790 = vsel %vm422, %v3780, 0.0
        %3791 = vadd.xlane.f32.xlu0 %v3790
        %v3792 = vpop.xlane.xlu0 %3791
        %v3793 = vsel %vm422, %v3781, 0.0
        %3794 = vadd.xlane.f32.xlu0 %v3793
        %v3795 = vpop.xlane.xlu0 %3794
        %v3796 = vsel %vm422, %v3782, 0.0
        %3797 = vadd.xlane.f32.xlu0 %v3796
        %v3798 = vpop.xlane.xlu0 %3797
        %v3799 = vsel %vm422, %v3783, 0.0
        %3800 = vadd.xlane.f32.xlu0 %v3799
        %v3801 = vpop.xlane.xlu0 %3800
        %v3802 = vsel %vm422, %v3784, 0.0
        %3803 = vadd.xlane.f32.xlu0 %v3802
        %v3804 = vpop.xlane.xlu0 %3803
        %v3805 = vsel %vm422, %v3785, 0.0
        %3806 = vadd.xlane.f32.xlu0 %v3805
        %v3807 = vpop.xlane.xlu0 %3806
        %v3808 = vsel %vm422, %v3786, 0.0
        %3809 = vadd.xlane.f32.xlu0 %v3808
        %v3810 = vpop.xlane.xlu0 %3809
        %v3819 = vlaneseq
        %v3820 = vshrl.u32 %v3819, 7
        %v3821 = vsub.s32 %v803, %v3820
        %v3822 = vrot.slane %v3789, %v3821
        %v3823 = vlaneseq
        %v3824 = vshrl.u32 %v3823, 7
        %v3825 = vsub.s32 %v803, %v3824
        %v3826 = vrot.slane %v3792, %v3825
        %v3827 = vlaneseq
        %v3828 = vshrl.u32 %v3827, 7
        %v3829 = vsub.s32 %v803, %v3828
        %v3830 = vrot.slane %v3795, %v3829
        %v3831 = vlaneseq
        %v3832 = vshrl.u32 %v3831, 7
        %v3833 = vsub.s32 %v803, %v3832
        %v3834 = vrot.slane %v3798, %v3833
        %v3835 = vlaneseq
        %v3836 = vshrl.u32 %v3835, 7
        %v3837 = vsub.s32 %v803, %v3836
        %v3838 = vrot.slane %v3801, %v3837
        %v3839 = vlaneseq
        %v3840 = vshrl.u32 %v3839, 7
        %v3841 = vsub.s32 %v803, %v3840
        %v3842 = vrot.slane %v3804, %v3841
        %v3843 = vlaneseq
        %v3844 = vshrl.u32 %v3843, 7
        %v3845 = vsub.s32 %v803, %v3844
        %v3846 = vrot.slane %v3807, %v3845
        %v3847 = vlaneseq
        %v3848 = vshrl.u32 %v3847, 7
        %v3849 = vsub.s32 %v803, %v3848
        %v3850 = vrot.slane %v3810, %v3849
        %v3851 = vsel %vm836, %v3826, %v3822
        %v3852 = vsel %vm838, %v3830, %v3851
        %v3853 = vsel %vm840, %v3834, %v3852
        %v3854 = vsel %vm842, %v3838, %v3853
        %v3855 = vsel %vm844, %v3842, %v3854
        %v3856 = vsel %vm846, %v3846, %v3855
        %v3857 = vsel %vm848, %v3850, %v3856
        %v3859 = vsel %vm851, %v3857, -inf
        %3860 = vmax.xlane.f32.xlu0 %v3859
        %v3861 = vpop.xlane.xlu0 %3860
        %v3863 = vlaneseq
        %v3864 = vshrl.u32 %v3863, 7
        %v3865 = vsub.s32 0, %v3864
        %v3866 = vrot.slane %v3861, %v3865
        %v3867 = vlaneseq
        %v3868 = vshrl.u32 %v3867, 7
        %v3869 = vsub.s32 1, %v3868
        %v3870 = vrot.slane %v3861, %v3869
        %v3871 = vlaneseq
        %v3872 = vshrl.u32 %v3871, 7
        %v3873 = vsub.s32 2, %v3872
        %v3874 = vrot.slane %v3861, %v3873
        %v3875 = vlaneseq
        %v3876 = vshrl.u32 %v3875, 7
        %v3877 = vsub.s32 3, %v3876
        %v3878 = vrot.slane %v3861, %v3877
        %v3879 = vlaneseq
        %v3880 = vshrl.u32 %v3879, 7
        %v3881 = vsub.s32 4, %v3880
        %v3882 = vrot.slane %v3861, %v3881
        %v3883 = vlaneseq
        %v3884 = vshrl.u32 %v3883, 7
        %v3885 = vsub.s32 5, %v3884
        %v3886 = vrot.slane %v3861, %v3885
        %v3887 = vlaneseq
        %v3888 = vshrl.u32 %v3887, 7
        %v3889 = vsub.s32 6, %v3888
        %v3890 = vrot.slane %v3861, %v3889
        %v3891 = vlaneseq
        %v3892 = vshrl.u32 %v3891, 7
        %v3893 = vsub.s32 7, %v3892
        %v3894 = vrot.slane %v3861, %v3893
        %v3903 = vsub.f32 %v3789, %v3866
        %v3904 = vsub.f32 %v3792, %v3870
        %v3905 = vsub.f32 %v3795, %v3874
        %v3906 = vsub.f32 %v3798, %v3878
        %v3907 = vsub.f32 %v3801, %v3882
        %v3908 = vsub.f32 %v3804, %v3886
        %v3909 = vsub.f32 %v3807, %v3890
        %v3910 = vsub.f32 %v3810, %v3894
        %v3911 = vmul.f32 %v3903, 1.442695
        %v3912 = vpow.pop %v3911
        %v3913 = vmul.f32 %v3904, 1.442695
        %v3914 = vpow.pop %v3913
        %v3915 = vmul.f32 %v3905, 1.442695
        %v3916 = vpow.pop %v3915
        %v3917 = vmul.f32 %v3906, 1.442695
        %v3918 = vpow.pop %v3917
        %v3919 = vmul.f32 %v3907, 1.442695
        %v3920 = vpow.pop %v3919
        %v3921 = vmul.f32 %v3908, 1.442695
        %v3922 = vpow.pop %v3921
        %v3923 = vmul.f32 %v3909, 1.442695
        %v3924 = vpow.pop %v3923
        %v3925 = vmul.f32 %v3910, 1.442695
        %v3926 = vpow.pop %v3925
        %3935 = vset.pattern.permute.xlu0 0
        %3936 = vperm.xlu0 %3935, %v3912
        %v3937 = vpop.permute.xlu0 %3936
        %3938 = vset.pattern.permute.xlu0 0
        %3939 = vperm.xlu0 %3938, %v3914
        %v3940 = vpop.permute.xlu0 %3939
        %3941 = vset.pattern.permute.xlu0 0
        %3942 = vperm.xlu0 %3941, %v3916
        %v3943 = vpop.permute.xlu0 %3942
        %3944 = vset.pattern.permute.xlu0 0
        %3945 = vperm.xlu0 %3944, %v3918
        %v3946 = vpop.permute.xlu0 %3945
        %3947 = vset.pattern.permute.xlu0 0
        %3948 = vperm.xlu0 %3947, %v3920
        %v3949 = vpop.permute.xlu0 %3948
        %3950 = vset.pattern.permute.xlu0 0
        %3951 = vperm.xlu0 %3950, %v3922
        %v3952 = vpop.permute.xlu0 %3951
        %3953 = vset.pattern.permute.xlu0 0
        %3954 = vperm.xlu0 %3953, %v3924
        %v3955 = vpop.permute.xlu0 %3954
        %3956 = vset.pattern.permute.xlu0 0
        %3957 = vperm.xlu0 %3956, %v3926
        %v3958 = vpop.permute.xlu0 %3957
        %v3959 = vlaneseq
        %v3960 = vshrl.u32 %v3959, 7
        %v3961 = vsub.s32 %v803, %v3960
        %v3962 = vrot.slane %v3937, %v3961
        %v3963 = vlaneseq
        %v3964 = vshrl.u32 %v3963, 7
        %v3965 = vsub.s32 %v803, %v3964
        %v3966 = vrot.slane %v3940, %v3965
        %v3967 = vlaneseq
        %v3968 = vshrl.u32 %v3967, 7
        %v3969 = vsub.s32 %v803, %v3968
        %v3970 = vrot.slane %v3943, %v3969
        %v3971 = vlaneseq
        %v3972 = vshrl.u32 %v3971, 7
        %v3973 = vsub.s32 %v803, %v3972
        %v3974 = vrot.slane %v3946, %v3973
        %v3975 = vlaneseq
        %v3976 = vshrl.u32 %v3975, 7
        %v3977 = vsub.s32 %v803, %v3976
        %v3978 = vrot.slane %v3949, %v3977
        %v3979 = vlaneseq
        %v3980 = vshrl.u32 %v3979, 7
        %v3981 = vsub.s32 %v803, %v3980
        %v3982 = vrot.slane %v3952, %v3981
        %v3983 = vlaneseq
        %v3984 = vshrl.u32 %v3983, 7
        %v3985 = vsub.s32 %v803, %v3984
        %v3986 = vrot.slane %v3955, %v3985
        %v3987 = vlaneseq
        %v3988 = vshrl.u32 %v3987, 7
        %v3989 = vsub.s32 %v803, %v3988
        %v3990 = vrot.slane %v3958, %v3989
        %v3991 = vsel %vm836, %v3966, %v3962
        %v3992 = vsel %vm838, %v3970, %v3991
        %v3993 = vsel %vm840, %v3974, %v3992
        %v3994 = vsel %vm842, %v3978, %v3993
        %v3995 = vsel %vm844, %v3982, %v3994
        %v3996 = vsel %vm846, %v3986, %v3995
        %v3997 = vsel %vm848, %v3990, %v3996
        %v3999 = vsel %vm851, %v3997, 0.0
        %4000 = vadd.xlane.f32.xlu0 %v3999
        %v4001 = vpop.xlane.xlu0 %4000
        %v4002 = vrcp.pop %v4001
        %v4004 = vlaneseq
        %v4005 = vshrl.u32 %v4004, 7
        %v4006 = vsub.s32 0, %v4005
        %v4007 = vrot.slane %v4002, %v4006
        %v4008 = vlaneseq
        %v4009 = vshrl.u32 %v4008, 7
        %v4010 = vsub.s32 1, %v4009
        %v4011 = vrot.slane %v4002, %v4010
        %v4012 = vlaneseq
        %v4013 = vshrl.u32 %v4012, 7
        %v4014 = vsub.s32 2, %v4013
        %v4015 = vrot.slane %v4002, %v4014
        %v4016 = vlaneseq
        %v4017 = vshrl.u32 %v4016, 7
        %v4018 = vsub.s32 3, %v4017
        %v4019 = vrot.slane %v4002, %v4018
        %v4020 = vlaneseq
        %v4021 = vshrl.u32 %v4020, 7
        %v4022 = vsub.s32 4, %v4021
        %v4023 = vrot.slane %v4002, %v4022
        %v4024 = vlaneseq
        %v4025 = vshrl.u32 %v4024, 7
        %v4026 = vsub.s32 5, %v4025
        %v4027 = vrot.slane %v4002, %v4026
        %v4028 = vlaneseq
        %v4029 = vshrl.u32 %v4028, 7
        %v4030 = vsub.s32 6, %v4029
        %v4031 = vrot.slane %v4002, %v4030
        %v4032 = vlaneseq
        %v4033 = vshrl.u32 %v4032, 7
        %v4034 = vsub.s32 7, %v4033
        %v4035 = vrot.slane %v4002, %v4034
        %v4044 = vmul.f32 %v3912, %v4007
        %v4045 = vmul.f32 %v3914, %v4011
        %v4046 = vmul.f32 %v3916, %v4015
        %v4047 = vmul.f32 %v3918, %v4019
        %v4048 = vmul.f32 %v3920, %v4023
        %v4049 = vmul.f32 %v3922, %v4027
        %v4050 = vmul.f32 %v3924, %v4031
        %v4051 = vmul.f32 %v3926, %v4035
        %4053 = vset.pattern.permute.xlu0 0
        %4054 = vperm.xlu0 %4053, %v4044
        %v4055 = vpop.permute.xlu0 %4054
        %4058 = vset.pattern.permute.xlu0 0
        %4059 = vperm.xlu0 %4058, %v4045
        %v4060 = vpop.permute.xlu0 %4059
        %4063 = vset.pattern.permute.xlu0 0
        %4064 = vperm.xlu0 %4063, %v4046
        %v4065 = vpop.permute.xlu0 %4064
        %4068 = vset.pattern.permute.xlu0 0
        %4069 = vperm.xlu0 %4068, %v4047
        %v4070 = vpop.permute.xlu0 %4069
        %4073 = vset.pattern.permute.xlu0 0
        %4074 = vperm.xlu0 %4073, %v4048
        %v4075 = vpop.permute.xlu0 %4074
        %4078 = vset.pattern.permute.xlu0 0
        %4079 = vperm.xlu0 %4078, %v4049
        %v4080 = vpop.permute.xlu0 %4079
        %4083 = vset.pattern.permute.xlu0 0
        %4084 = vperm.xlu0 %4083, %v4050
        %v4085 = vpop.permute.xlu0 %4084
        %4088 = vset.pattern.permute.xlu0 0
        %4089 = vperm.xlu0 %4088, %v4051
        %v4090 = vpop.permute.xlu0 %4089
        %v4092 = vmul.f32 %v4055, %v403
        %v4093 = vmul.f32 %v4060, %v404
        %v4094 = vmul.f32 %v4065, %v405
        %v4095 = vmul.f32 %v4070, %v406
        %v4096 = vmul.f32 %v4075, %v407
        %v4097 = vmul.f32 %v4080, %v408
        %v4098 = vmul.f32 %v4085, %v409
        %v4099 = vmul.f32 %v4090, %v410
        %v4100 = vsel %vm422, %v4092, 0.0
        %v4101 = vrot.slane %v4100, 4
        %v4102 = vadd.f32 %v4100, %v4101
        %v4103 = vrot.slane %v4102, 2
        %v4104 = vadd.f32 %v4102, %v4103
        %v4105 = vrot.slane %v4104, 1
        %v4106 = vadd.f32 %v4104, %v4105
        %v4107 = vsel %vm422, %v4093, 0.0
        %v4108 = vrot.slane %v4107, 4
        %v4109 = vadd.f32 %v4107, %v4108
        %v4110 = vrot.slane %v4109, 2
        %v4111 = vadd.f32 %v4109, %v4110
        %v4112 = vrot.slane %v4111, 1
        %v4113 = vadd.f32 %v4111, %v4112
        %v4114 = vsel %vm422, %v4094, 0.0
        %v4115 = vrot.slane %v4114, 4
        %v4116 = vadd.f32 %v4114, %v4115
        %v4117 = vrot.slane %v4116, 2
        %v4118 = vadd.f32 %v4116, %v4117
        %v4119 = vrot.slane %v4118, 1
        %v4120 = vadd.f32 %v4118, %v4119
        %v4121 = vsel %vm422, %v4095, 0.0
        %v4122 = vrot.slane %v4121, 4
        %v4123 = vadd.f32 %v4121, %v4122
        %v4124 = vrot.slane %v4123, 2
        %v4125 = vadd.f32 %v4123, %v4124
        %v4126 = vrot.slane %v4125, 1
        %v4127 = vadd.f32 %v4125, %v4126
        %v4128 = vsel %vm422, %v4096, 0.0
        %v4129 = vrot.slane %v4128, 4
        %v4130 = vadd.f32 %v4128, %v4129
        %v4131 = vrot.slane %v4130, 2
        %v4132 = vadd.f32 %v4130, %v4131
        %v4133 = vrot.slane %v4132, 1
        %v4134 = vadd.f32 %v4132, %v4133
        %v4135 = vsel %vm422, %v4097, 0.0
        %v4136 = vrot.slane %v4135, 4
        %v4137 = vadd.f32 %v4135, %v4136
        %v4138 = vrot.slane %v4137, 2
        %v4139 = vadd.f32 %v4137, %v4138
        %v4140 = vrot.slane %v4139, 1
        %v4141 = vadd.f32 %v4139, %v4140
        %v4142 = vsel %vm422, %v4098, 0.0
        %v4143 = vrot.slane %v4142, 4
        %v4144 = vadd.f32 %v4142, %v4143
        %v4145 = vrot.slane %v4144, 2
        %v4146 = vadd.f32 %v4144, %v4145
        %v4147 = vrot.slane %v4146, 1
        %v4148 = vadd.f32 %v4146, %v4147
        %v4149 = vsel %vm422, %v4099, 0.0
        %v4150 = vrot.slane %v4149, 4
        %v4151 = vadd.f32 %v4149, %v4150
        %v4152 = vrot.slane %v4151, 2
        %v4153 = vadd.f32 %v4151, %v4152
        %v4154 = vrot.slane %v4153, 1
        %v4155 = vadd.f32 %v4153, %v4154
        %v4164 = vsel %vm836, %v4113, %v4106
        %v4165 = vsel %vm838, %v4120, %v4164
        %v4166 = vsel %vm840, %v4127, %v4165
        %v4167 = vsel %vm842, %v4134, %v4166
        %v4168 = vsel %vm844, %v4141, %v4167
        %v4169 = vsel %vm846, %v4148, %v4168
        %v4170 = vsel %vm848, %v4155, %v4169
        %4172 = vrot.lane.b32.xlu0 %v3669, 96
        %v4173 = vpop.permute.xlu0 %4172
        %4174 = vrot.lane.b32.xlu0 %v3671, 96
        %v4175 = vpop.permute.xlu0 %4174
        %v4176 = vsel %vm1169, %v4173, %v4175
        %v4178 = vsel %vm422, %v4170, 0
        %4180 = vmatprep.subr.mxu0 0.0
        %4181 = vmatpush1.msra.mxu0 %v560
        %4182 = vmatprep.subr.mxu0 0.0
        %4183 = vmatpush1.msra.mxu0 %v561
        %4184 = vmatprep.subr.mxu0 0.0
        %4185 = vmatpush1.msra.mxu0 %v562
        %4186 = vmatprep.subr.mxu0 0.0
        %4187 = vmatpush1.msra.mxu0 %v563
        %4188 = vmatprep.subr.mxu0 0.0
        %4189 = vmatpush1.msra.mxu0 0.0
        %4190 = vmatprep.subr.mxu0 0.0
        %4191 = vmatpush1.msra.mxu0 0.0
        %4192 = vmatprep.subr.mxu0 0.0
        %4193 = vmatpush1.msra.mxu0 0.0
        %4194 = vmatprep.subr.mxu0 0.0
        %4195 = vmatpush1.msra.mxu0 0.0
        %4196 = vmatprep.subr.mxu0 0.0
        %4197 = vmatpush1.msra.mxu0 0.0
        %4198 = vmatprep.subr.mxu0 0.0
        %4199 = vmatpush1.msra.mxu0 0.0
        %4200 = vmatprep.subr.mxu0 0.0
        %4201 = vmatpush1.msra.mxu0 0.0
        %4202 = vmatprep.subr.mxu0 0.0
        %4203 = vmatpush1.msra.mxu0 0.0
        %4204 = vmatprep.subr.mxu0 0.0
        %4205 = vmatpush1.msra.mxu0 0.0
        %4206 = vmatprep.subr.mxu0 0.0
        %4207 = vmatpush1.msra.mxu0 0.0
        %4208 = vmatprep.subr.mxu0 0.0
        %4209 = vmatpush1.msra.mxu0 0.0
        %4210 = vmatprep.subr.mxu0 0.0
        %4211 = vmatpush1.msra.mxu0 0.0
        %4212 = vmatprep.subr.mxu0 0.0
        %4213 = vmatpush1.msra.mxu0 0.0
        %4214 = vmatprep.subr.mxu0 0.0
        %4215 = vmatpush1.msra.mxu0 0.0
        %4216 = vmatprep.subr.mxu0 0.0
        %4217 = vmatpush1.msra.mxu0 0.0
        %4218 = vmatprep.subr.mxu0 0.0
        %4219 = vmatpush1.msra.mxu0 0.0
        %4220 = vmatprep.subr.mxu0 0.0
        %4221 = vmatpush1.msra.mxu0 0.0
        %4222 = vmatprep.subr.mxu0 0.0
        %4223 = vmatpush1.msra.mxu0 0.0
        %4224 = vmatprep.subr.mxu0 0.0
        %4225 = vmatpush1.msra.mxu0 0.0
        %4226 = vmatprep.subr.mxu0 0.0
        %4227 = vmatpush1.msra.mxu0 0.0
        %4228 = vmatprep.subr.mxu0 0.0
        %4229 = vmatpush1.msra.mxu0 0.0
        %4230 = vmatprep.subr.mxu0 0.0
        %4231 = vmatpush1.msra.mxu0 0.0
        %4232 = vmatprep.subr.mxu0 0.0
        %4233 = vmatpush1.msra.mxu0 0.0
        %4234 = vmatprep.subr.mxu0 0.0
        %4235 = vmatpush1.msra.mxu0 0.0
        %4236 = vmatprep.subr.mxu0 0.0
        %4237 = vmatpush1.msra.mxu0 0.0
        %4238 = vmatprep.subr.mxu0 0.0
        %4239 = vmatpush1.msra.mxu0 0.0
        %4240 = vmatprep.subr.mxu0 0.0
        %4241 = vmatpush1.msra.mxu0 0.0
        %4242 = vmatprep.subr.mxu0 0.0
        %4243 = vmatpush1.msra.mxu0 0.0
        %4244 = vmatprep.mubr.f32.mxu0 0.0
        %4245 = vmatmul.mubr.f32.gmra.mrb[0].mxu0 %v4178
        %v4246 = vpop.f32.mrb[0].mxu0
        %v4247 = vadd.f32 %v4176, %v4246
        %v4248 = vpop.f32.mrb[0].mxu0
        %4249 = vdwg.mxu0
        %s4250 = scalar_lea.vmem %s360, 32 [#allocation2]
        %v4251 = vld [vmem:[%s4250] sm:$0xff]
        %v4252 = vadd.f32 %v4247, %v4251
        %v4253 = vxor.u32 %v4252, 2147483648
        %v4254 = vmul.f32 %v4253, 1.442695
        %v4255 = vpow.pop %v4254
        %v4256 = vadd.f32 %v4255, 1.0
        %v4257 = vrcp.pop %v4256
        %v4258 = vmul.f32 1.0, %v4257
        %v4259 = vtanh.pop %v4252
        %v4260 = vmul.f32 %v4258, %v3518
        %4262 = vrot.lane.b32.xlu0 %v4259, 64
        %v4263 = vpop.permute.xlu0 %4262
        %v4265 = vmul.f32 %v4258, %v4263
        %4267 = vrot.lane.b32.xlu0 %v4265, 32
        %v4268 = vpop.permute.xlu0 %4267
        %v4270 = vadd.f32 %v4260, %v4268
        %v4271 = vtanh.pop %v4270
        %4273 = vrot.lane.b32.xlu0 %v4271, 64
        %v4274 = vpop.permute.xlu0 %4273
        %v4276 = vmul.f32 %v4258, %v4274
        %4278 = vrot.lane.b32.xlu0 %v4276, 32
        %v4279 = vpop.permute.xlu0 %4278
        %v4280 = vsel %vm422, %v4279, 0
        %4282 = vmatprep.subr.mxu0 0.0
        %4283 = vmatpush1.msra.mxu0 %v564
        %4284 = vmatprep.subr.mxu0 0.0
        %4285 = vmatpush1.msra.mxu0 %v565
        %4286 = vmatprep.subr.mxu0 0.0
        %4287 = vmatpush1.msra.mxu0 %v566
        %4288 = vmatprep.subr.mxu0 0.0
        %4289 = vmatpush1.msra.mxu0 %v567
        %4290 = vmatprep.subr.mxu0 0.0
        %4291 = vmatpush1.msra.mxu0 0.0
        %4292 = vmatprep.subr.mxu0 0.0
        %4293 = vmatpush1.msra.mxu0 0.0
        %4294 = vmatprep.subr.mxu0 0.0
        %4295 = vmatpush1.msra.mxu0 0.0
        %4296 = vmatprep.subr.mxu0 0.0
        %4297 = vmatpush1.msra.mxu0 0.0
        %4298 = vmatprep.subr.mxu0 0.0
        %4299 = vmatpush1.msra.mxu0 0.0
        %4300 = vmatprep.subr.mxu0 0.0
        %4301 = vmatpush1.msra.mxu0 0.0
        %4302 = vmatprep.subr.mxu0 0.0
        %4303 = vmatpush1.msra.mxu0 0.0
        %4304 = vmatprep.subr.mxu0 0.0
        %4305 = vmatpush1.msra.mxu0 0.0
        %4306 = vmatprep.subr.mxu0 0.0
        %4307 = vmatpush1.msra.mxu0 0.0
        %4308 = vmatprep.subr.mxu0 0.0
        %4309 = vmatpush1.msra.mxu0 0.0
        %4310 = vmatprep.subr.mxu0 0.0
        %4311 = vmatpush1.msra.mxu0 0.0
        %4312 = vmatprep.subr.mxu0 0.0
        %4313 = vmatpush1.msra.mxu0 0.0
        %4314 = vmatprep.subr.mxu0 0.0
        %4315 = vmatpush1.msra.mxu0 0.0
        %4316 = vmatprep.subr.mxu0 0.0
        %4317 = vmatpush1.msra.mxu0 0.0
        %4318 = vmatprep.subr.mxu0 0.0
        %4319 = vmatpush1.msra.mxu0 0.0
        %4320 = vmatprep.subr.mxu0 0.0
        %4321 = vmatpush1.msra.mxu0 0.0
        %4322 = vmatprep.subr.mxu0 0.0
        %4323 = vmatpush1.msra.mxu0 0.0
        %4324 = vmatprep.subr.mxu0 0.0
        %4325 = vmatpush1.msra.mxu0 0.0
        %4326 = vmatprep.subr.mxu0 0.0
        %4327 = vmatpush1.msra.mxu0 0.0
        %4328 = vmatprep.subr.mxu0 0.0
        %4329 = vmatpush1.msra.mxu0 0.0
        %4330 = vmatprep.subr.mxu0 0.0
        %4331 = vmatpush1.msra.mxu0 0.0
        %4332 = vmatprep.subr.mxu0 0.0
        %4333 = vmatpush1.msra.mxu0 0.0
        %4334 = vmatprep.subr.mxu0 0.0
        %4335 = vmatpush1.msra.mxu0 0.0
        %4336 = vmatprep.subr.mxu0 0.0
        %4337 = vmatpush1.msra.mxu0 0.0
        %4338 = vmatprep.subr.mxu0 0.0
        %4339 = vmatpush1.msra.mxu0 0.0
        %4340 = vmatprep.subr.mxu0 0.0
        %4341 = vmatpush1.msra.mxu0 0.0
        %4342 = vmatprep.subr.mxu0 0.0
        %4343 = vmatpush1.msra.mxu0 0.0
        %4344 = vmatprep.subr.mxu0 0.0
        %4345 = vmatpush1.msra.mxu0 0.0
        %4346 = vmatprep.mubr.f32.mxu0 0.0
        %4347 = vmatmul.mubr.f32.gmra.mrb[0].mxu0 %v4280
        %v4348 = vpop.f32.mrb[0].mxu0
        %v4349 = vadd.f32 %v580, %v4348
        %v4350 = vpop.f32.mrb[0].mxu0
        %4351 = vdwg.mxu0
        %s4352 = scalar_lea.vmem %s396, 32 [#allocation3]
        %4353 = vst [vmem:[%s4352] sm:$0xff] %v4349
        %4354 = vmatprep.subr.mxu0 %v553
        %4355 = vmatpush1.msra.mxu0 %v552
        %4356 = vmatprep.subr.mxu0 %v555
        %4357 = vmatpush1.msra.mxu0 %v554
        %4358 = vmatprep.subr.mxu0 %v557
        %4359 = vmatpush1.msra.mxu0 %v556
        %4360 = vmatprep.subr.mxu0 %v559
        %4361 = vmatpush1.msra.mxu0 %v558
        %4362 = vmatprep.subr.mxu0 0.0
        %4363 = vmatpush1.msra.mxu0 0.0
        %4364 = vmatprep.subr.mxu0 0.0
        %4365 = vmatpush1.msra.mxu0 0.0
        %4366 = vmatprep.subr.mxu0 0.0
        %4367 = vmatpush1.msra.mxu0 0.0
        %4368 = vmatprep.subr.mxu0 0.0
        %4369 = vmatpush1.msra.mxu0 0.0
        %4370 = vmatprep.subr.mxu0 0.0
        %4371 = vmatpush1.msra.mxu0 0.0
        %4372 = vmatprep.subr.mxu0 0.0
        %4373 = vmatpush1.msra.mxu0 0.0
        %4374 = vmatprep.subr.mxu0 0.0
        %4375 = vmatpush1.msra.mxu0 0.0
        %4376 = vmatprep.subr.mxu0 0.0
        %4377 = vmatpush1.msra.mxu0 0.0
        %4378 = vmatprep.subr.mxu0 0.0
        %4379 = vmatpush1.msra.mxu0 0.0
        %4380 = vmatprep.subr.mxu0 0.0
        %4381 = vmatpush1.msra.mxu0 0.0
        %4382 = vmatprep.subr.mxu0 0.0
        %4383 = vmatpush1.msra.mxu0 0.0
        %4384 = vmatprep.subr.mxu0 0.0
        %4385 = vmatpush1.msra.mxu0 0.0
        %4386 = vmatprep.subr.mxu0 0.0
        %4387 = vmatpush1.msra.mxu0 0.0
        %4388 = vmatprep.subr.mxu0 0.0
        %4389 = vmatpush1.msra.mxu0 0.0
        %4390 = vmatprep.subr.mxu0 0.0
        %4391 = vmatpush1.msra.mxu0 0.0
        %4392 = vmatprep.subr.mxu0 0.0
        %4393 = vmatpush1.msra.mxu0 0.0
        %4394 = vmatprep.subr.mxu0 0.0
        %4395 = vmatpush1.msra.mxu0 0.0
        %4396 = vmatprep.subr.mxu0 0.0
        %4397 = vmatpush1.msra.mxu0 0.0
        %4398 = vmatprep.subr.mxu0 0.0
        %4399 = vmatpush1.msra.mxu0 0.0
        %4400 = vmatprep.subr.mxu0 0.0
        %4401 = vmatpush1.msra.mxu0 0.0
        %4402 = vmatprep.subr.mxu0 0.0
        %4403 = vmatpush1.msra.mxu0 0.0
        %4404 = vmatprep.subr.mxu0 0.0
        %4405 = vmatpush1.msra.mxu0 0.0
        %4406 = vmatprep.subr.mxu0 0.0
        %4407 = vmatpush1.msra.mxu0 0.0
        %4408 = vmatprep.subr.mxu0 0.0
        %4409 = vmatpush1.msra.mxu0 0.0
        %4410 = vmatprep.subr.mxu0 0.0
        %4411 = vmatpush1.msra.mxu0 0.0
        %4412 = vmatprep.subr.mxu0 0.0
        %4413 = vmatpush1.msra.mxu0 0.0
        %4414 = vmatprep.subr.mxu0 0.0
        %4415 = vmatpush1.msra.mxu0 0.0
        %4416 = vmatprep.subr.mxu0 0.0
        %4417 = vmatpush1.msra.mxu0 0.0
        %4418 = vmatprep.mubr.f32.mxu0 0.0
        %4419 = vmatmul.mubr.f32.gmra.mrb[0].mxu0 %v4280
        %v4420 = vpop.f32.mrb[0].mxu0
        %v4421 = vadd.f32 0.0, %v4420
        %v4422 = vpop.f32.mrb[0].mxu0
        %v4423 = vadd.f32 0.0, %v4422
        %4424 = vdwg.mxu0
        %v4426 = vcombine.high %v4421, %v4421
        %v4428 = vunpack.c.l.s4 1966171168
        %v4429 = vunpack.c.0.s8 %v4428
        %v4430 = vlaneseq
        %v4431 = vshrl.u32 %v4430, 7
        %v4432 = vsub.s32 %v4429, %v4431
        %v4433 = vrot.slane %v4421, %v4432
        %v4435 = vunpack.c.l.s4 1966171168
        %v4436 = vunpack.c.0.s8 %v4435
        %v4437 = vlaneseq
        %v4438 = vshrl.u32 %v4437, 7
        %v4439 = vsub.s32 %v4436, %v4438
        %v4440 = vrot.slane %v4426, %v4439
        %v4441 = vcombine.high %v4433, %v4433
        %v4442 = vcombine.high %v4440, %v4440
        %v4444 = vunpack.c.l.s4 1966171168
        %v4445 = vunpack.c.0.s8 %v4444
        %v4446 = vlaneseq
        %v4447 = vshrl.u32 %v4446, 7
        %v4448 = vsub.s32 %v4445, %v4447
        %v4449 = vrot.slane %v4433, %v4448
        %v4451 = vunpack.c.l.s4 1966171168
        %v4452 = vunpack.c.0.s8 %v4451
        %v4453 = vlaneseq
        %v4454 = vshrl.u32 %v4453, 7
        %v4455 = vsub.s32 %v4452, %v4454
        %v4456 = vrot.slane %v4440, %v4455
        %v4458 = vunpack.c.l.s4 1966171168
        %v4459 = vunpack.c.0.s8 %v4458
        %v4460 = vlaneseq
        %v4461 = vshrl.u32 %v4460, 7
        %v4462 = vsub.s32 %v4459, %v4461
        %v4463 = vrot.slane %v4441, %v4462
        %v4465 = vunpack.c.l.s4 1966171168
        %v4466 = vunpack.c.0.s8 %v4465
        %v4467 = vlaneseq
        %v4468 = vshrl.u32 %v4467, 7
        %v4469 = vsub.s32 %v4466, %v4468
        %v4470 = vrot.slane %v4442, %v4469
        %v4471 = vcombine.high %v4449, %v4449
        %v4472 = vcombine.high %v4456, %v4456
        %v4473 = vcombine.high %v4463, %v4463
        %v4474 = vcombine.high %v4470, %v4470
        %v4475 = vlaneseq
        %v4476 = vshrl.u32 %v4475, 7
        %v4477 = vsub.s32 0, %v4476
        %v4478 = vrot.slane %v4449, %v4477
        %v4479 = vlaneseq
        %v4480 = vshrl.u32 %v4479, 7
        %v4481 = vsub.s32 0, %v4480
        %v4482 = vrot.slane %v4463, %v4481
        %v4483 = vlaneseq
        %v4484 = vshrl.u32 %v4483, 7
        %v4485 = vsub.s32 0, %v4484
        %v4486 = vrot.slane %v4471, %v4485
        %v4487 = vlaneseq
        %v4488 = vshrl.u32 %v4487, 7
        %v4489 = vsub.s32 0, %v4488
        %v4490 = vrot.slane %v4473, %v4489
        %v4491 = vlaneseq
        %v4492 = vshrl.u32 %v4491, 7
        %v4493 = vsub.s32 0, %v4492
        %v4494 = vrot.slane %v4456, %v4493
        %v4495 = vlaneseq
        %v4496 = vshrl.u32 %v4495, 7
        %v4497 = vsub.s32 0, %v4496
        %v4498 = vrot.slane %v4470, %v4497
        %v4499 = vlaneseq
        %v4500 = vshrl.u32 %v4499, 7
        %v4501 = vsub.s32 0, %v4500
        %v4502 = vrot.slane %v4472, %v4501
        %v4503 = vlaneseq
        %v4504 = vshrl.u32 %v4503, 7
        %v4505 = vsub.s32 0, %v4504
        %v4506 = vrot.slane %v4474, %v4505
        %v4515 = vadd.f32 %v514, %v4478
        %v4516 = vadd.f32 %v519, %v4482
        %v4517 = vadd.f32 %v524, %v4486
        %v4518 = vadd.f32 %v529, %v4490
        %v4519 = vadd.f32 %v534, %v4494
        %v4520 = vadd.f32 %v539, %v4498
        %v4521 = vadd.f32 %v544, %v4502
        %v4522 = vadd.f32 %v549, %v4506
        %v4523 = vtanh.pop %v4515
        %v4524 = vtanh.pop %v4516
        %v4525 = vtanh.pop %v4517
        %v4526 = vtanh.pop %v4518
        %v4527 = vtanh.pop %v4519
        %v4528 = vtanh.pop %v4520
        %v4529 = vtanh.pop %v4521
        %v4530 = vtanh.pop %v4522
        %v4531 = vmul.f32 %v4523, %v573
        %v4532 = vmul.f32 %v4524, %v573
        %v4533 = vmul.f32 %v4525, %v573
        %v4534 = vmul.f32 %v4526, %v573
        %v4535 = vmul.f32 %v4527, %v573
        %v4536 = vmul.f32 %v4528, %v573
        %v4537 = vmul.f32 %v4529, %v573
        %v4538 = vmul.f32 %v4530, %v573
        %v4539 = vsel %vm422, %v4531, 0.0
        %4540 = vadd.xlane.f32.xlu0 %v4539
        %v4541 = vpop.xlane.xlu0 %4540
        %v4542 = vsel %vm422, %v4532, 0.0
        %4543 = vadd.xlane.f32.xlu0 %v4542
        %v4544 = vpop.xlane.xlu0 %4543
        %v4545 = vsel %vm422, %v4533, 0.0
        %4546 = vadd.xlane.f32.xlu0 %v4545
        %v4547 = vpop.xlane.xlu0 %4546
        %v4548 = vsel %vm422, %v4534, 0.0
        %4549 = vadd.xlane.f32.xlu0 %v4548
        %v4550 = vpop.xlane.xlu0 %4549
        %v4551 = vsel %vm422, %v4535, 0.0
        %4552 = vadd.xlane.f32.xlu0 %v4551
        %v4553 = vpop.xlane.xlu0 %4552
        %v4554 = vsel %vm422, %v4536, 0.0
        %4555 = vadd.xlane.f32.xlu0 %v4554
        %v4556 = vpop.xlane.xlu0 %4555
        %v4557 = vsel %vm422, %v4537, 0.0
        %4558 = vadd.xlane.f32.xlu0 %v4557
        %v4559 = vpop.xlane.xlu0 %4558
        %v4560 = vsel %vm422, %v4538, 0.0
        %4561 = vadd.xlane.f32.xlu0 %v4560
        %v4562 = vpop.xlane.xlu0 %4561
        %v4571 = vlaneseq
        %v4572 = vshrl.u32 %v4571, 7
        %v4573 = vsub.s32 %v803, %v4572
        %v4574 = vrot.slane %v4541, %v4573
        %v4575 = vlaneseq
        %v4576 = vshrl.u32 %v4575, 7
        %v4577 = vsub.s32 %v803, %v4576
        %v4578 = vrot.slane %v4544, %v4577
        %v4579 = vlaneseq
        %v4580 = vshrl.u32 %v4579, 7
        %v4581 = vsub.s32 %v803, %v4580
        %v4582 = vrot.slane %v4547, %v4581
        %v4583 = vlaneseq
        %v4584 = vshrl.u32 %v4583, 7
        %v4585 = vsub.s32 %v803, %v4584
        %v4586 = vrot.slane %v4550, %v4585
        %v4587 = vlaneseq
        %v4588 = vshrl.u32 %v4587, 7
        %v4589 = vsub.s32 %v803, %v4588
        %v4590 = vrot.slane %v4553, %v4589
        %v4591 = vlaneseq
        %v4592 = vshrl.u32 %v4591, 7
        %v4593 = vsub.s32 %v803, %v4592
        %v4594 = vrot.slane %v4556, %v4593
        %v4595 = vlaneseq
        %v4596 = vshrl.u32 %v4595, 7
        %v4597 = vsub.s32 %v803, %v4596
        %v4598 = vrot.slane %v4559, %v4597
        %v4599 = vlaneseq
        %v4600 = vshrl.u32 %v4599, 7
        %v4601 = vsub.s32 %v803, %v4600
        %v4602 = vrot.slane %v4562, %v4601
        %v4603 = vsel %vm836, %v4578, %v4574
        %v4604 = vsel %vm838, %v4582, %v4603
        %v4605 = vsel %vm840, %v4586, %v4604
        %v4606 = vsel %vm842, %v4590, %v4605
        %v4607 = vsel %vm844, %v4594, %v4606
        %v4608 = vsel %vm846, %v4598, %v4607
        %v4609 = vsel %vm848, %v4602, %v4608
        %v4611 = vsel %vm851, %v4609, -inf
        %4612 = vmax.xlane.f32.xlu0 %v4611
        %v4613 = vpop.xlane.xlu0 %4612
        %v4615 = vlaneseq
        %v4616 = vshrl.u32 %v4615, 7
        %v4617 = vsub.s32 0, %v4616
        %v4618 = vrot.slane %v4613, %v4617
        %v4619 = vlaneseq
        %v4620 = vshrl.u32 %v4619, 7
        %v4621 = vsub.s32 1, %v4620
        %v4622 = vrot.slane %v4613, %v4621
        %v4623 = vlaneseq
        %v4624 = vshrl.u32 %v4623, 7
        %v4625 = vsub.s32 2, %v4624
        %v4626 = vrot.slane %v4613, %v4625
        %v4627 = vlaneseq
        %v4628 = vshrl.u32 %v4627, 7
        %v4629 = vsub.s32 3, %v4628
        %v4630 = vrot.slane %v4613, %v4629
        %v4631 = vlaneseq
        %v4632 = vshrl.u32 %v4631, 7
        %v4633 = vsub.s32 4, %v4632
        %v4634 = vrot.slane %v4613, %v4633
        %v4635 = vlaneseq
        %v4636 = vshrl.u32 %v4635, 7
        %v4637 = vsub.s32 5, %v4636
        %v4638 = vrot.slane %v4613, %v4637
        %v4639 = vlaneseq
        %v4640 = vshrl.u32 %v4639, 7
        %v4641 = vsub.s32 6, %v4640
        %v4642 = vrot.slane %v4613, %v4641
        %v4643 = vlaneseq
        %v4644 = vshrl.u32 %v4643, 7
        %v4645 = vsub.s32 7, %v4644
        %v4646 = vrot.slane %v4613, %v4645
        %v4655 = vsub.f32 %v4541, %v4618
        %v4656 = vsub.f32 %v4544, %v4622
        %v4657 = vsub.f32 %v4547, %v4626
        %v4658 = vsub.f32 %v4550, %v4630
        %v4659 = vsub.f32 %v4553, %v4634
        %v4660 = vsub.f32 %v4556, %v4638
        %v4661 = vsub.f32 %v4559, %v4642
        %v4662 = vsub.f32 %v4562, %v4646
        %v4663 = vmul.f32 %v4655, 1.442695
        %v4664 = vpow.pop %v4663
        %v4665 = vmul.f32 %v4656, 1.442695
        %v4666 = vpow.pop %v4665
        %v4667 = vmul.f32 %v4657, 1.442695
        %v4668 = vpow.pop %v4667
        %v4669 = vmul.f32 %v4658, 1.442695
        %v4670 = vpow.pop %v4669
        %v4671 = vmul.f32 %v4659, 1.442695
        %v4672 = vpow.pop %v4671
        %v4673 = vmul.f32 %v4660, 1.442695
        %v4674 = vpow.pop %v4673
        %v4675 = vmul.f32 %v4661, 1.442695
        %v4676 = vpow.pop %v4675
        %v4677 = vmul.f32 %v4662, 1.442695
        %v4678 = vpow.pop %v4677
        %4687 = vset.pattern.permute.xlu0 0
        %4688 = vperm.xlu0 %4687, %v4664
        %v4689 = vpop.permute.xlu0 %4688
        %4690 = vset.pattern.permute.xlu0 0
        %4691 = vperm.xlu0 %4690, %v4666
        %v4692 = vpop.permute.xlu0 %4691
        %4693 = vset.pattern.permute.xlu0 0
        %4694 = vperm.xlu0 %4693, %v4668
        %v4695 = vpop.permute.xlu0 %4694
        %4696 = vset.pattern.permute.xlu0 0
        %4697 = vperm.xlu0 %4696, %v4670
        %v4698 = vpop.permute.xlu0 %4697
        %4699 = vset.pattern.permute.xlu0 0
        %4700 = vperm.xlu0 %4699, %v4672
        %v4701 = vpop.permute.xlu0 %4700
        %4702 = vset.pattern.permute.xlu0 0
        %4703 = vperm.xlu0 %4702, %v4674
        %v4704 = vpop.permute.xlu0 %4703
        %4705 = vset.pattern.permute.xlu0 0
        %4706 = vperm.xlu0 %4705, %v4676
        %v4707 = vpop.permute.xlu0 %4706
        %4708 = vset.pattern.permute.xlu0 0
        %4709 = vperm.xlu0 %4708, %v4678
        %v4710 = vpop.permute.xlu0 %4709
        %v4711 = vlaneseq
        %v4712 = vshrl.u32 %v4711, 7
        %v4713 = vsub.s32 %v803, %v4712
        %v4714 = vrot.slane %v4689, %v4713
        %v4715 = vlaneseq
        %v4716 = vshrl.u32 %v4715, 7
        %v4717 = vsub.s32 %v803, %v4716
        %v4718 = vrot.slane %v4692, %v4717
        %v4719 = vlaneseq
        %v4720 = vshrl.u32 %v4719, 7
        %v4721 = vsub.s32 %v803, %v4720
        %v4722 = vrot.slane %v4695, %v4721
        %v4723 = vlaneseq
        %v4724 = vshrl.u32 %v4723, 7
        %v4725 = vsub.s32 %v803, %v4724
        %v4726 = vrot.slane %v4698, %v4725
        %v4727 = vlaneseq
        %v4728 = vshrl.u32 %v4727, 7
        %v4729 = vsub.s32 %v803, %v4728
        %v4730 = vrot.slane %v4701, %v4729
        %v4731 = vlaneseq
        %v4732 = vshrl.u32 %v4731, 7
        %v4733 = vsub.s32 %v803, %v4732
        %v4734 = vrot.slane %v4704, %v4733
        %v4735 = vlaneseq
        %v4736 = vshrl.u32 %v4735, 7
        %v4737 = vsub.s32 %v803, %v4736
        %v4738 = vrot.slane %v4707, %v4737
        %v4739 = vlaneseq
        %v4740 = vshrl.u32 %v4739, 7
        %v4741 = vsub.s32 %v803, %v4740
        %v4742 = vrot.slane %v4710, %v4741
        %v4743 = vsel %vm836, %v4718, %v4714
        %v4744 = vsel %vm838, %v4722, %v4743
        %v4745 = vsel %vm840, %v4726, %v4744
        %v4746 = vsel %vm842, %v4730, %v4745
        %v4747 = vsel %vm844, %v4734, %v4746
        %v4748 = vsel %vm846, %v4738, %v4747
        %v4749 = vsel %vm848, %v4742, %v4748
        %v4751 = vsel %vm851, %v4749, 0.0
        %4752 = vadd.xlane.f32.xlu0 %v4751
        %v4753 = vpop.xlane.xlu0 %4752
        %v4754 = vrcp.pop %v4753
        %v4756 = vlaneseq
        %v4757 = vshrl.u32 %v4756, 7
        %v4758 = vsub.s32 0, %v4757
        %v4759 = vrot.slane %v4754, %v4758
        %v4760 = vlaneseq
        %v4761 = vshrl.u32 %v4760, 7
        %v4762 = vsub.s32 1, %v4761
        %v4763 = vrot.slane %v4754, %v4762
        %v4764 = vlaneseq
        %v4765 = vshrl.u32 %v4764, 7
        %v4766 = vsub.s32 2, %v4765
        %v4767 = vrot.slane %v4754, %v4766
        %v4768 = vlaneseq
        %v4769 = vshrl.u32 %v4768, 7
        %v4770 = vsub.s32 3, %v4769
        %v4771 = vrot.slane %v4754, %v4770
        %v4772 = vlaneseq
        %v4773 = vshrl.u32 %v4772, 7
        %v4774 = vsub.s32 4, %v4773
        %v4775 = vrot.slane %v4754, %v4774
        %v4776 = vlaneseq
        %v4777 = vshrl.u32 %v4776, 7
        %v4778 = vsub.s32 5, %v4777
        %v4779 = vrot.slane %v4754, %v4778
        %v4780 = vlaneseq
        %v4781 = vshrl.u32 %v4780, 7
        %v4782 = vsub.s32 6, %v4781
        %v4783 = vrot.slane %v4754, %v4782
        %v4784 = vlaneseq
        %v4785 = vshrl.u32 %v4784, 7
        %v4786 = vsub.s32 7, %v4785
        %v4787 = vrot.slane %v4754, %v4786
        %v4796 = vmul.f32 %v4664, %v4759
        %v4797 = vmul.f32 %v4666, %v4763
        %v4798 = vmul.f32 %v4668, %v4767
        %v4799 = vmul.f32 %v4670, %v4771
        %v4800 = vmul.f32 %v4672, %v4775
        %v4801 = vmul.f32 %v4674, %v4779
        %v4802 = vmul.f32 %v4676, %v4783
        %v4803 = vmul.f32 %v4678, %v4787
        %4805 = vset.pattern.permute.xlu0 0
        %4806 = vperm.xlu0 %4805, %v4796
        %v4807 = vpop.permute.xlu0 %4806
        %4810 = vset.pattern.permute.xlu0 0
        %4811 = vperm.xlu0 %4810, %v4797
        %v4812 = vpop.permute.xlu0 %4811
        %4815 = vset.pattern.permute.xlu0 0
        %4816 = vperm.xlu0 %4815, %v4798
        %v4817 = vpop.permute.xlu0 %4816
        %4820 = vset.pattern.permute.xlu0 0
        %4821 = vperm.xlu0 %4820, %v4799
        %v4822 = vpop.permute.xlu0 %4821
        %4825 = vset.pattern.permute.xlu0 0
        %4826 = vperm.xlu0 %4825, %v4800
        %v4827 = vpop.permute.xlu0 %4826
        %4830 = vset.pattern.permute.xlu0 0
        %4831 = vperm.xlu0 %4830, %v4801
        %v4832 = vpop.permute.xlu0 %4831
        %4835 = vset.pattern.permute.xlu0 0
        %4836 = vperm.xlu0 %4835, %v4802
        %v4837 = vpop.permute.xlu0 %4836
        %4840 = vset.pattern.permute.xlu0 0
        %4841 = vperm.xlu0 %4840, %v4803
        %v4842 = vpop.permute.xlu0 %4841
        %v4844 = vmul.f32 %v4807, %v403
        %v4845 = vmul.f32 %v4812, %v404
        %v4846 = vmul.f32 %v4817, %v405
        %v4847 = vmul.f32 %v4822, %v406
        %v4848 = vmul.f32 %v4827, %v407
        %v4849 = vmul.f32 %v4832, %v408
        %v4850 = vmul.f32 %v4837, %v409
        %v4851 = vmul.f32 %v4842, %v410
        %v4852 = vsel %vm422, %v4844, 0.0
        %v4853 = vrot.slane %v4852, 4
        %v4854 = vadd.f32 %v4852, %v4853
        %v4855 = vrot.slane %v4854, 2
        %v4856 = vadd.f32 %v4854, %v4855
        %v4857 = vrot.slane %v4856, 1
        %v4858 = vadd.f32 %v4856, %v4857
        %v4859 = vsel %vm422, %v4845, 0.0
        %v4860 = vrot.slane %v4859, 4
        %v4861 = vadd.f32 %v4859, %v4860
        %v4862 = vrot.slane %v4861, 2
        %v4863 = vadd.f32 %v4861, %v4862
        %v4864 = vrot.slane %v4863, 1
        %v4865 = vadd.f32 %v4863, %v4864
        %v4866 = vsel %vm422, %v4846, 0.0
        %v4867 = vrot.slane %v4866, 4
        %v4868 = vadd.f32 %v4866, %v4867
        %v4869 = vrot.slane %v4868, 2
        %v4870 = vadd.f32 %v4868, %v4869
        %v4871 = vrot.slane %v4870, 1
        %v4872 = vadd.f32 %v4870, %v4871
        %v4873 = vsel %vm422, %v4847, 0.0
        %v4874 = vrot.slane %v4873, 4
        %v4875 = vadd.f32 %v4873, %v4874
        %v4876 = vrot.slane %v4875, 2
        %v4877 = vadd.f32 %v4875, %v4876
        %v4878 = vrot.slane %v4877, 1
        %v4879 = vadd.f32 %v4877, %v4878
        %v4880 = vsel %vm422, %v4848, 0.0
        %v4881 = vrot.slane %v4880, 4
        %v4882 = vadd.f32 %v4880, %v4881
        %v4883 = vrot.slane %v4882, 2
        %v4884 = vadd.f32 %v4882, %v4883
        %v4885 = vrot.slane %v4884, 1
        %v4886 = vadd.f32 %v4884, %v4885
        %v4887 = vsel %vm422, %v4849, 0.0
        %v4888 = vrot.slane %v4887, 4
        %v4889 = vadd.f32 %v4887, %v4888
        %v4890 = vrot.slane %v4889, 2
        %v4891 = vadd.f32 %v4889, %v4890
        %v4892 = vrot.slane %v4891, 1
        %v4893 = vadd.f32 %v4891, %v4892
        %v4894 = vsel %vm422, %v4850, 0.0
        %v4895 = vrot.slane %v4894, 4
        %v4896 = vadd.f32 %v4894, %v4895
        %v4897 = vrot.slane %v4896, 2
        %v4898 = vadd.f32 %v4896, %v4897
        %v4899 = vrot.slane %v4898, 1
        %v4900 = vadd.f32 %v4898, %v4899
        %v4901 = vsel %vm422, %v4851, 0.0
        %v4902 = vrot.slane %v4901, 4
        %v4903 = vadd.f32 %v4901, %v4902
        %v4904 = vrot.slane %v4903, 2
        %v4905 = vadd.f32 %v4903, %v4904
        %v4906 = vrot.slane %v4905, 1
        %v4907 = vadd.f32 %v4905, %v4906
        %v4916 = vsel %vm836, %v4865, %v4858
        %v4917 = vsel %vm838, %v4872, %v4916
        %v4918 = vsel %vm840, %v4879, %v4917
        %v4919 = vsel %vm842, %v4886, %v4918
        %v4920 = vsel %vm844, %v4893, %v4919
        %v4921 = vsel %vm846, %v4900, %v4920
        %v4922 = vsel %vm848, %v4907, %v4921
        %4924 = vrot.lane.b32.xlu0 %v4421, 96
        %v4925 = vpop.permute.xlu0 %4924
        %4926 = vrot.lane.b32.xlu0 %v4423, 96
        %v4927 = vpop.permute.xlu0 %4926
        %v4928 = vsel %vm1169, %v4925, %v4927
        %v4930 = vsel %vm422, %v4922, 0
        %4932 = vmatprep.subr.mxu0 0.0
        %4933 = vmatpush1.msra.mxu0 %v560
        %4934 = vmatprep.subr.mxu0 0.0
        %4935 = vmatpush1.msra.mxu0 %v561
        %4936 = vmatprep.subr.mxu0 0.0
        %4937 = vmatpush1.msra.mxu0 %v562
        %4938 = vmatprep.subr.mxu0 0.0
        %4939 = vmatpush1.msra.mxu0 %v563
        %4940 = vmatprep.subr.mxu0 0.0
        %4941 = vmatpush1.msra.mxu0 0.0
        %4942 = vmatprep.subr.mxu0 0.0
        %4943 = vmatpush1.msra.mxu0 0.0
        %4944 = vmatprep.subr.mxu0 0.0
        %4945 = vmatpush1.msra.mxu0 0.0
        %4946 = vmatprep.subr.mxu0 0.0
        %4947 = vmatpush1.msra.mxu0 0.0
        %4948 = vmatprep.subr.mxu0 0.0
        %4949 = vmatpush1.msra.mxu0 0.0
        %4950 = vmatprep.subr.mxu0 0.0
        %4951 = vmatpush1.msra.mxu0 0.0
        %4952 = vmatprep.subr.mxu0 0.0
        %4953 = vmatpush1.msra.mxu0 0.0
        %4954 = vmatprep.subr.mxu0 0.0
        %4955 = vmatpush1.msra.mxu0 0.0
        %4956 = vmatprep.subr.mxu0 0.0
        %4957 = vmatpush1.msra.mxu0 0.0
        %4958 = vmatprep.subr.mxu0 0.0
        %4959 = vmatpush1.msra.mxu0 0.0
        %4960 = vmatprep.subr.mxu0 0.0
        %4961 = vmatpush1.msra.mxu0 0.0
        %4962 = vmatprep.subr.mxu0 0.0
        %4963 = vmatpush1.msra.mxu0 0.0
        %4964 = vmatprep.subr.mxu0 0.0
        %4965 = vmatpush1.msra.mxu0 0.0
        %4966 = vmatprep.subr.mxu0 0.0
        %4967 = vmatpush1.msra.mxu0 0.0
        %4968 = vmatprep.subr.mxu0 0.0
        %4969 = vmatpush1.msra.mxu0 0.0
        %4970 = vmatprep.subr.mxu0 0.0
        %4971 = vmatpush1.msra.mxu0 0.0
        %4972 = vmatprep.subr.mxu0 0.0
        %4973 = vmatpush1.msra.mxu0 0.0
        %4974 = vmatprep.subr.mxu0 0.0
        %4975 = vmatpush1.msra.mxu0 0.0
        %4976 = vmatprep.subr.mxu0 0.0
        %4977 = vmatpush1.msra.mxu0 0.0
        %4978 = vmatprep.subr.mxu0 0.0
        %4979 = vmatpush1.msra.mxu0 0.0
        %4980 = vmatprep.subr.mxu0 0.0
        %4981 = vmatpush1.msra.mxu0 0.0
        %4982 = vmatprep.subr.mxu0 0.0
        %4983 = vmatpush1.msra.mxu0 0.0
        %4984 = vmatprep.subr.mxu0 0.0
        %4985 = vmatpush1.msra.mxu0 0.0
        %4986 = vmatprep.subr.mxu0 0.0
        %4987 = vmatpush1.msra.mxu0 0.0
        %4988 = vmatprep.subr.mxu0 0.0
        %4989 = vmatpush1.msra.mxu0 0.0
        %4990 = vmatprep.subr.mxu0 0.0
        %4991 = vmatpush1.msra.mxu0 0.0
        %4992 = vmatprep.subr.mxu0 0.0
        %4993 = vmatpush1.msra.mxu0 0.0
        %4994 = vmatprep.subr.mxu0 0.0
        %4995 = vmatpush1.msra.mxu0 0.0
        %4996 = vmatprep.mubr.f32.mxu0 0.0
        %4997 = vmatmul.mubr.f32.gmra.mrb[0].mxu0 %v4930
        %v4998 = vpop.f32.mrb[0].mxu0
        %v4999 = vadd.f32 %v4928, %v4998
        %v5000 = vpop.f32.mrb[0].mxu0
        %5001 = vdwg.mxu0
        %s5002 = scalar_lea.vmem %s360, 40 [#allocation2]
        %v5003 = vld [vmem:[%s5002] sm:$0xff]
        %v5004 = vadd.f32 %v4999, %v5003
        %v5005 = vxor.u32 %v5004, 2147483648
        %v5006 = vmul.f32 %v5005, 1.442695
        %v5007 = vpow.pop %v5006
        %v5008 = vadd.f32 %v5007, 1.0
        %v5009 = vrcp.pop %v5008
        %v5010 = vmul.f32 1.0, %v5009
        %v5011 = vtanh.pop %v5004
        %v5012 = vmul.f32 %v5010, %v4270
        %5014 = vrot.lane.b32.xlu0 %v5011, 64
        %v5015 = vpop.permute.xlu0 %5014
        %v5017 = vmul.f32 %v5010, %v5015
        %5019 = vrot.lane.b32.xlu0 %v5017, 32
        %v5020 = vpop.permute.xlu0 %5019
        %v5022 = vadd.f32 %v5012, %v5020
        %v5023 = vtanh.pop %v5022
        %5025 = vrot.lane.b32.xlu0 %v5023, 64
        %v5026 = vpop.permute.xlu0 %5025
        %v5028 = vmul.f32 %v5010, %v5026
        %5030 = vrot.lane.b32.xlu0 %v5028, 32
        %v5031 = vpop.permute.xlu0 %5030
        %v5032 = vsel %vm422, %v5031, 0
        %5034 = vmatprep.subr.mxu0 0.0
        %5035 = vmatpush1.msra.mxu0 %v564
        %5036 = vmatprep.subr.mxu0 0.0
        %5037 = vmatpush1.msra.mxu0 %v565
        %5038 = vmatprep.subr.mxu0 0.0
        %5039 = vmatpush1.msra.mxu0 %v566
        %5040 = vmatprep.subr.mxu0 0.0
        %5041 = vmatpush1.msra.mxu0 %v567
        %5042 = vmatprep.subr.mxu0 0.0
        %5043 = vmatpush1.msra.mxu0 0.0
        %5044 = vmatprep.subr.mxu0 0.0
        %5045 = vmatpush1.msra.mxu0 0.0
        %5046 = vmatprep.subr.mxu0 0.0
        %5047 = vmatpush1.msra.mxu0 0.0
        %5048 = vmatprep.subr.mxu0 0.0
        %5049 = vmatpush1.msra.mxu0 0.0
        %5050 = vmatprep.subr.mxu0 0.0
        %5051 = vmatpush1.msra.mxu0 0.0
        %5052 = vmatprep.subr.mxu0 0.0
        %5053 = vmatpush1.msra.mxu0 0.0
        %5054 = vmatprep.subr.mxu0 0.0
        %5055 = vmatpush1.msra.mxu0 0.0
        %5056 = vmatprep.subr.mxu0 0.0
        %5057 = vmatpush1.msra.mxu0 0.0
        %5058 = vmatprep.subr.mxu0 0.0
        %5059 = vmatpush1.msra.mxu0 0.0
        %5060 = vmatprep.subr.mxu0 0.0
        %5061 = vmatpush1.msra.mxu0 0.0
        %5062 = vmatprep.subr.mxu0 0.0
        %5063 = vmatpush1.msra.mxu0 0.0
        %5064 = vmatprep.subr.mxu0 0.0
        %5065 = vmatpush1.msra.mxu0 0.0
        %5066 = vmatprep.subr.mxu0 0.0
        %5067 = vmatpush1.msra.mxu0 0.0
        %5068 = vmatprep.subr.mxu0 0.0
        %5069 = vmatpush1.msra.mxu0 0.0
        %5070 = vmatprep.subr.mxu0 0.0
        %5071 = vmatpush1.msra.mxu0 0.0
        %5072 = vmatprep.subr.mxu0 0.0
        %5073 = vmatpush1.msra.mxu0 0.0
        %5074 = vmatprep.subr.mxu0 0.0
        %5075 = vmatpush1.msra.mxu0 0.0
        %5076 = vmatprep.subr.mxu0 0.0
        %5077 = vmatpush1.msra.mxu0 0.0
        %5078 = vmatprep.subr.mxu0 0.0
        %5079 = vmatpush1.msra.mxu0 0.0
        %5080 = vmatprep.subr.mxu0 0.0
        %5081 = vmatpush1.msra.mxu0 0.0
        %5082 = vmatprep.subr.mxu0 0.0
        %5083 = vmatpush1.msra.mxu0 0.0
        %5084 = vmatprep.subr.mxu0 0.0
        %5085 = vmatpush1.msra.mxu0 0.0
        %5086 = vmatprep.subr.mxu0 0.0
        %5087 = vmatpush1.msra.mxu0 0.0
        %5088 = vmatprep.subr.mxu0 0.0
        %5089 = vmatpush1.msra.mxu0 0.0
        %5090 = vmatprep.subr.mxu0 0.0
        %5091 = vmatpush1.msra.mxu0 0.0
        %5092 = vmatprep.subr.mxu0 0.0
        %5093 = vmatpush1.msra.mxu0 0.0
        %5094 = vmatprep.subr.mxu0 0.0
        %5095 = vmatpush1.msra.mxu0 0.0
        %5096 = vmatprep.subr.mxu0 0.0
        %5097 = vmatpush1.msra.mxu0 0.0
        %5098 = vmatprep.mubr.f32.mxu0 0.0
        %5099 = vmatmul.mubr.f32.gmra.mrb[0].mxu0 %v5032
        %v5100 = vpop.f32.mrb[0].mxu0
        %v5101 = vadd.f32 %v580, %v5100
        %v5102 = vpop.f32.mrb[0].mxu0
        %5103 = vdwg.mxu0
        %s5104 = scalar_lea.vmem %s396, 40 [#allocation3]
        %5105 = vst [vmem:[%s5104] sm:$0xff] %v5101
        %s5106 = sand.u32 %s227, 1
        %s5107 = sand.u32 %s227, 1
        %s5108 = smul.addr %s5107, 48
        %s5109 = scalar_lea.vmem [#allocation3], %s5108
        // Predicated region
        $region95: #{attention_forward.1} parent=89 // pred_check
          %p5110 = pneg %p237
        $region96: #{attention_forward.1} parent=89 // pred_check_branch
          %5112 = sbr.rel (%p5110) target = $region98
        $region97: #{attention_forward.1} parent=89 // pred_region
          %s5113 = smul.addr %s20, 8
          %s5114 = scalar_lea.vmem %s9, %s5113
          // Predicated region
          $region99: #{attention_forward.1} parent=97 // pred_check
            _
          $region100: #{attention_forward.1} parent=97 // pred_check_branch
            %5116 = sbr.rel (0) target = $region102
          $region101: #{attention_forward.1} parent=97 // pred_region
            // Predicated region
            $region103: #{attention_forward.1} parent=101 // pred_check
              _
            $region104: #{attention_forward.1} parent=101 // pred_check_branch
              %5118 = sbr.rel (0) target = $region106
            $region105: #{attention_forward.1} parent=101 // pred_region
              // Predicated region
              $region118: #{attention_forward.1} parent=105 // pred_check
                _
              $region119: #{attention_forward.1} parent=105 // pred_check_branch
                %5143 = sbr.rel (0) target = $region121
              $region120: #{attention_forward.1} parent=105 // pred_region
                loop: start=0, step=1, limit=1
                $region122: #{attention_forward.1} parent=120 // loop_pre_header
                  _
                $region123: #{attention_forward.1} parent=120 // loop_header
                  %s5145 = sphi 0, %s5149
                  %p5146 = scmp.ge.s32.totalorder %s5145, 1
                  %s5150 = sphi %s5109, %s5109
                  %s5151 = sphi %s5114, %s5114
                $region124: #{attention_forward.1} parent=120 // loop_header_branch
                  %5148 = sbr.rel (%p5146) target = $region128
                $region125: #{attention_forward.1} parent=120 // loop_body
                  %v5152 = vld [vmem:[%s5150] sm:$0xff]
                  %5153 = vst [vmem:[%s5151] sm:$0xff] %v5152
                  %v5154 = vld [vmem:[%s5150 + $0x8] sm:$0xff]
                  %5155 = vst [vmem:[%s5151 + $0x10] sm:$0xff] %v5154
                  %v5156 = vld [vmem:[%s5150 + $0x10] sm:$0xff]
                  %5157 = vst [vmem:[%s5151 + $0x20] sm:$0xff] %v5156
                  %v5158 = vld [vmem:[%s5150 + $0x18] sm:$0xff]
                  %5159 = vst [vmem:[%s5151 + $0x30] sm:$0xff] %v5158
                  %v5160 = vld [vmem:[%s5150 + $0x20] sm:$0xff]
                  %5161 = vst [vmem:[%s5151 + $0x40] sm:$0xff] %v5160
                  %v5162 = vld [vmem:[%s5150 + $0x28] sm:$0xff]
                  %5163 = vst [vmem:[%s5151 + $0x50] sm:$0xff] %v5162
                $region126: #{attention_forward.1} parent=120 // loop_footer
                  %s5149 = sadd.s32 1, %s5145
                $region127: #{attention_forward.1} parent=120 // loop_footer_branch
                  %5144 = sbr.rel target = $region123
                $region128: #{attention_forward.1} parent=120 // loop_exit
                  _
              $region121: #{attention_forward.1} parent=105 // pred_fallthru
                _
              // Predicated region
              $region129: #{attention_forward.1} parent=105 // pred_check
                _
              $region130: #{attention_forward.1} parent=105 // pred_check_branch
                %5165 = sbr.rel target = $region132
              $region131: #{attention_forward.1} parent=105 // pred_region
                _
              $region132: #{attention_forward.1} parent=105 // pred_fallthru
                _
            $region106: #{attention_forward.1} parent=101 // pred_fallthru
              _
            // Predicated region
            $region107: #{attention_forward.1} parent=101 // pred_check
              _
            $region108: #{attention_forward.1} parent=101 // pred_check_branch
              %5120 = sbr.rel target = $region110
            $region109: #{attention_forward.1} parent=101 // pred_region
              loop: start=0, step=1, limit=1
              $region111: #{attention_forward.1} parent=109 // loop_pre_header
                _
              $region112: #{attention_forward.1} parent=109 // loop_header
                %s5123 = sphi 0, %s5127
                %p5124 = scmp.ge.s32.totalorder %s5123, 1
                %s5128 = sphi %s5109, %s5109
                %s5129 = sphi %s5114, %s5114
              $region113: #{attention_forward.1} parent=109 // loop_header_branch
                %5126 = sbr.rel (%p5124) target = $region117
              $region114: #{attention_forward.1} parent=109 // loop_body
                %v5130 = vld [vmem:[%s5128] sm:$0xff]
                %5131 = vst [vmem:[%s5129] sm:$0xff] %v5130
                %v5132 = vld [vmem:[%s5128 + $0x8] sm:$0xff]
                %5133 = vst [vmem:[%s5129 + $0x10] sm:$0xff] %v5132
                %v5134 = vld [vmem:[%s5128 + $0x10] sm:$0xff]
                %5135 = vst [vmem:[%s5129 + $0x20] sm:$0xff] %v5134
                %v5136 = vld [vmem:[%s5128 + $0x18] sm:$0xff]
                %5137 = vst [vmem:[%s5129 + $0x30] sm:$0xff] %v5136
                %v5138 = vld [vmem:[%s5128 + $0x20] sm:$0xff]
                %5139 = vst [vmem:[%s5129 + $0x40] sm:$0xff] %v5138
                %v5140 = vld [vmem:[%s5128 + $0x28] sm:$0xff]
                %5141 = vst [vmem:[%s5129 + $0x50] sm:$0xff] %v5140
              $region115: #{attention_forward.1} parent=109 // loop_footer
                %s5127 = sadd.s32 1, %s5123
              $region116: #{attention_forward.1} parent=109 // loop_footer_branch
                %5122 = sbr.rel target = $region112
              $region117: #{attention_forward.1} parent=109 // loop_exit
                _
            $region110: #{attention_forward.1} parent=101 // pred_fallthru
              _
          $region102: #{attention_forward.1} parent=97 // pred_fallthru
            _
          %5166 = vnop
        $region98: #{attention_forward.1} parent=89 // pred_fallthru
          _
      $region90: #{attention_forward.1} parent=5 // pred_fallthru
        _
      %p5167 = scmp.le.s32.totalorder 2, %s15
      // Predicated region
      $region133: #{attention_forward.1} parent=5 // pred_check
        %p5168 = pneg %p5167
      $region134: #{attention_forward.1} parent=5 // pred_check_branch
        %5170 = sbr.rel (%p5168) target = $region136
      $region135: #{attention_forward.1} parent=5 // pred_region
        %s5171 = ssub.s32 %s15, 2
        // Predicated region
        $region137: #{attention_forward.1} parent=135 // pred_check
          %p5172 = pneg %p243
        $region138: #{attention_forward.1} parent=135 // pred_check_branch
          %5174 = sbr.rel (%p5172) target = $region140
        $region139: #{attention_forward.1} parent=135 // pred_region
          %s5175 = sand.u32 %s228, 1
          %s5176 = sand.u32 %s228, 1
          %s5177 = smul.addr %s5176, 48
          %s5178 = scalar_lea.vmem [#allocation3], %s5177
        $region140: #{attention_forward.1} parent=135 // pred_fallthru
          _
      $region136: #{attention_forward.1} parent=5 // pred_fallthru
        _
    $region6: #{attention_forward.1} parent=1 // loop_footer
      %s19 = sadd.s32 1, %s15
    $region7: #{attention_forward.1} parent=1 // loop_footer_branch
      %14 = sbr.rel target = $region3
    $region8: #{attention_forward.1} parent=1 // loop_exit
      _

</llo_original>
